<compile_context>
chip_gen: v6e
topology: v6e:2x2x1
jax: 0.10.0
libtpu: 0.0.40
codegen_flags: <defaults>
</compile_context>

<pallas_src>
import functools

import jax
import jax.numpy as jnp
from jax.experimental import pallas as pl
from jax.experimental.pallas import tpu as pltpu

LANE = 128     # lane-dense width for all channel / feature / class dims
K1_PAD = 128   # layer1 im2col features: 1*5*5 = 25  -> 128
K2_PAD = 256   # layer2 im2col features: 6*5*5 = 150 -> 256
POS2 = 25      # layer2 pooled spatial positions (5x5)


# ---------------------------------------------------------------------------
# Pallas kernels
# ---------------------------------------------------------------------------
def _conv_pool_kernel(p0_ref, p1_ref, p2_ref, p3_ref, w_ref, s_ref, o_ref):
    """Per image: conv(as matmul) + folded-BN shift + ReLU + 2x2 max-pool.

    p{0..3}: (1, R, K) bf16 pool-phase patch matrices.
    w:       (K, 128)  bf16 (BN scale folded into columns).
    s:       (1, 128)  f32 additive shift ((b - mean)*scale + beta).
    o:       (1, R, 128) bf16, lane-dense.
    """
    w = w_ref[...]
    rows = p0_ref.shape[1]
    shift = jnp.broadcast_to(s_ref[...], (rows, LANE))   # hoisted: one broadcast

    def branch(p_ref):
        z = jnp.dot(p_ref[0], w, preferred_element_type=jnp.float32)
        return jnp.maximum(z + shift, 0.0)

    m = jnp.maximum(jnp.maximum(branch(p0_ref), branch(p1_ref)),
                    jnp.maximum(branch(p2_ref), branch(p3_ref)))
    o_ref[0] = m.astype(o_ref.dtype)


def _layer2_fc_kernel(num_classes, q0_ref, q1_ref, q2_ref, q3_ref,
                      w2c_ref, s2_ref, w1_ref, b1_ref, w2f_ref, b2_ref,
                      w3f_ref, b3_ref, o_ref):
    """Per image: layer2 conv+BN+ReLU+pool fused with fc1+ReLU -> fc2+ReLU ->
    fc3+softmax.  The torch (c,h,w) flatten is folded into the lifted fc1
    weights w1_ref (25, 128, 128), so it never materializes."""
    wc = w2c_ref[...]
    shift = jnp.broadcast_to(s2_ref[...], (POS2, LANE))  # hoisted: one broadcast

    def branch(q_ref):
        z = jnp.dot(q_ref[0], wc, preferred_element_type=jnp.float32)
        return jnp.maximum(z + shift, 0.0)

    z2 = jnp.maximum(jnp.maximum(branch(q0_ref), branch(q1_ref)),
                     jnp.maximum(branch(q2_ref), branch(q3_ref)))   # (25,128) f32

    # fc1:  h1 = b1 + sum_p z2[p,:] @ W1L[p]   with W1L[p,c,j] = fc1_w[j, c*25+p]
    acc = b1_ref[...]                                               # (1,128) f32
    for p in range(POS2):
        acc = acc + jnp.dot(z2[p:p + 1, :].astype(jnp.bfloat16), w1_ref[p],
                            preferred_element_type=jnp.float32)
    h = jnp.maximum(acc, 0.0).astype(jnp.bfloat16)                  # (1,128)

    h = jnp.dot(h, w2f_ref[...], preferred_element_type=jnp.float32) + b2_ref[...]
    h = jnp.maximum(h, 0.0).astype(jnp.bfloat16)

    z = jnp.dot(h, w3f_ref[...], preferred_element_type=jnp.float32) + b3_ref[...]

    # mask padded class lanes before softmax
    lane = jax.lax.broadcasted_iota(jnp.int32, z.shape, 1)
    z = jnp.where(lane < num_classes, z, -1e30)
    m = jnp.max(z, axis=-1, keepdims=True)
    e = jnp.exp(z - m)
    o_ref[0] = e / jnp.sum(e, axis=-1, keepdims=True)               # exact divide


# ---------------------------------------------------------------------------
# pallas_call wrappers (grid over images, "parallel" semantics)
# ---------------------------------------------------------------------------
def conv_bn_relu_pool(phases, wmat, shift):
    """phases: 4 x (N, R, K) bf16; wmat: (K, 128) bf16; shift: (1, 128) f32."""
    n, rows, k = phases[0].shape
    return pl.pallas_call(
        _conv_pool_kernel,
        out_shape=jax.ShapeDtypeStruct((n, rows, LANE), jnp.bfloat16),
        grid=(n,),
        in_specs=[pl.BlockSpec((1, rows, k), lambda i: (i, 0, 0))] * 4 + [
            pl.BlockSpec((k, LANE), lambda i: (0, 0)),
            pl.BlockSpec((1, LANE), lambda i: (0, 0)),
        ],
        out_specs=pl.BlockSpec((1, rows, LANE), lambda i: (i, 0, 0)),
        compiler_params=pltpu.CompilerParams(
            dimension_semantics=("parallel",)),
    )(*phases, wmat, shift)


def layer2_fc_head(phases, q):
    """phases: 4 x (N, 25, 256) bf16 -> (N, 1, 128) f32 softmax probs."""
    n = phases[0].shape[0]
    return pl.pallas_call(
        functools.partial(_layer2_fc_kernel, q["num_classes"]),
        out_shape=jax.ShapeDtypeStruct((n, 1, LANE), jnp.float32),
        grid=(n,),
        in_specs=[pl.BlockSpec((1, POS2, K2_PAD), lambda i: (i, 0, 0))] * 4 + [
            pl.BlockSpec((K2_PAD, LANE), lambda i: (0, 0)),
            pl.BlockSpec((1, LANE), lambda i: (0, 0)),
            pl.BlockSpec((POS2, LANE, LANE), lambda i: (0, 0, 0)),
            pl.BlockSpec((1, LANE), lambda i: (0, 0)),
            pl.BlockSpec((LANE, LANE), lambda i: (0, 0)),
            pl.BlockSpec((1, LANE), lambda i: (0, 0)),
            pl.BlockSpec((LANE, LANE), lambda i: (0, 0)),
            pl.BlockSpec((1, LANE), lambda i: (0, 0)),
        ],
        out_specs=pl.BlockSpec((1, 1, LANE), lambda i: (i, 0, 0)),
        compiler_params=pltpu.CompilerParams(
            dimension_semantics=("parallel",)),
    )(*phases, q["w2"], q["s2"], q["fc1_w"], q["fc1_b"],
      q["fc2_w"], q["fc2_b"], q["fc3_w"], q["fc3_b"])


# ---------------------------------------------------------------------------
# XLA glue: one fused patch-extraction op + 4 strided pool-phase slices
# ---------------------------------------------------------------------------
def _pool_phase_patches(x_nhwc, ksize, padding, k_pad):
    """(N,H,W,C) -> 4 pool-phase patch tensors (N, POH*POW, k_pad), bf16.
    Real feature columns are ordered (ci, kh, kw) as produced by
    jax.lax.conv_general_dilated_patches; remaining columns are zero."""
    n = x_nhwc.shape[0]
    patches = jax.lax.conv_general_dilated_patches(
        x_nhwc, filter_shape=(ksize, ksize), window_strides=(1, 1),
        padding=((padding, padding), (padding, padding)),
        dimension_numbers=("NHWC", "HWIO", "NHWC"))        # (N, OH, OW, C*k*k)
    oh, ow, k_real = patches.shape[1], patches.shape[2], patches.shape[3]
    patches = jnp.pad(patches, ((0, 0), (0, 0), (0, 0), (0, k_pad - k_real)))
    poh, pow_ = oh // 2, ow // 2
    phase_mats = [patches[:, ph::2, pw::2, :].reshape(n, poh * pow_, k_pad)
                  for ph in range(2) for pw in range(2)]
    return phase_mats, poh, pow_


# ---------------------------------------------------------------------------
# Parameter preparation (done once): fold BN, lift fc1, pad to 128 lanes, bf16
# ---------------------------------------------------------------------------
def prepare_params(p, num_classes, eps=1e-5):
    assert num_classes <= LANE

    def fold_conv(w, b, gamma, beta, mean, var, k_pad):
        cout, cin, kh, kw = w.shape
        scale = gamma / jnp.sqrt(var + eps)
        # rows ordered (ci, kh, kw) to match conv_general_dilated_patches
        wmat = jnp.transpose(w, (1, 2, 3, 0)).reshape(cin * kh * kw, cout)
        wmat = wmat * scale[None, :]                        # fold BN scale
        shift = (b - mean) * scale + beta
        wmat = jnp.pad(wmat, ((0, k_pad - cin * kh * kw), (0, LANE - cout)))
        shift = jnp.pad(shift, (0, LANE - cout)).reshape(1, LANE)
        return wmat.astype(jnp.bfloat16), shift.astype(jnp.float32)

    q = {"num_classes": num_classes}
    q["w1"], q["s1"] = fold_conv(p["w1"], p["b1"], p["bn1_gamma"], p["bn1_beta"],
                                 p["bn1_mean"], p["bn1_var"], K1_PAD)
    q["w2"], q["s2"] = fold_conv(p["w2"], p["b2"], p["bn2_gamma"], p["bn2_beta"],
                                 p["bn2_mean"], p["bn2_var"], K2_PAD)

    # fc1 lifted per pooled spatial position: torch flattens the (16,5,5) NCHW
    # activation as (c,h,w); our kernel holds it as 25 position-rows x 16
    # channel-lanes, so  h1 = sum_p z2[p,:] @ W1L[p]  with
    # W1L[p, c, j] = fc1_w[j, c*25 + p].
    fc1 = p["fc1_w"].reshape(120, 16, 25)                  # [j, c, p]
    fc1 = jnp.transpose(fc1, (2, 1, 0))                    # [p, c, j] (25,16,120)
    q["fc1_w"] = jnp.pad(
        fc1, ((0, 0), (0, LANE - 16), (0, LANE - 120))).astype(jnp.bfloat16)
    q["fc1_b"] = jnp.pad(p["fc1_b"], (0, LANE - 120)).reshape(1, LANE).astype(jnp.float32)

    q["fc2_w"] = jnp.pad(
        p["fc2_w"].T, ((0, LANE - 120), (0, LANE - 84))).astype(jnp.bfloat16)
    q["fc2_b"] = jnp.pad(p["fc2_b"], (0, LANE - 84)).reshape(1, LANE).astype(jnp.float32)

    q["fc3_w"] = jnp.pad(
        p["fc3_w"].T, ((0, LANE - 84), (0, LANE - num_classes))).astype(jnp.bfloat16)
    q["fc3_b"] = jnp.pad(
        p["fc3_b"], (0, LANE - num_classes)).reshape(1, LANE).astype(jnp.float32)
    return q


# ---------------------------------------------------------------------------
# Model
# ---------------------------------------------------------------------------
def init_params(key, num_classes=10):
    ks = jax.random.split(key, 16)
    p = {}
    p["w1"] = 0.1 * jax.random.normal(ks[0], (6, 1, 5, 5), jnp.float32)
    p["b1"] = 0.1 * jax.random.normal(ks[1], (6,), jnp.float32)
    p["bn1_gamma"] = 1.0 + 0.1 * jax.random.normal(ks[2], (6,), jnp.float32)
    p["bn1_beta"] = 0.1 * jax.random.normal(ks[3], (6,), jnp.float32)
    p["bn1_mean"] = 0.1 * jax.random.normal(ks[4], (6,), jnp.float32)
    p["bn1_var"] = 1.0 + jnp.abs(0.1 * jax.random.normal(ks[5], (6,), jnp.float32))
    p["w2"] = 0.05 * jax.random.normal(ks[6], (16, 6, 5, 5), jnp.float32)
    p["b2"] = 0.1 * jax.random.normal(ks[7], (16,), jnp.float32)
    p["bn2_gamma"] = 1.0 + 0.1 * jax.random.normal(ks[8], (16,), jnp.float32)
    p["bn2_beta"] = 0.1 * jax.random.normal(ks[9], (16,), jnp.float32)
    p["bn2_mean"] = 0.1 * jax.random.normal(ks[10], (16,), jnp.float32)
    p["bn2_var"] = 1.0 + jnp.abs(0.1 * jax.random.normal(ks[11], (16,), jnp.float32))
    p["fc1_w"] = 0.05 * jax.random.normal(ks[12], (120, 400), jnp.float32)
    p["fc1_b"] = 0.1 * jax.random.normal(ks[13], (120,), jnp.float32)
    p["fc2_w"] = 0.05 * jax.random.normal(ks[14], (84, 120), jnp.float32)
    p["fc2_b"] = jnp.zeros((84,), jnp.float32)
    kw3, kb3 = jax.random.split(ks[15])
    p["fc3_w"] = 0.05 * jax.random.normal(kw3, (num_classes, 84), jnp.float32)
    p["fc3_b"] = 0.1 * jax.random.normal(kb3, (num_classes,), jnp.float32)
    return p


def lenet5_forward(x, q):
    """x: (N, 1, 28, 28) float32 -> softmax probabilities (N, num_classes)."""
    n = x.shape[0]
    nc = q["num_classes"]

    x = x.reshape(n, 28, 28, 1).astype(jnp.bfloat16)        # NCHW(C=1)->NHWC (free)

    # layer1: conv(5x5,pad=2) + BN + ReLU + maxpool(2x2), fused
    mats, poh, pow_ = _pool_phase_patches(x, ksize=5, padding=2, k_pad=K1_PAD)
    a1 = conv_bn_relu_pool(mats, q["w1"], q["s1"])          # (N,196,128) bf16
    a1 = a1.reshape(n, poh, pow_, LANE)[..., :6]            # (N,14,14,6) NHWC

    # layer2 conv+BN+ReLU+pool fused with the whole FC head (flatten folded
    # into fc1's lifted weights).  Dropout is identity at inference.
    # TODO(synk): training-mode dropout masking is not implemented.
    mats, _, _ = _pool_phase_patches(a1, ksize=5, padding=0, k_pad=K2_PAD)
    probs = layer2_fc_head(mats, q)                          # (N,1,128) f32
    return probs.reshape(n, LANE)[:, :nc]


if __name__ == "__main__":
    num_classes = 10
    key = jax.random.PRNGKey(0)
    kx, kp = jax.random.split(key)
    x = jax.random.normal(kx, (2, 1, 28, 28), jnp.float32)

    params = init_params(kp, num_classes=num_classes)
    prepared = prepare_params(params, num_classes)

    fwd = jax.jit(lambda inp: lenet5_forward(inp, prepared))
    probs = jax.block_until_ready(fwd(x))

    assert probs.shape == (2, num_classes)
    assert bool(jnp.all(jnp.isfinite(probs)))
    assert bool(jnp.all(probs >= 0.0))
    assert bool(jnp.allclose(jnp.sum(probs, axis=-1), 1.0, atol=1e-3))
    print("KERNEL_OK")
</pallas_src>

<mosaic_0001>
module attributes {stable_mosaic.version = 11 : i64} {
  func.func @_conv_pool_kernel(%arg0: i32, %arg1: memref<1x196x128xbf16, #tpu.memory_space<vmem>>, %arg2: memref<1x196x128xbf16, #tpu.memory_space<vmem>>, %arg3: memref<1x196x128xbf16, #tpu.memory_space<vmem>>, %arg4: memref<1x196x128xbf16, #tpu.memory_space<vmem>>, %arg5: memref<128x128xbf16, #tpu.memory_space<vmem>>, %arg6: memref<1x128xf32, #tpu.memory_space<vmem>>, %arg7: memref<1x196x128xbf16, #tpu.memory_space<vmem>>) attributes {dimension_semantics = [#tpu.dimension_semantics<parallel>], iteration_bounds = array<i64: 2>, scalar_prefetch = 0 : i64, scratch_operands = 0 : i64, tpu.core_type = #tpu.core_type<tc>, window_params = [{transform_indices = @transform_0, window_bounds = array<i64: 1, 196, 128>}, {transform_indices = @transform_1, window_bounds = array<i64: 1, 196, 128>}, {transform_indices = @transform_2, window_bounds = array<i64: 1, 196, 128>}, {transform_indices = @transform_3, window_bounds = array<i64: 1, 196, 128>}, {pipeline_mode = #tpu.pipeline_mode<synchronous>, transform_indices = @transform_4, window_bounds = array<i64: 128, 128>}, {pipeline_mode = #tpu.pipeline_mode<synchronous>, transform_indices = @transform_5, window_bounds = array<i64: 1, 128>}, {transform_indices = @transform_6, window_bounds = array<i64: 1, 196, 128>}]} {
    %c0 = arith.constant 0 : index
    %c0_0 = arith.constant 0 : index
    %0 = vector.load %arg5[%c0, %c0_0] : memref<128x128xbf16, #tpu.memory_space<vmem>>, vector<128x128xbf16>
    %c0_1 = arith.constant 0 : index
    %c0_2 = arith.constant 0 : index
    %1 = vector.load %arg6[%c0_1, %c0_2] : memref<1x128xf32, #tpu.memory_space<vmem>>, vector<1x128xf32>
    %2 = vector.shape_cast %1 : vector<1x128xf32> to vector<1x128xf32>
    %3 = vector.broadcast %2 : vector<1x128xf32> to vector<196x128xf32>
    %c0_3 = arith.constant 0 : index
    %c0_4 = arith.constant 0 : index
    %c0_5 = arith.constant 0 : index
    %4 = vector.load %arg1[%c0_3, %c0_4, %c0_5] : memref<1x196x128xbf16, #tpu.memory_space<vmem>>, vector<1x196x128xbf16>
    %5 = vector.shape_cast %4 : vector<1x196x128xbf16> to vector<196x128xbf16>
    %cst = arith.constant dense<0.000000e+00> : vector<196x128xf32>
    %6 = tpu.matmul %5, %0, %cst {dimension_numbers = #tpu.dot_dimension_numbers<[1], [0], [0], [1], [0, 0, 1, 1], [], []>} : vector<196x128xbf16>, vector<128x128xbf16>, vector<196x128xf32> -> vector<196x128xf32>
    %7 = arith.addf %6, %3 : vector<196x128xf32>
    %cst_6 = arith.constant 0.000000e+00 : f32
    %8 = vector.broadcast %cst_6 : f32 to vector<196x128xf32>
    %9 = arith.maximumf %7, %8 : vector<196x128xf32>
    %c0_7 = arith.constant 0 : index
    %c0_8 = arith.constant 0 : index
    %c0_9 = arith.constant 0 : index
    %10 = vector.load %arg2[%c0_7, %c0_8, %c0_9] : memref<1x196x128xbf16, #tpu.memory_space<vmem>>, vector<1x196x128xbf16>
    %11 = vector.shape_cast %10 : vector<1x196x128xbf16> to vector<196x128xbf16>
    %cst_10 = arith.constant dense<0.000000e+00> : vector<196x128xf32>
    %12 = tpu.matmul %11, %0, %cst_10 {dimension_numbers = #tpu.dot_dimension_numbers<[1], [0], [0], [1], [0, 0, 1, 1], [], []>} : vector<196x128xbf16>, vector<128x128xbf16>, vector<196x128xf32> -> vector<196x128xf32>
    %13 = arith.addf %12, %3 : vector<196x128xf32>
    %cst_11 = arith.constant 0.000000e+00 : f32
    %14 = vector.broadcast %cst_11 : f32 to vector<196x128xf32>
    %15 = arith.maximumf %13, %14 : vector<196x128xf32>
    %16 = arith.maximumf %9, %15 : vector<196x128xf32>
    %c0_12 = arith.constant 0 : index
    %c0_13 = arith.constant 0 : index
    %c0_14 = arith.constant 0 : index
    %17 = vector.load %arg3[%c0_12, %c0_13, %c0_14] : memref<1x196x128xbf16, #tpu.memory_space<vmem>>, vector<1x196x128xbf16>
    %18 = vector.shape_cast %17 : vector<1x196x128xbf16> to vector<196x128xbf16>
    %cst_15 = arith.constant dense<0.000000e+00> : vector<196x128xf32>
    %19 = tpu.matmul %18, %0, %cst_15 {dimension_numbers = #tpu.dot_dimension_numbers<[1], [0], [0], [1], [0, 0, 1, 1], [], []>} : vector<196x128xbf16>, vector<128x128xbf16>, vector<196x128xf32> -> vector<196x128xf32>
    %20 = arith.addf %19, %3 : vector<196x128xf32>
    %cst_16 = arith.constant 0.000000e+00 : f32
    %21 = vector.broadcast %cst_16 : f32 to vector<196x128xf32>
    %22 = arith.maximumf %20, %21 : vector<196x128xf32>
    %c0_17 = arith.constant 0 : index
    %c0_18 = arith.constant 0 : index
    %c0_19 = arith.constant 0 : index
    %23 = vector.load %arg4[%c0_17, %c0_18, %c0_19] : memref<1x196x128xbf16, #tpu.memory_space<vmem>>, vector<1x196x128xbf16>
    %24 = vector.shape_cast %23 : vector<1x196x128xbf16> to vector<196x128xbf16>
    %cst_20 = arith.constant dense<0.000000e+00> : vector<196x128xf32>
    %25 = tpu.matmul %24, %0, %cst_20 {dimension_numbers = #tpu.dot_dimension_numbers<[1], [0], [0], [1], [0, 0, 1, 1], [], []>} : vector<196x128xbf16>, vector<128x128xbf16>, vector<196x128xf32> -> vector<196x128xf32>
    %26 = arith.addf %25, %3 : vector<196x128xf32>
    %cst_21 = arith.constant 0.000000e+00 : f32
    %27 = vector.broadcast %cst_21 : f32 to vector<196x128xf32>
    %28 = arith.maximumf %26, %27 : vector<196x128xf32>
    %29 = arith.maximumf %22, %28 : vector<196x128xf32>
    %30 = arith.maximumf %16, %29 : vector<196x128xf32>
    %31 = arith.truncf %30 : vector<196x128xf32> to vector<196x128xbf16>
    %c0_22 = arith.constant 0 : index
    %c0_23 = arith.constant 0 : index
    %c0_24 = arith.constant 0 : index
    %32 = vector.load %arg7[%c0_22, %c0_23, %c0_24] : memref<1x196x128xbf16, #tpu.memory_space<vmem>>, vector<1x196x128xbf16>
    %33 = vector.shape_cast %32 : vector<1x196x128xbf16> to vector<196x128xbf16>
    %34 = vector.shape_cast %31 : vector<196x128xbf16> to vector<1x196x128xbf16>
    tpu.vector_store %arg7[%c0_22, %c0_23, %c0_24], %34 {strides = array<i32>} : memref<1x196x128xbf16, #tpu.memory_space<vmem>>, vector<1x196x128xbf16>,
    return
  }
  func.func @transform_0(%arg0: i32) -> (i32, i32, i32) {
    %c0_i32 = arith.constant 0 : i32
    %c0_i32_0 = arith.constant 0 : i32
    %c0_i32_1 = arith.constant 0 : i32
    return %arg0, %c0_i32, %c0_i32_0 : i32, i32, i32
  }
  func.func @transform_1(%arg0: i32) -> (i32, i32, i32) {
    %c0_i32 = arith.constant 0 : i32
    %c0_i32_0 = arith.constant 0 : i32
    %c0_i32_1 = arith.constant 0 : i32
    return %arg0, %c0_i32, %c0_i32_0 : i32, i32, i32
  }
  func.func @transform_2(%arg0: i32) -> (i32, i32, i32) {
    %c0_i32 = arith.constant 0 : i32
    %c0_i32_0 = arith.constant 0 : i32
    %c0_i32_1 = arith.constant 0 : i32
    return %arg0, %c0_i32, %c0_i32_0 : i32, i32, i32
  }
  func.func @transform_3(%arg0: i32) -> (i32, i32, i32) {
    %c0_i32 = arith.constant 0 : i32
    %c0_i32_0 = arith.constant 0 : i32
    %c0_i32_1 = arith.constant 0 : i32
    return %arg0, %c0_i32, %c0_i32_0 : i32, i32, i32
  }
  func.func @transform_4(%arg0: i32) -> (i32, i32) {
    %c0_i32 = arith.constant 0 : i32
    %c0_i32_0 = arith.constant 0 : i32
    %c0_i32_1 = arith.constant 0 : i32
    return %c0_i32, %c0_i32_0 : i32, i32
  }
  func.func @transform_5(%arg0: i32) -> (i32, i32) {
    %c0_i32 = arith.constant 0 : i32
    %c0_i32_0 = arith.constant 0 : i32
    %c0_i32_1 = arith.constant 0 : i32
    return %c0_i32, %c0_i32_0 : i32, i32
  }
  func.func @transform_6(%arg0: i32) -> (i32, i32, i32) {
    %c0_i32 = arith.constant 0 : i32
    %c0_i32_0 = arith.constant 0 : i32
    %c0_i32_1 = arith.constant 0 : i32
    return %arg0, %c0_i32, %c0_i32_0 : i32, i32, i32
  }
}

module attributes {stable_mosaic.version = 11 : i64} {
  func.func @_layer2_fc_kernel(%arg0: i32, %arg1: memref<1x25x256xbf16, #tpu.memory_space<vmem>>, %arg2: memref<1x25x256xbf16, #tpu.memory_space<vmem>>, %arg3: memref<1x25x256xbf16, #tpu.memory_space<vmem>>, %arg4: memref<1x25x256xbf16, #tpu.memory_space<vmem>>, %arg5: memref<256x128xbf16, #tpu.memory_space<vmem>>, %arg6: memref<1x128xf32, #tpu.memory_space<vmem>>, %arg7: memref<25x128x128xbf16, #tpu.memory_space<vmem>>, %arg8: memref<1x128xf32, #tpu.memory_space<vmem>>, %arg9: memref<128x128xbf16, #tpu.memory_space<vmem>>, %arg10: memref<1x128xf32, #tpu.memory_space<vmem>>, %arg11: memref<128x128xbf16, #tpu.memory_space<vmem>>, %arg12: memref<1x128xf32, #tpu.memory_space<vmem>>, %arg13: memref<1x1x128xf32, #tpu.memory_space<vmem>>) attributes {dimension_semantics = [#tpu.dimension_semantics<parallel>], iteration_bounds = array<i64: 2>, scalar_prefetch = 0 : i64, scratch_operands = 0 : i64, tpu.core_type = #tpu.core_type<tc>, window_params = [{transform_indices = @transform_0, window_bounds = array<i64: 1, 25, 256>}, {transform_indices = @transform_1, window_bounds = array<i64: 1, 25, 256>}, {transform_indices = @transform_2, window_bounds = array<i64: 1, 25, 256>}, {transform_indices = @transform_3, window_bounds = array<i64: 1, 25, 256>}, {pipeline_mode = #tpu.pipeline_mode<synchronous>, transform_indices = @transform_4, window_bounds = array<i64: 256, 128>}, {pipeline_mode = #tpu.pipeline_mode<synchronous>, transform_indices = @transform_5, window_bounds = array<i64: 1, 128>}, {pipeline_mode = #tpu.pipeline_mode<synchronous>, transform_indices = @transform_6, window_bounds = array<i64: 25, 128, 128>}, {pipeline_mode = #tpu.pipeline_mode<synchronous>, transform_indices = @transform_7, window_bounds = array<i64: 1, 128>}, {pipeline_mode = #tpu.pipeline_mode<synchronous>, transform_indices = @transform_8, window_bounds = array<i64: 128, 128>}, {pipeline_mode = #tpu.pipeline_mode<synchronous>, transform_indices = @transform_9, window_bounds = array<i64: 1, 128>}, {pipeline_mode = #tpu.pipeline_mode<synchronous>, transform_indices = @transform_10, window_bounds = array<i64: 128, 128>}, {pipeline_mode = #tpu.pipeline_mode<synchronous>, transform_indices = @transform_11, window_bounds = array<i64: 1, 128>}, {transform_indices = @transform_12, window_bounds = array<i64: 1, 1, 128>}]} {
    %c0 = arith.constant 0 : index
    %c0_0 = arith.constant 0 : index
    %0 = vector.load %arg5[%c0, %c0_0] : memref<256x128xbf16, #tpu.memory_space<vmem>>, vector<256x128xbf16>
    %c0_1 = arith.constant 0 : index
    %c0_2 = arith.constant 0 : index
    %1 = vector.load %arg6[%c0_1, %c0_2] : memref<1x128xf32, #tpu.memory_space<vmem>>, vector<1x128xf32>
    %2 = vector.shape_cast %1 : vector<1x128xf32> to vector<1x128xf32>
    %3 = vector.broadcast %2 : vector<1x128xf32> to vector<25x128xf32>
    %c0_3 = arith.constant 0 : index
    %c0_4 = arith.constant 0 : index
    %c0_5 = arith.constant 0 : index
    %4 = vector.load %arg1[%c0_3, %c0_4, %c0_5] : memref<1x25x256xbf16, #tpu.memory_space<vmem>>, vector<1x25x256xbf16>
    %5 = vector.shape_cast %4 : vector<1x25x256xbf16> to vector<25x256xbf16>
    %cst = arith.constant dense<0.000000e+00> : vector<25x128xf32>
    %6 = tpu.matmul %5, %0, %cst {dimension_numbers = #tpu.dot_dimension_numbers<[1], [0], [0], [1], [0, 0, 1, 1], [], []>} : vector<25x256xbf16>, vector<256x128xbf16>, vector<25x128xf32> -> vector<25x128xf32>
    %7 = arith.addf %6, %3 : vector<25x128xf32>
    %cst_6 = arith.constant 0.000000e+00 : f32
    %8 = vector.broadcast %cst_6 : f32 to vector<25x128xf32>
    %9 = arith.maximumf %7, %8 : vector<25x128xf32>
    %c0_7 = arith.constant 0 : index
    %c0_8 = arith.constant 0 : index
    %c0_9 = arith.constant 0 : index
    %10 = vector.load %arg2[%c0_7, %c0_8, %c0_9] : memref<1x25x256xbf16, #tpu.memory_space<vmem>>, vector<1x25x256xbf16>
    %11 = vector.shape_cast %10 : vector<1x25x256xbf16> to vector<25x256xbf16>
    %cst_10 = arith.constant dense<0.000000e+00> : vector<25x128xf32>
    %12 = tpu.matmul %11, %0, %cst_10 {dimension_numbers = #tpu.dot_dimension_numbers<[1], [0], [0], [1], [0, 0, 1, 1], [], []>} : vector<25x256xbf16>, vector<256x128xbf16>, vector<25x128xf32> -> vector<25x128xf32>
    %13 = arith.addf %12, %3 : vector<25x128xf32>
    %cst_11 = arith.constant 0.000000e+00 : f32
    %14 = vector.broadcast %cst_11 : f32 to vector<25x128xf32>
    %15 = arith.maximumf %13, %14 : vector<25x128xf32>
    %16 = arith.maximumf %9, %15 : vector<25x128xf32>
    %c0_12 = arith.constant 0 : index
    %c0_13 = arith.constant 0 : index
    %c0_14 = arith.constant 0 : index
    %17 = vector.load %arg3[%c0_12, %c0_13, %c0_14] : memref<1x25x256xbf16, #tpu.memory_space<vmem>>, vector<1x25x256xbf16>
    %18 = vector.shape_cast %17 : vector<1x25x256xbf16> to vector<25x256xbf16>
    %cst_15 = arith.constant dense<0.000000e+00> : vector<25x128xf32>
    %19 = tpu.matmul %18, %0, %cst_15 {dimension_numbers = #tpu.dot_dimension_numbers<[1], [0], [0], [1], [0, 0, 1, 1], [], []>} : vector<25x256xbf16>, vector<256x128xbf16>, vector<25x128xf32> -> vector<25x128xf32>
    %20 = arith.addf %19, %3 : vector<25x128xf32>
    %cst_16 = arith.constant 0.000000e+00 : f32
    %21 = vector.broadcast %cst_16 : f32 to vector<25x128xf32>
    %22 = arith.maximumf %20, %21 : vector<25x128xf32>
    %c0_17 = arith.constant 0 : index
    %c0_18 = arith.constant 0 : index
    %c0_19 = arith.constant 0 : index
    %23 = vector.load %arg4[%c0_17, %c0_18, %c0_19] : memref<1x25x256xbf16, #tpu.memory_space<vmem>>, vector<1x25x256xbf16>
    %24 = vector.shape_cast %23 : vector<1x25x256xbf16> to vector<25x256xbf16>
    %cst_20 = arith.constant dense<0.000000e+00> : vector<25x128xf32>
    %25 = tpu.matmul %24, %0, %cst_20 {dimension_numbers = #tpu.dot_dimension_numbers<[1], [0], [0], [1], [0, 0, 1, 1], [], []>} : vector<25x256xbf16>, vector<256x128xbf16>, vector<25x128xf32> -> vector<25x128xf32>
    %26 = arith.addf %25, %3 : vector<25x128xf32>
    %cst_21 = arith.constant 0.000000e+00 : f32
    %27 = vector.broadcast %cst_21 : f32 to vector<25x128xf32>
    %28 = arith.maximumf %26, %27 : vector<25x128xf32>
    %29 = arith.maximumf %22, %28 : vector<25x128xf32>
    %30 = arith.maximumf %16, %29 : vector<25x128xf32>
    %c0_22 = arith.constant 0 : index
    %c0_23 = arith.constant 0 : index
    %31 = vector.load %arg8[%c0_22, %c0_23] : memref<1x128xf32, #tpu.memory_space<vmem>>, vector<1x128xf32>
    %32 = vector.extract_strided_slice %30 {offsets = [0, 0], sizes = [1, 128], strides = [1, 1]} : vector<25x128xf32> to vector<1x128xf32>
    %33 = arith.truncf %32 : vector<1x128xf32> to vector<1x128xbf16>
    %c0_24 = arith.constant 0 : index
    %c0_25 = arith.constant 0 : index
    %c0_26 = arith.constant 0 : index
    %34 = vector.load %arg7[%c0_24, %c0_25, %c0_26] : memref<25x128x128xbf16, #tpu.memory_space<vmem>>, vector<1x128x128xbf16>
    %35 = vector.shape_cast %34 : vector<1x128x128xbf16> to vector<128x128xbf16>
    %cst_27 = arith.constant dense<0.000000e+00> : vector<1x128xf32>
    %36 = tpu.matmul %33, %35, %cst_27 {dimension_numbers = #tpu.dot_dimension_numbers<[1], [0], [0], [1], [0, 0, 1, 1], [], []>} : vector<1x128xbf16>, vector<128x128xbf16>, vector<1x128xf32> -> vector<1x128xf32>
    %37 = arith.addf %31, %36 : vector<1x128xf32>
    %38 = vector.extract_strided_slice %30 {offsets = [1, 0], sizes = [1, 128], strides = [1, 1]} : vector<25x128xf32> to vector<1x128xf32>
    %39 = arith.truncf %38 : vector<1x128xf32> to vector<1x128xbf16>
    %c1 = arith.constant 1 : index
    %c0_28 = arith.constant 0 : index
    %c0_29 = arith.constant 0 : index
    %40 = vector.load %arg7[%c1, %c0_28, %c0_29] : memref<25x128x128xbf16, #tpu.memory_space<vmem>>, vector<1x128x128xbf16>
    %41 = vector.shape_cast %40 : vector<1x128x128xbf16> to vector<128x128xbf16>
    %cst_30 = arith.constant dense<0.000000e+00> : vector<1x128xf32>
    %42 = tpu.matmul %39, %41, %cst_30 {dimension_numbers = #tpu.dot_dimension_numbers<[1], [0], [0], [1], [0, 0, 1, 1], [], []>} : vector<1x128xbf16>, vector<128x128xbf16>, vector<1x128xf32> -> vector<1x128xf32>
    %43 = arith.addf %37, %42 : vector<1x128xf32>
    %44 = vector.extract_strided_slice %30 {offsets = [2, 0], sizes = [1, 128], strides = [1, 1]} : vector<25x128xf32> to vector<1x128xf32>
    %45 = arith.truncf %44 : vector<1x128xf32> to vector<1x128xbf16>
    %c2 = arith.constant 2 : index
    %c0_31 = arith.constant 0 : index
    %c0_32 = arith.constant 0 : index
    %46 = vector.load %arg7[%c2, %c0_31, %c0_32] : memref<25x128x128xbf16, #tpu.memory_space<vmem>>, vector<1x128x128xbf16>
    %47 = vector.shape_cast %46 : vector<1x128x128xbf16> to vector<128x128xbf16>
    %cst_33 = arith.constant dense<0.000000e+00> : vector<1x128xf32>
    %48 = tpu.matmul %45, %47, %cst_33 {dimension_numbers = #tpu.dot_dimension_numbers<[1], [0], [0], [1], [0, 0, 1, 1], [], []>} : vector<1x128xbf16>, vector<128x128xbf16>, vector<1x128xf32> -> vector<1x128xf32>
    %49 = arith.addf %43, %48 : vector<1x128xf32>
    %50 = vector.extract_strided_slice %30 {offsets = [3, 0], sizes = [1, 128], strides = [1, 1]} : vector<25x128xf32> to vector<1x128xf32>
    %51 = arith.truncf %50 : vector<1x128xf32> to vector<1x128xbf16>
    %c3 = arith.constant 3 : index
    %c0_34 = arith.constant 0 : index
    %c0_35 = arith.constant 0 : index
    %52 = vector.load %arg7[%c3, %c0_34, %c0_35] : memref<25x128x128xbf16, #tpu.memory_space<vmem>>, vector<1x128x128xbf16>
    %53 = vector.shape_cast %52 : vector<1x128x128xbf16> to vector<128x128xbf16>
    %cst_36 = arith.constant dense<0.000000e+00> : vector<1x128xf32>
    %54 = tpu.matmul %51, %53, %cst_36 {dimension_numbers = #tpu.dot_dimension_numbers<[1], [0], [0], [1], [0, 0, 1, 1], [], []>} : vector<1x128xbf16>, vector<128x128xbf16>, vector<1x128xf32> -> vector<1x128xf32>
    %55 = arith.addf %49, %54 : vector<1x128xf32>
    %56 = vector.extract_strided_slice %30 {offsets = [4, 0], sizes = [1, 128], strides = [1, 1]} : vector<25x128xf32> to vector<1x128xf32>
    %57 = arith.truncf %56 : vector<1x128xf32> to vector<1x128xbf16>
    %c4 = arith.constant 4 : index
    %c0_37 = arith.constant 0 : index
    %c0_38 = arith.constant 0 : index
    %58 = vector.load %arg7[%c4, %c0_37, %c0_38] : memref<25x128x128xbf16, #tpu.memory_space<vmem>>, vector<1x128x128xbf16>
    %59 = vector.shape_cast %58 : vector<1x128x128xbf16> to vector<128x128xbf16>
    %cst_39 = arith.constant dense<0.000000e+00> : vector<1x128xf32>
    %60 = tpu.matmul %57, %59, %cst_39 {dimension_numbers = #tpu.dot_dimension_numbers<[1], [0], [0], [1], [0, 0, 1, 1], [], []>} : vector<1x128xbf16>, vector<128x128xbf16>, vector<1x128xf32> -> vector<1x128xf32>
    %61 = arith.addf %55, %60 : vector<1x128xf32>
    %62 = vector.extract_strided_slice %30 {offsets = [5, 0], sizes = [1, 128], strides = [1, 1]} : vector<25x128xf32> to vector<1x128xf32>
    %63 = arith.truncf %62 : vector<1x128xf32> to vector<1x128xbf16>
    %c5 = arith.constant 5 : index
    %c0_40 = arith.constant 0 : index
    %c0_41 = arith.constant 0 : index
    %64 = vector.load %arg7[%c5, %c0_40, %c0_41] : memref<25x128x128xbf16, #tpu.memory_space<vmem>>, vector<1x128x128xbf16>
    %65 = vector.shape_cast %64 : vector<1x128x128xbf16> to vector<128x128xbf16>
    %cst_42 = arith.constant dense<0.000000e+00> : vector<1x128xf32>
    %66 = tpu.matmul %63, %65, %cst_42 {dimension_numbers = #tpu.dot_dimension_numbers<[1], [0], [0], [1], [0, 0, 1, 1], [], []>} : vector<1x128xbf16>, vector<128x128xbf16>, vector<1x128xf32> -> vector<1x128xf32>
    %67 = arith.addf %61, %66 : vector<1x128xf32>
    %68 = vector.extract_strided_slice %30 {offsets = [6, 0], sizes = [1, 128], strides = [1, 1]} : vector<25x128xf32> to vector<1x128xf32>
    %69 = arith.truncf %68 : vector<1x128xf32> to vector<1x128xbf16>
    %c6 = arith.constant 6 : index
    %c0_43 = arith.constant 0 : index
    %c0_44 = arith.constant 0 : index
    %70 = vector.load %arg7[%c6, %c0_43, %c0_44] : memref<25x128x128xbf16, #tpu.memory_space<vmem>>, vector<1x128x128xbf16>
    %71 = vector.shape_cast %70 : vector<1x128x128xbf16> to vector<128x128xbf16>
    %cst_45 = arith.constant dense<0.000000e+00> : vector<1x128xf32>
    %72 = tpu.matmul %69, %71, %cst_45 {dimension_numbers = #tpu.dot_dimension_numbers<[1], [0], [0], [1], [0, 0, 1, 1], [], []>} : vector<1x128xbf16>, vector<128x128xbf16>, vector<1x128xf32> -> vector<1x128xf32>
    %73 = arith.addf %67, %72 : vector<1x128xf32>
    %74 = vector.extract_strided_slice %30 {offsets = [7, 0], sizes = [1, 128], strides = [1, 1]} : vector<25x128xf32> to vector<1x128xf32>
    %75 = arith.truncf %74 : vector<1x128xf32> to vector<1x128xbf16>
    %c7 = arith.constant 7 : index
    %c0_46 = arith.constant 0 : index
    %c0_47 = arith.constant 0 : index
    %76 = vector.load %arg7[%c7, %c0_46, %c0_47] : memref<25x128x128xbf16, #tpu.memory_space<vmem>>, vector<1x128x128xbf16>
    %77 = vector.shape_cast %76 : vector<1x128x128xbf16> to vector<128x128xbf16>
    %cst_48 = arith.constant dense<0.000000e+00> : vector<1x128xf32>
    %78 = tpu.matmul %75, %77, %cst_48 {dimension_numbers = #tpu.dot_dimension_numbers<[1], [0], [0], [1], [0, 0, 1, 1], [], []>} : vector<1x128xbf16>, vector<128x128xbf16>, vector<1x128xf32> -> vector<1x128xf32>
    %79 = arith.addf %73, %78 : vector<1x128xf32>
    %80 = vector.extract_strided_slice %30 {offsets = [8, 0], sizes = [1, 128], strides = [1, 1]} : vector<25x128xf32> to vector<1x128xf32>
    %81 = arith.truncf %80 : vector<1x128xf32> to vector<1x128xbf16>
    %c8 = arith.constant 8 : index
    %c0_49 = arith.constant 0 : index
    %c0_50 = arith.constant 0 : index
    %82 = vector.load %arg7[%c8, %c0_49, %c0_50] : memref<25x128x128xbf16, #tpu.memory_space<vmem>>, vector<1x128x128xbf16>
    %83 = vector.shape_cast %82 : vector<1x128x128xbf16> to vector<128x128xbf16>
    %cst_51 = arith.constant dense<0.000000e+00> : vector<1x128xf32>
    %84 = tpu.matmul %81, %83, %cst_51 {dimension_numbers = #tpu.dot_dimension_numbers<[1], [0], [0], [1], [0, 0, 1, 1], [], []>} : vector<1x128xbf16>, vector<128x128xbf16>, vector<1x128xf32> -> vector<1x128xf32>
    %85 = arith.addf %79, %84 : vector<1x128xf32>
    %86 = vector.extract_strided_slice %30 {offsets = [9, 0], sizes = [1, 128], strides = [1, 1]} : vector<25x128xf32> to vector<1x128xf32>
    %87 = arith.truncf %86 : vector<1x128xf32> to vector<1x128xbf16>
    %c9 = arith.constant 9 : index
    %c0_52 = arith.constant 0 : index
    %c0_53 = arith.constant 0 : index
    %88 = vector.load %arg7[%c9, %c0_52, %c0_53] : memref<25x128x128xbf16, #tpu.memory_space<vmem>>, vector<1x128x128xbf16>
    %89 = vector.shape_cast %88 : vector<1x128x128xbf16> to vector<128x128xbf16>
    %cst_54 = arith.constant dense<0.000000e+00> : vector<1x128xf32>
    %90 = tpu.matmul %87, %89, %cst_54 {dimension_numbers = #tpu.dot_dimension_numbers<[1], [0], [0], [1], [0, 0, 1, 1], [], []>} : vector<1x128xbf16>, vector<128x128xbf16>, vector<1x128xf32> -> vector<1x128xf32>
    %91 = arith.addf %85, %90 : vector<1x128xf32>
    %92 = vector.extract_strided_slice %30 {offsets = [10, 0], sizes = [1, 128], strides = [1, 1]} : vector<25x128xf32> to vector<1x128xf32>
    %93 = arith.truncf %92 : vector<1x128xf32> to vector<1x128xbf16>
    %c10 = arith.constant 10 : index
    %c0_55 = arith.constant 0 : index
    %c0_56 = arith.constant 0 : index
    %94 = vector.load %arg7[%c10, %c0_55, %c0_56] : memref<25x128x128xbf16, #tpu.memory_space<vmem>>, vector<1x128x128xbf16>
    %95 = vector.shape_cast %94 : vector<1x128x128xbf16> to vector<128x128xbf16>
    %cst_57 = arith.constant dense<0.000000e+00> : vector<1x128xf32>
    %96 = tpu.matmul %93, %95, %cst_57 {dimension_numbers = #tpu.dot_dimension_numbers<[1], [0], [0], [1], [0, 0, 1, 1], [], []>} : vector<1x128xbf16>, vector<128x128xbf16>, vector<1x128xf32> -> vector<1x128xf32>
    %97 = arith.addf %91, %96 : vector<1x128xf32>
    %98 = vector.extract_strided_slice %30 {offsets = [11, 0], sizes = [1, 128], strides = [1, 1]} : vector<25x128xf32> to vector<1x128xf32>
    %99 = arith.truncf %98 : vector<1x128xf32> to vector<1x128xbf16>
    %c11 = arith.constant 11 : index
    %c0_58 = arith.constant 0 : index
    %c0_59 = arith.constant 0 : index
    %100 = vector.load %arg7[%c11, %c0_58, %c0_59] : memref<25x128x128xbf16, #tpu.memory_space<vmem>>, vector<1x128x128xbf16>
    %101 = vector.shape_cast %100 : vector<1x128x128xbf16> to vector<128x128xbf16>
    %cst_60 = arith.constant dense<0.000000e+00> : vector<1x128xf32>
    %102 = tpu.matmul %99, %101, %cst_60 {dimension_numbers = #tpu.dot_dimension_numbers<[1], [0], [0], [1], [0, 0, 1, 1], [], []>} : vector<1x128xbf16>, vector<128x128xbf16>, vector<1x128xf32> -> vector<1x128xf32>
    %103 = arith.addf %97, %102 : vector<1x128xf32>
    %104 = vector.extract_strided_slice %30 {offsets = [12, 0], sizes = [1, 128], strides = [1, 1]} : vector<25x128xf32> to vector<1x128xf32>
    %105 = arith.truncf %104 : vector<1x128xf32> to vector<1x128xbf16>
    %c12 = arith.constant 12 : index
    %c0_61 = arith.constant 0 : index
    %c0_62 = arith.constant 0 : index
    %106 = vector.load %arg7[%c12, %c0_61, %c0_62] : memref<25x128x128xbf16, #tpu.memory_space<vmem>>, vector<1x128x128xbf16>
    %107 = vector.shape_cast %106 : vector<1x128x128xbf16> to vector<128x128xbf16>
    %cst_63 = arith.constant dense<0.000000e+00> : vector<1x128xf32>
    %108 = tpu.matmul %105, %107, %cst_63 {dimension_numbers = #tpu.dot_dimension_numbers<[1], [0], [0], [1], [0, 0, 1, 1], [], []>} : vector<1x128xbf16>, vector<128x128xbf16>, vector<1x128xf32> -> vector<1x128xf32>
    %109 = arith.addf %103, %108 : vector<1x128xf32>
    %110 = vector.extract_strided_slice %30 {offsets = [13, 0], sizes = [1, 128], strides = [1, 1]} : vector<25x128xf32> to vector<1x128xf32>
    %111 = arith.truncf %110 : vector<1x128xf32> to vector<1x128xbf16>
    %c13 = arith.constant 13 : index
    %c0_64 = arith.constant 0 : index
    %c0_65 = arith.constant 0 : index
    %112 = vector.load %arg7[%c13, %c0_64, %c0_65] : memref<25x128x128xbf16, #tpu.memory_space<vmem>>, vector<1x128x128xbf16>
    %113 = vector.shape_cast %112 : vector<1x128x128xbf16> to vector<128x128xbf16>
    %cst_66 = arith.constant dense<0.000000e+00> : vector<1x128xf32>
    %114 = tpu.matmul %111, %113, %cst_66 {dimension_numbers = #tpu.dot_dimension_numbers<[1], [0], [0], [1], [0, 0, 1, 1], [], []>} : vector<1x128xbf16>, vector<128x128xbf16>, vector<1x128xf32> -> vector<1x128xf32>
    %115 = arith.addf %109, %114 : vector<1x128xf32>
    %116 = vector.extract_strided_slice %30 {offsets = [14, 0], sizes = [1, 128], strides = [1, 1]} : vector<25x128xf32> to vector<1x128xf32>
    %117 = arith.truncf %116 : vector<1x128xf32> to vector<1x128xbf16>
    %c14 = arith.constant 14 : index
    %c0_67 = arith.constant 0 : index
    %c0_68 = arith.constant 0 : index
    %118 = vector.load %arg7[%c14, %c0_67, %c0_68] : memref<25x128x128xbf16, #tpu.memory_space<vmem>>, vector<1x128x128xbf16>
    %119 = vector.shape_cast %118 : vector<1x128x128xbf16> to vector<128x128xbf16>
    %cst_69 = arith.constant dense<0.000000e+00> : vector<1x128xf32>
    %120 = tpu.matmul %117, %119, %cst_69 {dimension_numbers = #tpu.dot_dimension_numbers<[1], [0], [0], [1], [0, 0, 1, 1], [], []>} : vector<1x128xbf16>, vector<128x128xbf16>, vector<1x128xf32> -> vector<1x128xf32>
    %121 = arith.addf %115, %120 : vector<1x128xf32>
    %122 = vector.extract_strided_slice %30 {offsets = [15, 0], sizes = [1, 128], strides = [1, 1]} : vector<25x128xf32> to vector<1x128xf32>
    %123 = arith.truncf %122 : vector<1x128xf32> to vector<1x128xbf16>
    %c15 = arith.constant 15 : index
    %c0_70 = arith.constant 0 : index
    %c0_71 = arith.constant 0 : index
    %124 = vector.load %arg7[%c15, %c0_70, %c0_71] : memref<25x128x128xbf16, #tpu.memory_space<vmem>>, vector<1x128x128xbf16>
    %125 = vector.shape_cast %124 : vector<1x128x128xbf16> to vector<128x128xbf16>
    %cst_72 = arith.constant dense<0.000000e+00> : vector<1x128xf32>
    %126 = tpu.matmul %123, %125, %cst_72 {dimension_numbers = #tpu.dot_dimension_numbers<[1], [0], [0], [1], [0, 0, 1, 1], [], []>} : vector<1x128xbf16>, vector<128x128xbf16>, vector<1x128xf32> -> vector<1x128xf32>
    %127 = arith.addf %121, %126 : vector<1x128xf32>
    %128 = vector.extract_strided_slice %30 {offsets = [16, 0], sizes = [1, 128], strides = [1, 1]} : vector<25x128xf32> to vector<1x128xf32>
    %129 = arith.truncf %128 : vector<1x128xf32> to vector<1x128xbf16>
    %c16 = arith.constant 16 : index
    %c0_73 = arith.constant 0 : index
    %c0_74 = arith.constant 0 : index
    %130 = vector.load %arg7[%c16, %c0_73, %c0_74] : memref<25x128x128xbf16, #tpu.memory_space<vmem>>, vector<1x128x128xbf16>
    %131 = vector.shape_cast %130 : vector<1x128x128xbf16> to vector<128x128xbf16>
    %cst_75 = arith.constant dense<0.000000e+00> : vector<1x128xf32>
    %132 = tpu.matmul %129, %131, %cst_75 {dimension_numbers = #tpu.dot_dimension_numbers<[1], [0], [0], [1], [0, 0, 1, 1], [], []>} : vector<1x128xbf16>, vector<128x128xbf16>, vector<1x128xf32> -> vector<1x128xf32>
    %133 = arith.addf %127, %132 : vector<1x128xf32>
    %134 = vector.extract_strided_slice %30 {offsets = [17, 0], sizes = [1, 128], strides = [1, 1]} : vector<25x128xf32> to vector<1x128xf32>
    %135 = arith.truncf %134 : vector<1x128xf32> to vector<1x128xbf16>
    %c17 = arith.constant 17 : index
    %c0_76 = arith.constant 0 : index
    %c0_77 = arith.constant 0 : index
    %136 = vector.load %arg7[%c17, %c0_76, %c0_77] : memref<25x128x128xbf16, #tpu.memory_space<vmem>>, vector<1x128x128xbf16>
    %137 = vector.shape_cast %136 : vector<1x128x128xbf16> to vector<128x128xbf16>
    %cst_78 = arith.constant dense<0.000000e+00> : vector<1x128xf32>
    %138 = tpu.matmul %135, %137, %cst_78 {dimension_numbers = #tpu.dot_dimension_numbers<[1], [0], [0], [1], [0, 0, 1, 1], [], []>} : vector<1x128xbf16>, vector<128x128xbf16>, vector<1x128xf32> -> vector<1x128xf32>
    %139 = arith.addf %133, %138 : vector<1x128xf32>
    %140 = vector.extract_strided_slice %30 {offsets = [18, 0], sizes = [1, 128], strides = [1, 1]} : vector<25x128xf32> to vector<1x128xf32>
    %141 = arith.truncf %140 : vector<1x128xf32> to vector<1x128xbf16>
    %c18 = arith.constant 18 : index
    %c0_79 = arith.constant 0 : index
    %c0_80 = arith.constant 0 : index
    %142 = vector.load %arg7[%c18, %c0_79, %c0_80] : memref<25x128x128xbf16, #tpu.memory_space<vmem>>, vector<1x128x128xbf16>
    %143 = vector.shape_cast %142 : vector<1x128x128xbf16> to vector<128x128xbf16>
    %cst_81 = arith.constant dense<0.000000e+00> : vector<1x128xf32>
    %144 = tpu.matmul %141, %143, %cst_81 {dimension_numbers = #tpu.dot_dimension_numbers<[1], [0], [0], [1], [0, 0, 1, 1], [], []>} : vector<1x128xbf16>, vector<128x128xbf16>, vector<1x128xf32> -> vector<1x128xf32>
    %145 = arith.addf %139, %144 : vector<1x128xf32>
    %146 = vector.extract_strided_slice %30 {offsets = [19, 0], sizes = [1, 128], strides = [1, 1]} : vector<25x128xf32> to vector<1x128xf32>
    %147 = arith.truncf %146 : vector<1x128xf32> to vector<1x128xbf16>
    %c19 = arith.constant 19 : index
    %c0_82 = arith.constant 0 : index
    %c0_83 = arith.constant 0 : index
    %148 = vector.load %arg7[%c19, %c0_82, %c0_83] : memref<25x128x128xbf16, #tpu.memory_space<vmem>>, vector<1x128x128xbf16>
    %149 = vector.shape_cast %148 : vector<1x128x128xbf16> to vector<128x128xbf16>
    %cst_84 = arith.constant dense<0.000000e+00> : vector<1x128xf32>
    %150 = tpu.matmul %147, %149, %cst_84 {dimension_numbers = #tpu.dot_dimension_numbers<[1], [0], [0], [1], [0, 0, 1, 1], [], []>} : vector<1x128xbf16>, vector<128x128xbf16>, vector<1x128xf32> -> vector<1x128xf32>
    %151 = arith.addf %145, %150 : vector<1x128xf32>
    %152 = vector.extract_strided_slice %30 {offsets = [20, 0], sizes = [1, 128], strides = [1, 1]} : vector<25x128xf32> to vector<1x128xf32>
    %153 = arith.truncf %152 : vector<1x128xf32> to vector<1x128xbf16>
    %c20 = arith.constant 20 : index
    %c0_85 = arith.constant 0 : index
    %c0_86 = arith.constant 0 : index
    %154 = vector.load %arg7[%c20, %c0_85, %c0_86] : memref<25x128x128xbf16, #tpu.memory_space<vmem>>, vector<1x128x128xbf16>
    %155 = vector.shape_cast %154 : vector<1x128x128xbf16> to vector<128x128xbf16>
    %cst_87 = arith.constant dense<0.000000e+00> : vector<1x128xf32>
    %156 = tpu.matmul %153, %155, %cst_87 {dimension_numbers = #tpu.dot_dimension_numbers<[1], [0], [0], [1], [0, 0, 1, 1], [], []>} : vector<1x128xbf16>, vector<128x128xbf16>, vector<1x128xf32> -> vector<1x128xf32>
    %157 = arith.addf %151, %156 : vector<1x128xf32>
    %158 = vector.extract_strided_slice %30 {offsets = [21, 0], sizes = [1, 128], strides = [1, 1]} : vector<25x128xf32> to vector<1x128xf32>
    %159 = arith.truncf %158 : vector<1x128xf32> to vector<1x128xbf16>
    %c21 = arith.constant 21 : index
    %c0_88 = arith.constant 0 : index
    %c0_89 = arith.constant 0 : index
    %160 = vector.load %arg7[%c21, %c0_88, %c0_89] : memref<25x128x128xbf16, #tpu.memory_space<vmem>>, vector<1x128x128xbf16>
    %161 = vector.shape_cast %160 : vector<1x128x128xbf16> to vector<128x128xbf16>
    %cst_90 = arith.constant dense<0.000000e+00> : vector<1x128xf32>
    %162 = tpu.matmul %159, %161, %cst_90 {dimension_numbers = #tpu.dot_dimension_numbers<[1], [0], [0], [1], [0, 0, 1, 1], [], []>} : vector<1x128xbf16>, vector<128x128xbf16>, vector<1x128xf32> -> vector<1x128xf32>
    %163 = arith.addf %157, %162 : vector<1x128xf32>
    %164 = vector.extract_strided_slice %30 {offsets = [22, 0], sizes = [1, 128], strides = [1, 1]} : vector<25x128xf32> to vector<1x128xf32>
    %165 = arith.truncf %164 : vector<1x128xf32> to vector<1x128xbf16>
    %c22 = arith.constant 22 : index
    %c0_91 = arith.constant 0 : index
    %c0_92 = arith.constant 0 : index
    %166 = vector.load %arg7[%c22, %c0_91, %c0_92] : memref<25x128x128xbf16, #tpu.memory_space<vmem>>, vector<1x128x128xbf16>
    %167 = vector.shape_cast %166 : vector<1x128x128xbf16> to vector<128x128xbf16>
    %cst_93 = arith.constant dense<0.000000e+00> : vector<1x128xf32>
    %168 = tpu.matmul %165, %167, %cst_93 {dimension_numbers = #tpu.dot_dimension_numbers<[1], [0], [0], [1], [0, 0, 1, 1], [], []>} : vector<1x128xbf16>, vector<128x128xbf16>, vector<1x128xf32> -> vector<1x128xf32>
    %169 = arith.addf %163, %168 : vector<1x128xf32>
    %170 = vector.extract_strided_slice %30 {offsets = [23, 0], sizes = [1, 128], strides = [1, 1]} : vector<25x128xf32> to vector<1x128xf32>
    %171 = arith.truncf %170 : vector<1x128xf32> to vector<1x128xbf16>
    %c23 = arith.constant 23 : index
    %c0_94 = arith.constant 0 : index
    %c0_95 = arith.constant 0 : index
    %172 = vector.load %arg7[%c23, %c0_94, %c0_95] : memref<25x128x128xbf16, #tpu.memory_space<vmem>>, vector<1x128x128xbf16>
    %173 = vector.shape_cast %172 : vector<1x128x128xbf16> to vector<128x128xbf16>
    %cst_96 = arith.constant dense<0.000000e+00> : vector<1x128xf32>
    %174 = tpu.matmul %171, %173, %cst_96 {dimension_numbers = #tpu.dot_dimension_numbers<[1], [0], [0], [1], [0, 0, 1, 1], [], []>} : vector<1x128xbf16>, vector<128x128xbf16>, vector<1x128xf32> -> vector<1x128xf32>
    %175 = arith.addf %169, %174 : vector<1x128xf32>
    %176 = vector.extract_strided_slice %30 {offsets = [24, 0], sizes = [1, 128], strides = [1, 1]} : vector<25x128xf32> to vector<1x128xf32>
    %177 = arith.truncf %176 : vector<1x128xf32> to vector<1x128xbf16>
    %c24 = arith.constant 24 : index
    %c0_97 = arith.constant 0 : index
    %c0_98 = arith.constant 0 : index
    %178 = vector.load %arg7[%c24, %c0_97, %c0_98] : memref<25x128x128xbf16, #tpu.memory_space<vmem>>, vector<1x128x128xbf16>
    %179 = vector.shape_cast %178 : vector<1x128x128xbf16> to vector<128x128xbf16>
    %cst_99 = arith.constant dense<0.000000e+00> : vector<1x128xf32>
    %180 = tpu.matmul %177, %179, %cst_99 {dimension_numbers = #tpu.dot_dimension_numbers<[1], [0], [0], [1], [0, 0, 1, 1], [], []>} : vector<1x128xbf16>, vector<128x128xbf16>, vector<1x128xf32> -> vector<1x128xf32>
    %181 = arith.addf %175, %180 : vector<1x128xf32>
    %cst_100 = arith.constant 0.000000e+00 : f32
    %182 = vector.broadcast %cst_100 : f32 to vector<1x128xf32>
    %183 = arith.maximumf %181, %182 : vector<1x128xf32>
    %184 = arith.truncf %183 : vector<1x128xf32> to vector<1x128xbf16>
    %c0_101 = arith.constant 0 : index
    %c0_102 = arith.constant 0 : index
    %185 = vector.load %arg9[%c0_101, %c0_102] : memref<128x128xbf16, #tpu.memory_space<vmem>>, vector<128x128xbf16>
    %cst_103 = arith.constant dense<0.000000e+00> : vector<1x128xf32>
    %186 = tpu.matmul %184, %185, %cst_103 {dimension_numbers = #tpu.dot_dimension_numbers<[1], [0], [0], [1], [0, 0, 1, 1], [], []>} : vector<1x128xbf16>, vector<128x128xbf16>, vector<1x128xf32> -> vector<1x128xf32>
    %c0_104 = arith.constant 0 : index
    %c0_105 = arith.constant 0 : index
    %187 = vector.load %arg10[%c0_104, %c0_105] : memref<1x128xf32, #tpu.memory_space<vmem>>, vector<1x128xf32>
    %188 = arith.addf %186, %187 : vector<1x128xf32>
    %cst_106 = arith.constant 0.000000e+00 : f32
    %189 = vector.broadcast %cst_106 : f32 to vector<1x128xf32>
    %190 = arith.maximumf %188, %189 : vector<1x128xf32>
    %191 = arith.truncf %190 : vector<1x128xf32> to vector<1x128xbf16>
    %c0_107 = arith.constant 0 : index
    %c0_108 = arith.constant 0 : index
    %192 = vector.load %arg11[%c0_107, %c0_108] : memref<128x128xbf16, #tpu.memory_space<vmem>>, vector<128x128xbf16>
    %cst_109 = arith.constant dense<0.000000e+00> : vector<1x128xf32>
    %193 = tpu.matmul %191, %192, %cst_109 {dimension_numbers = #tpu.dot_dimension_numbers<[1], [0], [0], [1], [0, 0, 1, 1], [], []>} : vector<1x128xbf16>, vector<128x128xbf16>, vector<1x128xf32> -> vector<1x128xf32>
    %c0_110 = arith.constant 0 : index
    %c0_111 = arith.constant 0 : index
    %194 = vector.load %arg12[%c0_110, %c0_111] : memref<1x128xf32, #tpu.memory_space<vmem>>, vector<1x128xf32>
    %195 = arith.addf %193, %194 : vector<1x128xf32>
    %196 = tpu.iota {dimensions = array<i32: 1>} : vector<1x128xi32>
    %c10_i32 = arith.constant 10 : i32
    %197 = vector.broadcast %c10_i32 : i32 to vector<1x128xi32>
    %198 = arith.cmpi slt, %196, %197 : vector<1x128xi32>
    %cst_112 = arith.constant -1.000000e+30 : f32
    %199 = vector.broadcast %cst_112 : f32 to vector<1x128xf32>
    %200 = arith.select %198, %195, %199 : vector<1x128xi1>, vector<1x128xf32>
    %cst_113 = arith.constant dense<0xFF800000> : vector<1xf32>
    %201 = vector.multi_reduction <maximumf>, %200, %cst_113 [1] : vector<1x128xf32> to vector<1xf32>
    %202 = vector.shape_cast %201 : vector<1xf32> to vector<1x1xf32>
    %203 = vector.broadcast %202 : vector<1x1xf32> to vector<1x128xf32>
    %204 = arith.subf %200, %203 : vector<1x128xf32>
    %205 = math.exp %204 : vector<1x128xf32>
    %cst_114 = arith.constant dense<0.000000e+00> : vector<1xf32>
    %206 = vector.multi_reduction <add>, %205, %cst_114 [1] : vector<1x128xf32> to vector<1xf32>
    %207 = vector.shape_cast %206 : vector<1xf32> to vector<1x1xf32>
    %208 = vector.broadcast %207 : vector<1x1xf32> to vector<1x128xf32>
    %209 = arith.divf %205, %208 : vector<1x128xf32>
    %c0_115 = arith.constant 0 : index
    %c0_116 = arith.constant 0 : index
    %c0_117 = arith.constant 0 : index
    %210 = vector.load %arg13[%c0_115, %c0_116, %c0_117] : memref<1x1x128xf32, #tpu.memory_space<vmem>>, vector<1x1x128xf32>
    %211 = vector.shape_cast %210 : vector<1x1x128xf32> to vector<1x128xf32>
    %212 = vector.shape_cast %209 : vector<1x128xf32> to vector<1x1x128xf32>
    tpu.vector_store %arg13[%c0_115, %c0_116, %c0_117], %212 {strides = array<i32>} : memref<1x1x128xf32, #tpu.memory_space<vmem>>, vector<1x1x128xf32>,
    return
  }
  func.func @transform_0(%arg0: i32) -> (i32, i32, i32) {
    %c0_i32 = arith.constant 0 : i32
    %c0_i32_0 = arith.constant 0 : i32
    %c0_i32_1 = arith.constant 0 : i32
    return %arg0, %c0_i32, %c0_i32_0 : i32, i32, i32
  }
  func.func @transform_1(%arg0: i32) -> (i32, i32, i32) {
    %c0_i32 = arith.constant 0 : i32
    %c0_i32_0 = arith.constant 0 : i32
    %c0_i32_1 = arith.constant 0 : i32
    return %arg0, %c0_i32, %c0_i32_0 : i32, i32, i32
  }
  func.func @transform_2(%arg0: i32) -> (i32, i32, i32) {
    %c0_i32 = arith.constant 0 : i32
    %c0_i32_0 = arith.constant 0 : i32
    %c0_i32_1 = arith.constant 0 : i32
    return %arg0, %c0_i32, %c0_i32_0 : i32, i32, i32
  }
  func.func @transform_3(%arg0: i32) -> (i32, i32, i32) {
    %c0_i32 = arith.constant 0 : i32
    %c0_i32_0 = arith.constant 0 : i32
    %c0_i32_1 = arith.constant 0 : i32
    return %arg0, %c0_i32, %c0_i32_0 : i32, i32, i32
  }
  func.func @transform_4(%arg0: i32) -> (i32, i32) {
    %c0_i32 = arith.constant 0 : i32
    %c0_i32_0 = arith.constant 0 : i32
    %c0_i32_1 = arith.constant 0 : i32
    return %c0_i32, %c0_i32_0 : i32, i32
  }
  func.func @transform_5(%arg0: i32) -> (i32, i32) {
    %c0_i32 = arith.constant 0 : i32
    %c0_i32_0 = arith.constant 0 : i32
    %c0_i32_1 = arith.constant 0 : i32
    return %c0_i32, %c0_i32_0 : i32, i32
  }
  func.func @transform_6(%arg0: i32) -> (i32, i32, i32) {
    %c0_i32 = arith.constant 0 : i32
    %c0_i32_0 = arith.constant 0 : i32
    %c0_i32_1 = arith.constant 0 : i32
    %c0_i32_2 = arith.constant 0 : i32
    return %c0_i32, %c0_i32_0, %c0_i32_1 : i32, i32, i32
  }
  func.func @transform_7(%arg0: i32) -> (i32, i32) {
    %c0_i32 = arith.constant 0 : i32
    %c0_i32_0 = arith.constant 0 : i32
    %c0_i32_1 = arith.constant 0 : i32
    return %c0_i32, %c0_i32_0 : i32, i32
  }
  func.func @transform_8(%arg0: i32) -> (i32, i32) {
    %c0_i32 = arith.constant 0 : i32
    %c0_i32_0 = arith.constant 0 : i32
    %c0_i32_1 = arith.constant 0 : i32
    return %c0_i32, %c0_i32_0 : i32, i32
  }
  func.func @transform_9(%arg0: i32) -> (i32, i32) {
    %c0_i32 = arith.constant 0 : i32
    %c0_i32_0 = arith.constant 0 : i32
    %c0_i32_1 = arith.constant 0 : i32
    return %c0_i32, %c0_i32_0 : i32, i32
  }
  func.func @transform_10(%arg0: i32) -> (i32, i32) {
    %c0_i32 = arith.constant 0 : i32
    %c0_i32_0 = arith.constant 0 : i32
    %c0_i32_1 = arith.constant 0 : i32
    return %c0_i32, %c0_i32_0 : i32, i32
  }
  func.func @transform_11(%arg0: i32) -> (i32, i32) {
    %c0_i32 = arith.constant 0 : i32
    %c0_i32_0 = arith.constant 0 : i32
    %c0_i32_1 = arith.constant 0 : i32
    return %c0_i32, %c0_i32_0 : i32, i32
  }
  func.func @transform_12(%arg0: i32) -> (i32, i32, i32) {
    %c0_i32 = arith.constant 0 : i32
    %c0_i32_0 = arith.constant 0 : i32
    %c0_i32_1 = arith.constant 0 : i32
    return %arg0, %c0_i32, %c0_i32_0 : i32, i32, i32
  }
}

</mosaic_0001>

<llo_original>
// kernel: _lambda_.2
$region0: #{_lambda_.2}
  #allocation0 [shape = 'u32[]', space=smem, size = 0x4, offset = 0x4, fixed_abs, tag = 'smem constant byte address 0x4 - core index']
  #allocation1 [shape = 'u32[144,128]{1,0:T(1,128)}', space=vmem, size = 0x12000, scoped, tag = 'internal scratch']
  %s0 = inlined_call_operand.vmem [shape: bf16[2,196,128], index: 0, kind: input, shape index: {}]
  %s1 = inlined_call_operand.vmem [shape: bf16[2,196,128], index: 1, kind: input, shape index: {}]
  %s2 = inlined_call_operand.vmem [shape: bf16[2,196,128], index: 2, kind: input, shape index: {}]
  %s3 = inlined_call_operand.vmem [shape: bf16[2,196,128], index: 3, kind: input, shape index: {}]
  %s4 = inlined_call_operand.vmem [shape: bf16[128,128], index: 4, kind: input, shape index: {}]
  %s5 = inlined_call_operand.vmem [shape: f32[1,128], index: 5, kind: input, shape index: {}]
  %s6 = inlined_call_operand.vmem [shape: bf16[2,196,128], index: 6, kind: output, shape index: {}]
  %s7 = sld [smem:[#allocation0]]
  $region57: #{_lambda_.2} parent=0
    _
  %s9 = ssub.s32 1, %s7
  %s10 = scalar_select 0, %s9, %s7
  loop: start=0, step=1, limit=4
  $region2: #{_lambda_.2} parent=0 // loop_pre_header
    _
  $region3: #{_lambda_.2} parent=0 // loop_header
    %s12 = sphi 0, %s16
    %p13 = scmp.ge.s32.totalorder %s12, 4
    %s22 = sphi 0, %s24
    %s25 = sphi 0, %s22
    %s26 = sphi 0, %s25
    %s42 = sphi 0, %s26
    %s48 = sphi 0, %s50
    %s51 = sphi 0, %s48
    %s52 = sphi 0, %s51
    %s68 = sphi 0, %s52
    %s74 = sphi 0, %s76
    %s77 = sphi 0, %s74
    %s78 = sphi 0, %s77
    %s94 = sphi 0, %s78
    %s100 = sphi 0, %s102
    %s103 = sphi 0, %s100
    %s104 = sphi 0, %s103
    %s120 = sphi 0, %s104
    %s124 = sphi 0, %s124
    %s126 = sphi 0, %s124
    %s127 = sphi 0, %s126
    %s141 = sphi 0, %s127
    %s145 = sphi 0, %s145
    %s147 = sphi 0, %s145
    %s148 = sphi 0, %s147
    %s162 = sphi 0, %s148
    %s168 = sphi 0, %s170
    %s171 = sphi 0, %s168
    %s172 = sphi 0, %s171
    %s188 = sphi 0, %s172
  $region4: #{_lambda_.2} parent=0 // loop_header_branch
    %15 = sbr.rel (%p13) target = $region8
  $region5: #{_lambda_.2} parent=0 // loop_body
    %s17 = ssub.s32 %s12, 1
    %s18 = ssub.s32 %s12, 2
    %s19 = sadd.s32 %s12, 1
    %s20 = ssub.s32 %s12, %s19
    %p21 = scmp.eq.s32.totalorder %s20, 0
    %s23 = sadd.s32 %s22, 1
    %s24 = scalar_select %p21, %s22, %s23
    %p27 = pneg %p21
    %p28 = scmp.eq.s32.totalorder %s12, 1
    %p29 = por %p27, %p28
    %p30 = scmp.ne.s32.totalorder %s22, %s25
    %p31 = scmp.eq.s32.totalorder %s12, 0
    %p32 = por %p30, %p31
    %p33 = scmp.ne.s32.totalorder %s22, %s25
    %p34 = scmp.eq.s32.totalorder %s17, 1
    %p35 = por %p33, %p34
    %p36 = scmp.ne.s32.totalorder %s25, %s26
    %p37 = scmp.eq.s32.totalorder %s17, 0
    %p38 = por %p36, %p37
    %p39 = scmp.ne.s32.totalorder %s25, %s26
    %p40 = scmp.eq.s32.totalorder %s18, 1
    %p41 = por %p39, %p40
    %p43 = scmp.ne.s32.totalorder %s26, %s42
    %p44 = scmp.eq.s32.totalorder %s18, 0
    %p45 = por %p43, %p44
    %s46 = ssub.s32 %s12, %s19
    %p47 = scmp.eq.s32.totalorder %s46, 0
    %s49 = sadd.s32 %s48, 1
    %s50 = scalar_select %p47, %s48, %s49
    %p53 = pneg %p47
    %p54 = scmp.eq.s32.totalorder %s12, 1
    %p55 = por %p53, %p54
    %p56 = scmp.ne.s32.totalorder %s48, %s51
    %p57 = scmp.eq.s32.totalorder %s12, 0
    %p58 = por %p56, %p57
    %p59 = scmp.ne.s32.totalorder %s48, %s51
    %p60 = scmp.eq.s32.totalorder %s17, 1
    %p61 = por %p59, %p60
    %p62 = scmp.ne.s32.totalorder %s51, %s52
    %p63 = scmp.eq.s32.totalorder %s17, 0
    %p64 = por %p62, %p63
    %p65 = scmp.ne.s32.totalorder %s51, %s52
    %p66 = scmp.eq.s32.totalorder %s18, 1
    %p67 = por %p65, %p66
    %p69 = scmp.ne.s32.totalorder %s52, %s68
    %p70 = scmp.eq.s32.totalorder %s18, 0
    %p71 = por %p69, %p70
    %s72 = ssub.s32 %s12, %s19
    %p73 = scmp.eq.s32.totalorder %s72, 0
    %s75 = sadd.s32 %s74, 1
    %s76 = scalar_select %p73, %s74, %s75
    %p79 = pneg %p73
    %p80 = scmp.eq.s32.totalorder %s12, 1
    %p81 = por %p79, %p80
    %p82 = scmp.ne.s32.totalorder %s74, %s77
    %p83 = scmp.eq.s32.totalorder %s12, 0
    %p84 = por %p82, %p83
    %p85 = scmp.ne.s32.totalorder %s74, %s77
    %p86 = scmp.eq.s32.totalorder %s17, 1
    %p87 = por %p85, %p86
    %p88 = scmp.ne.s32.totalorder %s77, %s78
    %p89 = scmp.eq.s32.totalorder %s17, 0
    %p90 = por %p88, %p89
    %p91 = scmp.ne.s32.totalorder %s77, %s78
    %p92 = scmp.eq.s32.totalorder %s18, 1
    %p93 = por %p91, %p92
    %p95 = scmp.ne.s32.totalorder %s78, %s94
    %p96 = scmp.eq.s32.totalorder %s18, 0
    %p97 = por %p95, %p96
    %s98 = ssub.s32 %s12, %s19
    %p99 = scmp.eq.s32.totalorder %s98, 0
    %s101 = sadd.s32 %s100, 1
    %s102 = scalar_select %p99, %s100, %s101
    %p105 = pneg %p99
    %p106 = scmp.eq.s32.totalorder %s12, 1
    %p107 = por %p105, %p106
    %p108 = scmp.ne.s32.totalorder %s100, %s103
    %p109 = scmp.eq.s32.totalorder %s12, 0
    %p110 = por %p108, %p109
    %p111 = scmp.ne.s32.totalorder %s100, %s103
    %p112 = scmp.eq.s32.totalorder %s17, 1
    %p113 = por %p111, %p112
    %p114 = scmp.ne.s32.totalorder %s103, %s104
    %p115 = scmp.eq.s32.totalorder %s17, 0
    %p116 = por %p114, %p115
    %p117 = scmp.ne.s32.totalorder %s103, %s104
    %p118 = scmp.eq.s32.totalorder %s18, 1
    %p119 = por %p117, %p118
    %p121 = scmp.ne.s32.totalorder %s104, %s120
    %p122 = scmp.eq.s32.totalorder %s18, 0
    %p123 = por %p121, %p122
    %s125 = sadd.s32 %s124, 1
    %p128 = scmp.eq.s32.totalorder %s12, 1
    %p129 = scmp.ne.s32.totalorder %s124, %s126
    %p130 = scmp.eq.s32.totalorder %s12, 0
    %p131 = por %p129, %p130
    %p132 = scmp.ne.s32.totalorder %s124, %s126
    %p133 = scmp.eq.s32.totalorder %s17, 1
    %p134 = por %p132, %p133
    %p135 = scmp.ne.s32.totalorder %s126, %s127
    %p136 = scmp.eq.s32.totalorder %s17, 0
    %p137 = por %p135, %p136
    %p138 = scmp.ne.s32.totalorder %s126, %s127
    %p139 = scmp.eq.s32.totalorder %s18, 1
    %p140 = por %p138, %p139
    %p142 = scmp.ne.s32.totalorder %s127, %s141
    %p143 = scmp.eq.s32.totalorder %s18, 0
    %p144 = por %p142, %p143
    %s146 = sadd.s32 %s145, 1
    %p149 = scmp.eq.s32.totalorder %s12, 1
    %p150 = scmp.ne.s32.totalorder %s145, %s147
    %p151 = scmp.eq.s32.totalorder %s12, 0
    %p152 = por %p150, %p151
    %p153 = scmp.ne.s32.totalorder %s145, %s147
    %p154 = scmp.eq.s32.totalorder %s17, 1
    %p155 = por %p153, %p154
    %p156 = scmp.ne.s32.totalorder %s147, %s148
    %p157 = scmp.eq.s32.totalorder %s17, 0
    %p158 = por %p156, %p157
    %p159 = scmp.ne.s32.totalorder %s147, %s148
    %p160 = scmp.eq.s32.totalorder %s18, 1
    %p161 = por %p159, %p160
    %p163 = scmp.ne.s32.totalorder %s148, %s162
    %p164 = scmp.eq.s32.totalorder %s18, 0
    %p165 = por %p163, %p164
    %s166 = ssub.s32 %s12, %s19
    %p167 = scmp.eq.s32.totalorder %s166, 0
    %s169 = sadd.s32 %s168, 1
    %s170 = scalar_select %p167, %s168, %s169
    %p173 = pneg %p167
    %p174 = scmp.eq.s32.totalorder %s12, 1
    %p175 = por %p173, %p174
    %p176 = scmp.ne.s32.totalorder %s168, %s171
    %p177 = scmp.eq.s32.totalorder %s12, 0
    %p178 = por %p176, %p177
    %p179 = scmp.ne.s32.totalorder %s168, %s171
    %p180 = scmp.eq.s32.totalorder %s17, 1
    %p181 = por %p179, %p180
    %p182 = scmp.ne.s32.totalorder %s171, %s172
    %p183 = scmp.eq.s32.totalorder %s17, 0
    %p184 = por %p182, %p183
    %p185 = scmp.ne.s32.totalorder %s171, %s172
    %p186 = scmp.eq.s32.totalorder %s18, 1
    %p187 = por %p185, %p186
    %p189 = scmp.ne.s32.totalorder %s172, %s188
    %p190 = scmp.eq.s32.totalorder %s18, 0
    %p191 = por %p189, %p190
    %p192 = scmp.le.s32.totalorder 1, %s12
    %p193 = scmp.lt.s32.totalorder %s12, 3
    %p194 = pnand %p192, %p193
    %p195 = pneg %p194
    // Predicated region
    $region9: #{_lambda_.2} parent=5 // pred_check
      _
    $region10: #{_lambda_.2} parent=5 // pred_check_branch
      %197 = sbr.rel (%p194) target = $region12
    $region11: #{_lambda_.2} parent=5 // pred_region
      %s198 = ssub.s32 %s12, 1
      // Predicated region
      $region13: #{_lambda_.2} parent=11 // pred_check
        %p199 = pneg %p137
      $region14: #{_lambda_.2} parent=11 // pred_check_branch
        %201 = sbr.rel (%p199) target = $region16
      $region15: #{_lambda_.2} parent=11 // pred_region
        _
      $region16: #{_lambda_.2} parent=11 // pred_fallthru
        _
      // Predicated region
      $region17: #{_lambda_.2} parent=11 // pred_check
        %p202 = pneg %p158
      $region18: #{_lambda_.2} parent=11 // pred_check_branch
        %204 = sbr.rel (%p202) target = $region20
      $region19: #{_lambda_.2} parent=11 // pred_region
        _
      $region20: #{_lambda_.2} parent=11 // pred_fallthru
        _
    $region12: #{_lambda_.2} parent=5 // pred_fallthru
      _
    %p205 = scmp.lt.s32.totalorder %s12, 2
    // Predicated region
    $region21: #{_lambda_.2} parent=5 // pred_check
      %p206 = pneg %p205
    $region22: #{_lambda_.2} parent=5 // pred_check_branch
      %208 = sbr.rel (%p206) target = $region24
    $region23: #{_lambda_.2} parent=5 // pred_region
      // Predicated region
      $region25: #{_lambda_.2} parent=23 // pred_check
        %p209 = pneg %p32
      $region26: #{_lambda_.2} parent=23 // pred_check_branch
        %211 = sbr.rel (%p209) target = $region28
      $region27: #{_lambda_.2} parent=23 // pred_region
        %p212 = scmp.lt.s32.totalorder %s12, 1
        %s213 = scalar_select %p212, %s12, 1
        %s214 = smul.addr %s213, 25
        %s215 = smul.addr %s214, 4
        %s216 = scalar_lea.vmem %s0, %s215
      $region28: #{_lambda_.2} parent=23 // pred_fallthru
        _
      // Predicated region
      $region29: #{_lambda_.2} parent=23 // pred_check
        %p217 = pneg %p58
      $region30: #{_lambda_.2} parent=23 // pred_check_branch
        %219 = sbr.rel (%p217) target = $region32
      $region31: #{_lambda_.2} parent=23 // pred_region
        %p220 = scmp.lt.s32.totalorder %s12, 1
        %s221 = scalar_select %p220, %s12, 1
        %s222 = smul.addr %s221, 25
        %s223 = smul.addr %s222, 4
        %s224 = scalar_lea.vmem %s1, %s223
      $region32: #{_lambda_.2} parent=23 // pred_fallthru
        _
      // Predicated region
      $region33: #{_lambda_.2} parent=23 // pred_check
        %p225 = pneg %p84
      $region34: #{_lambda_.2} parent=23 // pred_check_branch
        %227 = sbr.rel (%p225) target = $region36
      $region35: #{_lambda_.2} parent=23 // pred_region
        %p228 = scmp.lt.s32.totalorder %s12, 1
        %s229 = scalar_select %p228, %s12, 1
        %s230 = smul.addr %s229, 25
        %s231 = smul.addr %s230, 4
        %s232 = scalar_lea.vmem %s2, %s231
      $region36: #{_lambda_.2} parent=23 // pred_fallthru
        _
      // Predicated region
      $region37: #{_lambda_.2} parent=23 // pred_check
        %p233 = pneg %p110
      $region38: #{_lambda_.2} parent=23 // pred_check_branch
        %235 = sbr.rel (%p233) target = $region40
      $region39: #{_lambda_.2} parent=23 // pred_region
        %p236 = scmp.lt.s32.totalorder %s12, 1
        %s237 = scalar_select %p236, %s12, 1
        %s238 = smul.addr %s237, 25
        %s239 = smul.addr %s238, 4
        %s240 = scalar_lea.vmem %s3, %s239
      $region40: #{_lambda_.2} parent=23 // pred_fallthru
        _
    $region24: #{_lambda_.2} parent=5 // pred_fallthru
      _
    %p241 = scmp.le.s32.totalorder 1, %s12
    %p242 = scmp.lt.s32.totalorder %s12, 3
    %p243 = pnand %p241, %p242
    %p244 = pneg %p243
    // Predicated region
    $region41: #{_lambda_.2} parent=5 // pred_check
      _
    $region42: #{_lambda_.2} parent=5 // pred_check_branch
      %246 = sbr.rel (%p243) target = $region44
    $region43: #{_lambda_.2} parent=5 // pred_region
      %s247 = ssub.s32 %s12, 1
      %p248 = scmp.lt.s32.totalorder %s17, 1
      %s249 = scalar_select %p248, %s17, 1
      %s250 = smul.addr %s249, 25
      %s251 = smul.addr %s250, 4
      %s252 = scalar_lea.vmem %s0, %s251
      %p253 = pneg %p38
      %p254 = pneg %p35
      %p255 = scmp.lt.s32.totalorder %s17, 1
      %s256 = scalar_select %p255, %s17, 1
      %s257 = smul.addr %s256, 25
      %s258 = smul.addr %s257, 4
      %s259 = scalar_lea.vmem %s1, %s258
      %p260 = pneg %p64
      %p261 = pneg %p61
      %p262 = scmp.lt.s32.totalorder %s17, 1
      %s263 = scalar_select %p262, %s17, 1
      %s264 = smul.addr %s263, 25
      %s265 = smul.addr %s264, 4
      %s266 = scalar_lea.vmem %s2, %s265
      %p267 = pneg %p90
      %p268 = pneg %p87
      %p269 = scmp.lt.s32.totalorder %s17, 1
      %s270 = scalar_select %p269, %s17, 1
      %s271 = smul.addr %s270, 25
      %s272 = smul.addr %s271, 4
      %s273 = scalar_lea.vmem %s3, %s272
      %p274 = pneg %p116
      %p275 = pneg %p113
      %p276 = pneg %p137
      %p277 = pneg %p134
      %p278 = pneg %p158
      %p279 = pneg %p155
      %p280 = pneg %p184
      %p281 = pneg %p181
      %p282 = scmp.lt.s32.totalorder %s17, 1
      %s283 = scalar_select %p282, %s17, 1
      %s284 = smul.addr %s283, 25
      %s285 = smul.addr %s284, 4
      %s286 = scalar_lea.vmem %s6, %s285
      %p287 = scmp.lt.s32.totalorder %s17, 1
      %s288 = scalar_select %p287, %s17, 1
      %s289 = smul.addr %s288, 25
      %s290 = smul.addr %s289, 4
      %s291 = scalar_lea.vmem %s0, %s290
      %p292 = scmp.lt.s32.totalorder %s17, 1
      %s293 = scalar_select %p292, %s17, 1
      %s294 = smul.addr %s293, 25
      %s295 = smul.addr %s294, 4
      %s296 = scalar_lea.vmem %s1, %s295
      %p297 = scmp.lt.s32.totalorder %s17, 1
      %s298 = scalar_select %p297, %s17, 1
      %s299 = smul.addr %s298, 25
      %s300 = smul.addr %s299, 4
      %s301 = scalar_lea.vmem %s2, %s300
      %p302 = scmp.lt.s32.totalorder %s17, 1
      %s303 = scalar_select %p302, %s17, 1
      %s304 = smul.addr %s303, 25
      %s305 = smul.addr %s304, 4
      %s306 = scalar_lea.vmem %s3, %s305
      %p307 = scmp.lt.s32.totalorder %s17, 1
      %s308 = scalar_select %p307, %s17, 1
      %s309 = smul.addr %s308, 25
      %s310 = smul.addr %s309, 4
      %s311 = scalar_lea.vmem %s6, %s310
      %v313 = vld [vmem:[%s4] sm:$0xf]
      %v314 = vld [vmem:[%s4 + $0x4] sm:$0xf]
      %v315 = vld [vmem:[%s4 + $0x8] sm:$0xf]
      %v316 = vld [vmem:[%s4 + $0xc] sm:$0xf]
      %v317 = vld [vmem:[%s4 + $0x10] sm:$0xf]
      %v318 = vld [vmem:[%s4 + $0x14] sm:$0xf]
      %v319 = vld [vmem:[%s4 + $0x18] sm:$0xf]
      %v320 = vld [vmem:[%s4 + $0x1c] sm:$0xf]
      %v321 = vld [vmem:[%s4 + $0x20] sm:$0xf]
      %v322 = vld [vmem:[%s4 + $0x24] sm:$0xf]
      %v323 = vld [vmem:[%s4 + $0x28] sm:$0xf]
      %v324 = vld [vmem:[%s4 + $0x2c] sm:$0xf]
      %v325 = vld [vmem:[%s4 + $0x30] sm:$0xf]
      %v326 = vld [vmem:[%s4 + $0x34] sm:$0xf]
      %v327 = vld [vmem:[%s4 + $0x38] sm:$0xf]
      %v328 = vld [vmem:[%s4 + $0x3c] sm:$0xf]
      %v329 = vld [vmem:[%s5] sm:$0x1]
      %v331 = vlaneseq
      %v332 = vshrl.u32 %v331, 7
      %v333 = vsub.s32 0, %v332
      %v334 = vrot.slane %v329, %v333
      %v336 = vld [vmem:[%s291] sm:$0xf]
      %v337 = vld [vmem:[%s291 + $0x4] sm:$0xf]
      %v338 = vld [vmem:[%s291 + $0x8] sm:$0xf]
      %v339 = vld [vmem:[%s291 + $0xc] sm:$0xf]
      %v340 = vld [vmem:[%s291 + $0x10] sm:$0xf]
      %v341 = vld [vmem:[%s291 + $0x14] sm:$0xf]
      %v342 = vld [vmem:[%s291 + $0x18] sm:$0xf]
      %v343 = vld [vmem:[%s291 + $0x1c] sm:$0xf]
      %v344 = vld [vmem:[%s291 + $0x20] sm:$0xf]
      %v345 = vld [vmem:[%s291 + $0x24] sm:$0xf]
      %v346 = vld [vmem:[%s291 + $0x28] sm:$0xf]
      %v347 = vld [vmem:[%s291 + $0x2c] sm:$0xf]
      %v348 = vld [vmem:[%s291 + $0x30] sm:$0xf]
      %v349 = vld [vmem:[%s291 + $0x34] sm:$0xf]
      %v350 = vld [vmem:[%s291 + $0x38] sm:$0xf]
      %v351 = vld [vmem:[%s291 + $0x3c] sm:$0xf]
      %v352 = vld [vmem:[%s291 + $0x40] sm:$0xf]
      %v353 = vld [vmem:[%s291 + $0x44] sm:$0xf]
      %v354 = vld [vmem:[%s291 + $0x48] sm:$0xf]
      %v355 = vld [vmem:[%s291 + $0x4c] sm:$0xf]
      %v356 = vld [vmem:[%s291 + $0x50] sm:$0xf]
      %v357 = vld [vmem:[%s291 + $0x54] sm:$0xf]
      %v358 = vld [vmem:[%s291 + $0x58] sm:$0xf]
      %v359 = vld [vmem:[%s291 + $0x5c] sm:$0xf]
      %v360 = vld [vmem:[%s291 + $0x60] sm:$0x3]
      %v386 = vunpack.c.l.b16 %v336
      %v387 = vunpack.c.l.b16 %v337
      %v388 = vunpack.c.l.b16 %v338
      %v389 = vunpack.c.l.b16 %v339
      %v390 = vunpack.c.l.b16 %v340
      %v391 = vunpack.c.l.b16 %v341
      %v392 = vunpack.c.l.b16 %v342
      %v393 = vunpack.c.l.b16 %v343
      %v394 = vunpack.c.l.b16 %v344
      %v395 = vunpack.c.l.b16 %v345
      %v396 = vunpack.c.l.b16 %v346
      %v397 = vunpack.c.l.b16 %v347
      %v398 = vunpack.c.l.b16 %v348
      %v399 = vunpack.c.l.b16 %v349
      %v400 = vunpack.c.l.b16 %v350
      %v401 = vunpack.c.l.b16 %v351
      %v402 = vunpack.c.l.b16 %v352
      %v403 = vunpack.c.l.b16 %v353
      %v404 = vunpack.c.l.b16 %v354
      %v405 = vunpack.c.l.b16 %v355
      %v406 = vunpack.c.l.b16 %v356
      %v407 = vunpack.c.l.b16 %v357
      %v408 = vunpack.c.l.b16 %v358
      %v409 = vunpack.c.l.b16 %v359
      %v410 = vunpack.c.l.b16 %v360
      %v411 = vpack.c.b16 %v387, %v386
      %v412 = vpack.c.b16 %v389, %v388
      %v413 = vpack.c.b16 %v391, %v390
      %v414 = vpack.c.b16 %v393, %v392
      %v415 = vpack.c.b16 %v395, %v394
      %v416 = vpack.c.b16 %v397, %v396
      %v417 = vpack.c.b16 %v399, %v398
      %v418 = vpack.c.b16 %v401, %v400
      %v419 = vpack.c.b16 %v403, %v402
      %v420 = vpack.c.b16 %v405, %v404
      %v421 = vpack.c.b16 %v407, %v406
      %v422 = vpack.c.b16 %v409, %v408
      %v423 = vpack.c.b16 %v410, %v410
      %v453 = vunpack.c.l.b16 %v313
      %v454 = vunpack.c.l.b16 %v314
      %v455 = vunpack.c.l.b16 %v315
      %v456 = vunpack.c.l.b16 %v316
      %v457 = vunpack.c.l.b16 %v317
      %v458 = vunpack.c.l.b16 %v318
      %v459 = vunpack.c.l.b16 %v319
      %v460 = vunpack.c.l.b16 %v320
      %v461 = vunpack.c.l.b16 %v321
      %v462 = vunpack.c.l.b16 %v322
      %v463 = vunpack.c.l.b16 %v323
      %v464 = vunpack.c.l.b16 %v324
      %v465 = vunpack.c.l.b16 %v325
      %v466 = vunpack.c.l.b16 %v326
      %v467 = vunpack.c.l.b16 %v327
      %v468 = vunpack.c.l.b16 %v328
      %v469 = vpack.c.b16 %v454, %v453
      %v470 = vpack.c.b16 %v456, %v455
      %v471 = vpack.c.b16 %v458, %v457
      %v472 = vpack.c.b16 %v460, %v459
      %v473 = vpack.c.b16 %v462, %v461
      %v474 = vpack.c.b16 %v464, %v463
      %v475 = vpack.c.b16 %v466, %v465
      %v476 = vpack.c.b16 %v468, %v467
      %485 = vmatprep.subr.bf16.mxu0 0
      %486 = vmatpush1.bf16.msra.mxu0 %v476
      %487 = vmatprep.subr.bf16.mxu0 0
      %488 = vmatpush1.bf16.msra.mxu0 %v475
      %489 = vmatprep.subr.bf16.mxu0 0
      %490 = vmatpush1.bf16.msra.mxu0 %v474
      %491 = vmatprep.subr.bf16.mxu0 0
      %492 = vmatpush1.bf16.msra.mxu0 %v473
      %493 = vmatprep.subr.bf16.mxu0 0
      %494 = vmatpush1.bf16.msra.mxu0 %v472
      %495 = vmatprep.subr.bf16.mxu0 0
      %496 = vmatpush1.bf16.msra.mxu0 %v471
      %497 = vmatprep.subr.bf16.mxu0 0
      %498 = vmatpush1.bf16.msra.mxu0 %v470
      %499 = vmatprep.subr.bf16.mxu0 0
      %500 = vmatpush1.bf16.msra.mxu0 %v469
      %501 = vmatprep.subr.bf16.mxu0 0
      %502 = vmatpush2.bf16.msra.mxu0 0
      %503 = vmatprep.subr.bf16.mxu0 0
      %504 = vmatpush2.bf16.msra.mxu0 0
      %505 = vmatprep.subr.bf16.mxu0 0
      %506 = vmatpush2.bf16.msra.mxu0 0
      %507 = vmatprep.subr.bf16.mxu0 0
      %508 = vmatpush2.bf16.msra.mxu0 0
      %509 = vmatprep.subr.bf16.mxu0 0
      %510 = vmatpush2.bf16.msra.mxu0 0
      %511 = vmatprep.subr.bf16.mxu0 0
      %512 = vmatpush2.bf16.msra.mxu0 0
      %513 = vmatprep.subr.bf16.mxu0 0
      %514 = vmatpush2.bf16.msra.mxu0 0
      %515 = vmatprep.subr.bf16.mxu0 0
      %516 = vmatpush2.bf16.msra.mxu0 0
      %517 = vmatprep.mubr.bf16.mxu0 0
      %518 = vmatmul.mubr.bf16.gmra.mxu0 %v411
      %v519 = vpop.f32.mrf.mxu0
      %v520 = vadd.f32 %v334, %v519
      %v521 = vpop.f32.mrf.mxu0
      %v522 = vpop.f32.mrf.mxu0
      %v523 = vadd.f32 %v334, %v522
      %v524 = vpop.f32.mrf.mxu0
      %525 = vmatprep.mubr.bf16.mxu0 0
      %526 = vmatmul.mubr.bf16.gmra.mxu0 %v412
      %v527 = vpop.f32.mrf.mxu0
      %v528 = vadd.f32 %v334, %v527
      %v529 = vpop.f32.mrf.mxu0
      %v530 = vpop.f32.mrf.mxu0
      %v531 = vadd.f32 %v334, %v530
      %v532 = vpop.f32.mrf.mxu0
      %533 = vmatprep.mubr.bf16.mxu0 0
      %534 = vmatmul.mubr.bf16.gmra.mxu0 %v413
      %v535 = vpop.f32.mrf.mxu0
      %v536 = vadd.f32 %v334, %v535
      %v537 = vpop.f32.mrf.mxu0
      %v538 = vpop.f32.mrf.mxu0
      %v539 = vadd.f32 %v334, %v538
      %v540 = vpop.f32.mrf.mxu0
      %541 = vmatprep.mubr.bf16.mxu0 0
      %542 = vmatmul.mubr.bf16.gmra.mxu0 %v414
      %v543 = vpop.f32.mrf.mxu0
      %v544 = vadd.f32 %v334, %v543
      %v545 = vpop.f32.mrf.mxu0
      %v546 = vpop.f32.mrf.mxu0
      %v547 = vadd.f32 %v334, %v546
      %v548 = vpop.f32.mrf.mxu0
      %549 = vmatprep.mubr.bf16.mxu0 0
      %550 = vmatmul.mubr.bf16.gmra.mxu0 %v415
      %v551 = vpop.f32.mrf.mxu0
      %v552 = vadd.f32 %v334, %v551
      %v553 = vpop.f32.mrf.mxu0
      %v554 = vpop.f32.mrf.mxu0
      %v555 = vadd.f32 %v334, %v554
      %v556 = vpop.f32.mrf.mxu0
      %557 = vmatprep.mubr.bf16.mxu0 0
      %558 = vmatmul.mubr.bf16.gmra.mxu0 %v416
      %v559 = vpop.f32.mrf.mxu0
      %v560 = vadd.f32 %v334, %v559
      %v561 = vpop.f32.mrf.mxu0
      %v562 = vpop.f32.mrf.mxu0
      %v563 = vadd.f32 %v334, %v562
      %v564 = vpop.f32.mrf.mxu0
      %565 = vmatprep.mubr.bf16.mxu0 0
      %566 = vmatmul.mubr.bf16.gmra.mxu0 %v417
      %v567 = vpop.f32.mrf.mxu0
      %v568 = vadd.f32 %v334, %v567
      %v569 = vpop.f32.mrf.mxu0
      %v570 = vpop.f32.mrf.mxu0
      %v571 = vadd.f32 %v334, %v570
      %v572 = vpop.f32.mrf.mxu0
      %573 = vmatprep.mubr.bf16.mxu0 0
      %574 = vmatmul.mubr.bf16.gmra.mxu0 %v418
      %v575 = vpop.f32.mrf.mxu0
      %v576 = vadd.f32 %v334, %v575
      %v577 = vpop.f32.mrf.mxu0
      %v578 = vpop.f32.mrf.mxu0
      %v579 = vadd.f32 %v334, %v578
      %v580 = vpop.f32.mrf.mxu0
      %581 = vmatprep.mubr.bf16.mxu0 0
      %582 = vmatmul.mubr.bf16.gmra.mxu0 %v419
      %v583 = vpop.f32.mrf.mxu0
      %v584 = vadd.f32 %v334, %v583
      %v585 = vpop.f32.mrf.mxu0
      %v586 = vpop.f32.mrf.mxu0
      %v587 = vadd.f32 %v334, %v586
      %v588 = vpop.f32.mrf.mxu0
      %589 = vmatprep.mubr.bf16.mxu0 0
      %590 = vmatmul.mubr.bf16.gmra.mxu0 %v420
      %v591 = vpop.f32.mrf.mxu0
      %v592 = vadd.f32 %v334, %v591
      %v593 = vpop.f32.mrf.mxu0
      %v594 = vpop.f32.mrf.mxu0
      %v595 = vadd.f32 %v334, %v594
      %v596 = vpop.f32.mrf.mxu0
      %597 = vmatprep.mubr.bf16.mxu0 0
      %598 = vmatmul.mubr.bf16.gmra.mxu0 %v421
      %v599 = vpop.f32.mrf.mxu0
      %v600 = vadd.f32 %v334, %v599
      %v601 = vpop.f32.mrf.mxu0
      %v602 = vpop.f32.mrf.mxu0
      %v603 = vadd.f32 %v334, %v602
      %v604 = vpop.f32.mrf.mxu0
      %605 = vmatprep.mubr.bf16.mxu0 0
      %606 = vmatmul.mubr.bf16.gmra.mxu0 %v422
      %v607 = vpop.f32.mrf.mxu0
      %v608 = vadd.f32 %v334, %v607
      %v609 = vpop.f32.mrf.mxu0
      %v610 = vpop.f32.mrf.mxu0
      %v611 = vadd.f32 %v334, %v610
      %v612 = vpop.f32.mrf.mxu0
      %613 = vmatprep.mubr.bf16.mxu0 0
      %614 = vmatmul.mubr.bf16.gmra.mxu0 %v423
      %v615 = vpop.f32.mrf.mxu0
      %v616 = vadd.f32 %v334, %v615
      %v617 = vpop.f32.mrf.mxu0
      %v618 = vpop.f32.mrf.mxu0
      %v619 = vpop.f32.mrf.mxu0
      %620 = vdwg.mxu0
      %v621 = vmax.f32 %v520, 0.0
      %v622 = vmax.f32 %v523, 0.0
      %v623 = vmax.f32 %v528, 0.0
      %v624 = vmax.f32 %v531, 0.0
      %v625 = vmax.f32 %v536, 0.0
      %v626 = vmax.f32 %v539, 0.0
      %v627 = vmax.f32 %v544, 0.0
      %v628 = vmax.f32 %v547, 0.0
      %v629 = vmax.f32 %v552, 0.0
      %v630 = vmax.f32 %v555, 0.0
      %v631 = vmax.f32 %v560, 0.0
      %v632 = vmax.f32 %v563, 0.0
      %v633 = vmax.f32 %v568, 0.0
      %v634 = vmax.f32 %v571, 0.0
      %v635 = vmax.f32 %v576, 0.0
      %v636 = vmax.f32 %v579, 0.0
      %v637 = vmax.f32 %v584, 0.0
      %v638 = vmax.f32 %v587, 0.0
      %v639 = vmax.f32 %v592, 0.0
      %v640 = vmax.f32 %v595, 0.0
      %v641 = vmax.f32 %v600, 0.0
      %v642 = vmax.f32 %v603, 0.0
      %v643 = vmax.f32 %v608, 0.0
      %v644 = vmax.f32 %v611, 0.0
      %v645 = vmax.f32 %v616, 0.0
      %v646 = vld [vmem:[%s296] sm:$0xf]
      %v647 = vld [vmem:[%s296 + $0x4] sm:$0xf]
      %v648 = vld [vmem:[%s296 + $0x8] sm:$0xf]
      %v649 = vld [vmem:[%s296 + $0xc] sm:$0xf]
      %v650 = vld [vmem:[%s296 + $0x10] sm:$0xf]
      %v651 = vld [vmem:[%s296 + $0x14] sm:$0xf]
      %v652 = vld [vmem:[%s296 + $0x18] sm:$0xf]
      %v653 = vld [vmem:[%s296 + $0x1c] sm:$0xf]
      %v654 = vld [vmem:[%s296 + $0x20] sm:$0xf]
      %v655 = vld [vmem:[%s296 + $0x24] sm:$0xf]
      %v656 = vld [vmem:[%s296 + $0x28] sm:$0xf]
      %v657 = vld [vmem:[%s296 + $0x2c] sm:$0xf]
      %v658 = vld [vmem:[%s296 + $0x30] sm:$0xf]
      %v659 = vld [vmem:[%s296 + $0x34] sm:$0xf]
      %v660 = vld [vmem:[%s296 + $0x38] sm:$0xf]
      %v661 = vld [vmem:[%s296 + $0x3c] sm:$0xf]
      %v662 = vld [vmem:[%s296 + $0x40] sm:$0xf]
      %v663 = vld [vmem:[%s296 + $0x44] sm:$0xf]
      %v664 = vld [vmem:[%s296 + $0x48] sm:$0xf]
      %v665 = vld [vmem:[%s296 + $0x4c] sm:$0xf]
      %v666 = vld [vmem:[%s296 + $0x50] sm:$0xf]
      %v667 = vld [vmem:[%s296 + $0x54] sm:$0xf]
      %v668 = vld [vmem:[%s296 + $0x58] sm:$0xf]
      %v669 = vld [vmem:[%s296 + $0x5c] sm:$0xf]
      %v670 = vld [vmem:[%s296 + $0x60] sm:$0x3]
      %v696 = vunpack.c.l.b16 %v646
      %v697 = vunpack.c.l.b16 %v647
      %v698 = vunpack.c.l.b16 %v648
      %v699 = vunpack.c.l.b16 %v649
      %v700 = vunpack.c.l.b16 %v650
      %v701 = vunpack.c.l.b16 %v651
      %v702 = vunpack.c.l.b16 %v652
      %v703 = vunpack.c.l.b16 %v653
      %v704 = vunpack.c.l.b16 %v654
      %v705 = vunpack.c.l.b16 %v655
      %v706 = vunpack.c.l.b16 %v656
      %v707 = vunpack.c.l.b16 %v657
      %v708 = vunpack.c.l.b16 %v658
      %v709 = vunpack.c.l.b16 %v659
      %v710 = vunpack.c.l.b16 %v660
      %v711 = vunpack.c.l.b16 %v661
      %v712 = vunpack.c.l.b16 %v662
      %v713 = vunpack.c.l.b16 %v663
      %v714 = vunpack.c.l.b16 %v664
      %v715 = vunpack.c.l.b16 %v665
      %v716 = vunpack.c.l.b16 %v666
      %v717 = vunpack.c.l.b16 %v667
      %v718 = vunpack.c.l.b16 %v668
      %v719 = vunpack.c.l.b16 %v669
      %v720 = vunpack.c.l.b16 %v670
      %v721 = vpack.c.b16 %v697, %v696
      %v722 = vpack.c.b16 %v699, %v698
      %v723 = vpack.c.b16 %v701, %v700
      %v724 = vpack.c.b16 %v703, %v702
      %v725 = vpack.c.b16 %v705, %v704
      %v726 = vpack.c.b16 %v707, %v706
      %v727 = vpack.c.b16 %v709, %v708
      %v728 = vpack.c.b16 %v711, %v710
      %v729 = vpack.c.b16 %v713, %v712
      %v730 = vpack.c.b16 %v715, %v714
      %v731 = vpack.c.b16 %v717, %v716
      %v732 = vpack.c.b16 %v719, %v718
      %v733 = vpack.c.b16 %v720, %v720
      %747 = vmatprep.subr.bf16.mxu0 0
      %748 = vmatpush1.bf16.msra.mxu0 %v476
      %749 = vmatprep.subr.bf16.mxu0 0
      %750 = vmatpush1.bf16.msra.mxu0 %v475
      %751 = vmatprep.subr.bf16.mxu0 0
      %752 = vmatpush1.bf16.msra.mxu0 %v474
      %753 = vmatprep.subr.bf16.mxu0 0
      %754 = vmatpush1.bf16.msra.mxu0 %v473
      %755 = vmatprep.subr.bf16.mxu0 0
      %756 = vmatpush1.bf16.msra.mxu0 %v472
      %757 = vmatprep.subr.bf16.mxu0 0
      %758 = vmatpush1.bf16.msra.mxu0 %v471
      %759 = vmatprep.subr.bf16.mxu0 0
      %760 = vmatpush1.bf16.msra.mxu0 %v470
      %761 = vmatprep.subr.bf16.mxu0 0
      %762 = vmatpush1.bf16.msra.mxu0 %v469
      %763 = vmatprep.subr.bf16.mxu0 0
      %764 = vmatpush2.bf16.msra.mxu0 0
      %765 = vmatprep.subr.bf16.mxu0 0
      %766 = vmatpush2.bf16.msra.mxu0 0
      %767 = vmatprep.subr.bf16.mxu0 0
      %768 = vmatpush2.bf16.msra.mxu0 0
      %769 = vmatprep.subr.bf16.mxu0 0
      %770 = vmatpush2.bf16.msra.mxu0 0
      %771 = vmatprep.subr.bf16.mxu0 0
      %772 = vmatpush2.bf16.msra.mxu0 0
      %773 = vmatprep.subr.bf16.mxu0 0
      %774 = vmatpush2.bf16.msra.mxu0 0
      %775 = vmatprep.subr.bf16.mxu0 0
      %776 = vmatpush2.bf16.msra.mxu0 0
      %777 = vmatprep.subr.bf16.mxu0 0
      %778 = vmatpush2.bf16.msra.mxu0 0
      %779 = vmatprep.mubr.bf16.mxu0 0
      %780 = vmatmul.mubr.bf16.gmra.mxu0 %v721
      %v781 = vpop.f32.mrf.mxu0
      %v782 = vadd.f32 %v334, %v781
      %v783 = vpop.f32.mrf.mxu0
      %v784 = vpop.f32.mrf.mxu0
      %v785 = vadd.f32 %v334, %v784
      %v786 = vpop.f32.mrf.mxu0
      %787 = vmatprep.mubr.bf16.mxu0 0
      %788 = vmatmul.mubr.bf16.gmra.mxu0 %v722
      %v789 = vpop.f32.mrf.mxu0
      %v790 = vadd.f32 %v334, %v789
      %v791 = vpop.f32.mrf.mxu0
      %v792 = vpop.f32.mrf.mxu0
      %v793 = vadd.f32 %v334, %v792
      %v794 = vpop.f32.mrf.mxu0
      %795 = vmatprep.mubr.bf16.mxu0 0
      %796 = vmatmul.mubr.bf16.gmra.mxu0 %v723
      %v797 = vpop.f32.mrf.mxu0
      %v798 = vadd.f32 %v334, %v797
      %v799 = vpop.f32.mrf.mxu0
      %v800 = vpop.f32.mrf.mxu0
      %v801 = vadd.f32 %v334, %v800
      %v802 = vpop.f32.mrf.mxu0
      %803 = vmatprep.mubr.bf16.mxu0 0
      %804 = vmatmul.mubr.bf16.gmra.mxu0 %v724
      %v805 = vpop.f32.mrf.mxu0
      %v806 = vadd.f32 %v334, %v805
      %v807 = vpop.f32.mrf.mxu0
      %v808 = vpop.f32.mrf.mxu0
      %v809 = vadd.f32 %v334, %v808
      %v810 = vpop.f32.mrf.mxu0
      %811 = vmatprep.mubr.bf16.mxu0 0
      %812 = vmatmul.mubr.bf16.gmra.mxu0 %v725
      %v813 = vpop.f32.mrf.mxu0
      %v814 = vadd.f32 %v334, %v813
      %v815 = vpop.f32.mrf.mxu0
      %v816 = vpop.f32.mrf.mxu0
      %v817 = vadd.f32 %v334, %v816
      %v818 = vpop.f32.mrf.mxu0
      %819 = vmatprep.mubr.bf16.mxu0 0
      %820 = vmatmul.mubr.bf16.gmra.mxu0 %v726
      %v821 = vpop.f32.mrf.mxu0
      %v822 = vadd.f32 %v334, %v821
      %v823 = vpop.f32.mrf.mxu0
      %v824 = vpop.f32.mrf.mxu0
      %v825 = vadd.f32 %v334, %v824
      %v826 = vpop.f32.mrf.mxu0
      %827 = vmatprep.mubr.bf16.mxu0 0
      %828 = vmatmul.mubr.bf16.gmra.mxu0 %v727
      %v829 = vpop.f32.mrf.mxu0
      %v830 = vadd.f32 %v334, %v829
      %v831 = vpop.f32.mrf.mxu0
      %v832 = vpop.f32.mrf.mxu0
      %v833 = vadd.f32 %v334, %v832
      %v834 = vpop.f32.mrf.mxu0
      %835 = vmatprep.mubr.bf16.mxu0 0
      %836 = vmatmul.mubr.bf16.gmra.mxu0 %v728
      %v837 = vpop.f32.mrf.mxu0
      %v838 = vadd.f32 %v334, %v837
      %v839 = vpop.f32.mrf.mxu0
      %v840 = vpop.f32.mrf.mxu0
      %v841 = vadd.f32 %v334, %v840
      %v842 = vpop.f32.mrf.mxu0
      %843 = vmatprep.mubr.bf16.mxu0 0
      %844 = vmatmul.mubr.bf16.gmra.mxu0 %v729
      %v845 = vpop.f32.mrf.mxu0
      %v846 = vadd.f32 %v334, %v845
      %v847 = vpop.f32.mrf.mxu0
      %v848 = vpop.f32.mrf.mxu0
      %v849 = vadd.f32 %v334, %v848
      %v850 = vpop.f32.mrf.mxu0
      %851 = vmatprep.mubr.bf16.mxu0 0
      %852 = vmatmul.mubr.bf16.gmra.mxu0 %v730
      %v853 = vpop.f32.mrf.mxu0
      %v854 = vadd.f32 %v334, %v853
      %v855 = vpop.f32.mrf.mxu0
      %v856 = vpop.f32.mrf.mxu0
      %v857 = vadd.f32 %v334, %v856
      %v858 = vpop.f32.mrf.mxu0
      %859 = vmatprep.mubr.bf16.mxu0 0
      %860 = vmatmul.mubr.bf16.gmra.mxu0 %v731
      %v861 = vpop.f32.mrf.mxu0
      %v862 = vadd.f32 %v334, %v861
      %v863 = vpop.f32.mrf.mxu0
      %v864 = vpop.f32.mrf.mxu0
      %v865 = vadd.f32 %v334, %v864
      %v866 = vpop.f32.mrf.mxu0
      %867 = vmatprep.mubr.bf16.mxu0 0
      %868 = vmatmul.mubr.bf16.gmra.mxu0 %v732
      %v869 = vpop.f32.mrf.mxu0
      %v870 = vadd.f32 %v334, %v869
      %v871 = vpop.f32.mrf.mxu0
      %v872 = vpop.f32.mrf.mxu0
      %v873 = vadd.f32 %v334, %v872
      %v874 = vpop.f32.mrf.mxu0
      %875 = vmatprep.mubr.bf16.mxu0 0
      %876 = vmatmul.mubr.bf16.gmra.mxu0 %v733
      %v877 = vpop.f32.mrf.mxu0
      %v878 = vadd.f32 %v334, %v877
      %v879 = vpop.f32.mrf.mxu0
      %v880 = vpop.f32.mrf.mxu0
      %v881 = vpop.f32.mrf.mxu0
      %882 = vdwg.mxu0
      %v883 = vmax.f32 %v782, 0.0
      %v884 = vmax.f32 %v785, 0.0
      %v885 = vmax.f32 %v790, 0.0
      %v886 = vmax.f32 %v793, 0.0
      %v887 = vmax.f32 %v798, 0.0
      %v888 = vmax.f32 %v801, 0.0
      %v889 = vmax.f32 %v806, 0.0
      %v890 = vmax.f32 %v809, 0.0
      %v891 = vmax.f32 %v814, 0.0
      %v892 = vmax.f32 %v817, 0.0
      %v893 = vmax.f32 %v822, 0.0
      %v894 = vmax.f32 %v825, 0.0
      %v895 = vmax.f32 %v830, 0.0
      %v896 = vmax.f32 %v833, 0.0
      %v897 = vmax.f32 %v838, 0.0
      %v898 = vmax.f32 %v841, 0.0
      %v899 = vmax.f32 %v846, 0.0
      %v900 = vmax.f32 %v849, 0.0
      %v901 = vmax.f32 %v854, 0.0
      %v902 = vmax.f32 %v857, 0.0
      %v903 = vmax.f32 %v862, 0.0
      %v904 = vmax.f32 %v865, 0.0
      %v905 = vmax.f32 %v870, 0.0
      %v906 = vmax.f32 %v873, 0.0
      %v907 = vmax.f32 %v878, 0.0
      %v908 = vmax.f32 %v621, %v883
      %v909 = vmax.f32 %v622, %v884
      %v910 = vmax.f32 %v623, %v885
      %v911 = vmax.f32 %v624, %v886
      %v912 = vmax.f32 %v625, %v887
      %v913 = vmax.f32 %v626, %v888
      %v914 = vmax.f32 %v627, %v889
      %v915 = vmax.f32 %v628, %v890
      %v916 = vmax.f32 %v629, %v891
      %v917 = vmax.f32 %v630, %v892
      %v918 = vmax.f32 %v631, %v893
      %v919 = vmax.f32 %v632, %v894
      %v920 = vmax.f32 %v633, %v895
      %v921 = vmax.f32 %v634, %v896
      %v922 = vmax.f32 %v635, %v897
      %v923 = vmax.f32 %v636, %v898
      %v924 = vmax.f32 %v637, %v899
      %v925 = vmax.f32 %v638, %v900
      %v926 = vmax.f32 %v639, %v901
      %v927 = vmax.f32 %v640, %v902
      %v928 = vmax.f32 %v641, %v903
      %v929 = vmax.f32 %v642, %v904
      %v930 = vmax.f32 %v643, %v905
      %v931 = vmax.f32 %v644, %v906
      %v932 = vmax.f32 %v645, %v907
      %v933 = vld [vmem:[%s301] sm:$0xf]
      %v934 = vld [vmem:[%s301 + $0x4] sm:$0xf]
      %v935 = vld [vmem:[%s301 + $0x8] sm:$0xf]
      %v936 = vld [vmem:[%s301 + $0xc] sm:$0xf]
      %v937 = vld [vmem:[%s301 + $0x10] sm:$0xf]
      %v938 = vld [vmem:[%s301 + $0x14] sm:$0xf]
      %v939 = vld [vmem:[%s301 + $0x18] sm:$0xf]
      %v940 = vld [vmem:[%s301 + $0x1c] sm:$0xf]
      %v941 = vld [vmem:[%s301 + $0x20] sm:$0xf]
      %v942 = vld [vmem:[%s301 + $0x24] sm:$0xf]
      %v943 = vld [vmem:[%s301 + $0x28] sm:$0xf]
      %v944 = vld [vmem:[%s301 + $0x2c] sm:$0xf]
      %v945 = vld [vmem:[%s301 + $0x30] sm:$0xf]
      %v946 = vld [vmem:[%s301 + $0x34] sm:$0xf]
      %v947 = vld [vmem:[%s301 + $0x38] sm:$0xf]
      %v948 = vld [vmem:[%s301 + $0x3c] sm:$0xf]
      %v949 = vld [vmem:[%s301 + $0x40] sm:$0xf]
      %v950 = vld [vmem:[%s301 + $0x44] sm:$0xf]
      %v951 = vld [vmem:[%s301 + $0x48] sm:$0xf]
      %v952 = vld [vmem:[%s301 + $0x4c] sm:$0xf]
      %v953 = vld [vmem:[%s301 + $0x50] sm:$0xf]
      %v954 = vld [vmem:[%s301 + $0x54] sm:$0xf]
      %v955 = vld [vmem:[%s301 + $0x58] sm:$0xf]
      %v956 = vld [vmem:[%s301 + $0x5c] sm:$0xf]
      %v957 = vld [vmem:[%s301 + $0x60] sm:$0x3]
      %v983 = vunpack.c.l.b16 %v933
      %v984 = vunpack.c.l.b16 %v934
      %v985 = vunpack.c.l.b16 %v935
      %v986 = vunpack.c.l.b16 %v936
      %v987 = vunpack.c.l.b16 %v937
      %v988 = vunpack.c.l.b16 %v938
      %v989 = vunpack.c.l.b16 %v939
      %v990 = vunpack.c.l.b16 %v940
      %v991 = vunpack.c.l.b16 %v941
      %v992 = vunpack.c.l.b16 %v942
      %v993 = vunpack.c.l.b16 %v943
      %v994 = vunpack.c.l.b16 %v944
      %v995 = vunpack.c.l.b16 %v945
      %v996 = vunpack.c.l.b16 %v946
      %v997 = vunpack.c.l.b16 %v947
      %v998 = vunpack.c.l.b16 %v948
      %v999 = vunpack.c.l.b16 %v949
      %v1000 = vunpack.c.l.b16 %v950
      %v1001 = vunpack.c.l.b16 %v951
      %v1002 = vunpack.c.l.b16 %v952
      %v1003 = vunpack.c.l.b16 %v953
      %v1004 = vunpack.c.l.b16 %v954
      %v1005 = vunpack.c.l.b16 %v955
      %v1006 = vunpack.c.l.b16 %v956
      %v1007 = vunpack.c.l.b16 %v957
      %v1008 = vpack.c.b16 %v984, %v983
      %v1009 = vpack.c.b16 %v986, %v985
      %v1010 = vpack.c.b16 %v988, %v987
      %v1011 = vpack.c.b16 %v990, %v989
      %v1012 = vpack.c.b16 %v992, %v991
      %v1013 = vpack.c.b16 %v994, %v993
      %v1014 = vpack.c.b16 %v996, %v995
      %v1015 = vpack.c.b16 %v998, %v997
      %v1016 = vpack.c.b16 %v1000, %v999
      %v1017 = vpack.c.b16 %v1002, %v1001
      %v1018 = vpack.c.b16 %v1004, %v1003
      %v1019 = vpack.c.b16 %v1006, %v1005
      %v1020 = vpack.c.b16 %v1007, %v1007
      %1034 = vmatprep.subr.bf16.mxu0 0
      %1035 = vmatpush1.bf16.msra.mxu0 %v476
      %1036 = vmatprep.subr.bf16.mxu0 0
      %1037 = vmatpush1.bf16.msra.mxu0 %v475
      %1038 = vmatprep.subr.bf16.mxu0 0
      %1039 = vmatpush1.bf16.msra.mxu0 %v474
      %1040 = vmatprep.subr.bf16.mxu0 0
      %1041 = vmatpush1.bf16.msra.mxu0 %v473
      %1042 = vmatprep.subr.bf16.mxu0 0
      %1043 = vmatpush1.bf16.msra.mxu0 %v472
      %1044 = vmatprep.subr.bf16.mxu0 0
      %1045 = vmatpush1.bf16.msra.mxu0 %v471
      %1046 = vmatprep.subr.bf16.mxu0 0
      %1047 = vmatpush1.bf16.msra.mxu0 %v470
      %1048 = vmatprep.subr.bf16.mxu0 0
      %1049 = vmatpush1.bf16.msra.mxu0 %v469
      %1050 = vmatprep.subr.bf16.mxu0 0
      %1051 = vmatpush2.bf16.msra.mxu0 0
      %1052 = vmatprep.subr.bf16.mxu0 0
      %1053 = vmatpush2.bf16.msra.mxu0 0
      %1054 = vmatprep.subr.bf16.mxu0 0
      %1055 = vmatpush2.bf16.msra.mxu0 0
      %1056 = vmatprep.subr.bf16.mxu0 0
      %1057 = vmatpush2.bf16.msra.mxu0 0
      %1058 = vmatprep.subr.bf16.mxu0 0
      %1059 = vmatpush2.bf16.msra.mxu0 0
      %1060 = vmatprep.subr.bf16.mxu0 0
      %1061 = vmatpush2.bf16.msra.mxu0 0
      %1062 = vmatprep.subr.bf16.mxu0 0
      %1063 = vmatpush2.bf16.msra.mxu0 0
      %1064 = vmatprep.subr.bf16.mxu0 0
      %1065 = vmatpush2.bf16.msra.mxu0 0
      %1066 = vmatprep.mubr.bf16.mxu0 0
      %1067 = vmatmul.mubr.bf16.gmra.mxu0 %v1008
      %v1068 = vpop.f32.mrf.mxu0
      %v1069 = vadd.f32 %v334, %v1068
      %v1070 = vpop.f32.mrf.mxu0
      %v1071 = vpop.f32.mrf.mxu0
      %v1072 = vadd.f32 %v334, %v1071
      %v1073 = vpop.f32.mrf.mxu0
      %1074 = vmatprep.mubr.bf16.mxu0 0
      %1075 = vmatmul.mubr.bf16.gmra.mxu0 %v1009
      %v1076 = vpop.f32.mrf.mxu0
      %v1077 = vadd.f32 %v334, %v1076
      %v1078 = vpop.f32.mrf.mxu0
      %v1079 = vpop.f32.mrf.mxu0
      %v1080 = vadd.f32 %v334, %v1079
      %v1081 = vpop.f32.mrf.mxu0
      %1082 = vmatprep.mubr.bf16.mxu0 0
      %1083 = vmatmul.mubr.bf16.gmra.mxu0 %v1010
      %v1084 = vpop.f32.mrf.mxu0
      %v1085 = vadd.f32 %v334, %v1084
      %v1086 = vpop.f32.mrf.mxu0
      %v1087 = vpop.f32.mrf.mxu0
      %v1088 = vadd.f32 %v334, %v1087
      %v1089 = vpop.f32.mrf.mxu0
      %1090 = vmatprep.mubr.bf16.mxu0 0
      %1091 = vmatmul.mubr.bf16.gmra.mxu0 %v1011
      %v1092 = vpop.f32.mrf.mxu0
      %v1093 = vadd.f32 %v334, %v1092
      %v1094 = vpop.f32.mrf.mxu0
      %v1095 = vpop.f32.mrf.mxu0
      %v1096 = vadd.f32 %v334, %v1095
      %v1097 = vpop.f32.mrf.mxu0
      %1098 = vmatprep.mubr.bf16.mxu0 0
      %1099 = vmatmul.mubr.bf16.gmra.mxu0 %v1012
      %v1100 = vpop.f32.mrf.mxu0
      %v1101 = vadd.f32 %v334, %v1100
      %v1102 = vpop.f32.mrf.mxu0
      %v1103 = vpop.f32.mrf.mxu0
      %v1104 = vadd.f32 %v334, %v1103
      %v1105 = vpop.f32.mrf.mxu0
      %1106 = vmatprep.mubr.bf16.mxu0 0
      %1107 = vmatmul.mubr.bf16.gmra.mxu0 %v1013
      %v1108 = vpop.f32.mrf.mxu0
      %v1109 = vadd.f32 %v334, %v1108
      %v1110 = vpop.f32.mrf.mxu0
      %v1111 = vpop.f32.mrf.mxu0
      %v1112 = vadd.f32 %v334, %v1111
      %v1113 = vpop.f32.mrf.mxu0
      %1114 = vmatprep.mubr.bf16.mxu0 0
      %1115 = vmatmul.mubr.bf16.gmra.mxu0 %v1014
      %v1116 = vpop.f32.mrf.mxu0
      %v1117 = vadd.f32 %v334, %v1116
      %v1118 = vpop.f32.mrf.mxu0
      %v1119 = vpop.f32.mrf.mxu0
      %v1120 = vadd.f32 %v334, %v1119
      %v1121 = vpop.f32.mrf.mxu0
      %1122 = vmatprep.mubr.bf16.mxu0 0
      %1123 = vmatmul.mubr.bf16.gmra.mxu0 %v1015
      %v1124 = vpop.f32.mrf.mxu0
      %v1125 = vadd.f32 %v334, %v1124
      %v1126 = vpop.f32.mrf.mxu0
      %v1127 = vpop.f32.mrf.mxu0
      %v1128 = vadd.f32 %v334, %v1127
      %v1129 = vpop.f32.mrf.mxu0
      %1130 = vmatprep.mubr.bf16.mxu0 0
      %1131 = vmatmul.mubr.bf16.gmra.mxu0 %v1016
      %v1132 = vpop.f32.mrf.mxu0
      %v1133 = vadd.f32 %v334, %v1132
      %v1134 = vpop.f32.mrf.mxu0
      %v1135 = vpop.f32.mrf.mxu0
      %v1136 = vadd.f32 %v334, %v1135
      %v1137 = vpop.f32.mrf.mxu0
      %1138 = vmatprep.mubr.bf16.mxu0 0
      %1139 = vmatmul.mubr.bf16.gmra.mxu0 %v1017
      %v1140 = vpop.f32.mrf.mxu0
      %v1141 = vadd.f32 %v334, %v1140
      %v1142 = vpop.f32.mrf.mxu0
      %v1143 = vpop.f32.mrf.mxu0
      %v1144 = vadd.f32 %v334, %v1143
      %v1145 = vpop.f32.mrf.mxu0
      %1146 = vmatprep.mubr.bf16.mxu0 0
      %1147 = vmatmul.mubr.bf16.gmra.mxu0 %v1018
      %v1148 = vpop.f32.mrf.mxu0
      %v1149 = vadd.f32 %v334, %v1148
      %v1150 = vpop.f32.mrf.mxu0
      %v1151 = vpop.f32.mrf.mxu0
      %v1152 = vadd.f32 %v334, %v1151
      %v1153 = vpop.f32.mrf.mxu0
      %1154 = vmatprep.mubr.bf16.mxu0 0
      %1155 = vmatmul.mubr.bf16.gmra.mxu0 %v1019
      %v1156 = vpop.f32.mrf.mxu0
      %v1157 = vadd.f32 %v334, %v1156
      %v1158 = vpop.f32.mrf.mxu0
      %v1159 = vpop.f32.mrf.mxu0
      %v1160 = vadd.f32 %v334, %v1159
      %v1161 = vpop.f32.mrf.mxu0
      %1162 = vmatprep.mubr.bf16.mxu0 0
      %1163 = vmatmul.mubr.bf16.gmra.mxu0 %v1020
      %v1164 = vpop.f32.mrf.mxu0
      %v1165 = vadd.f32 %v334, %v1164
      %v1166 = vpop.f32.mrf.mxu0
      %v1167 = vpop.f32.mrf.mxu0
      %v1168 = vpop.f32.mrf.mxu0
      %1169 = vdwg.mxu0
      %v1170 = vmax.f32 %v1069, 0.0
      %v1171 = vmax.f32 %v1072, 0.0
      %v1172 = vmax.f32 %v1077, 0.0
      %v1173 = vmax.f32 %v1080, 0.0
      %v1174 = vmax.f32 %v1085, 0.0
      %v1175 = vmax.f32 %v1088, 0.0
      %v1176 = vmax.f32 %v1093, 0.0
      %v1177 = vmax.f32 %v1096, 0.0
      %v1178 = vmax.f32 %v1101, 0.0
      %v1179 = vmax.f32 %v1104, 0.0
      %v1180 = vmax.f32 %v1109, 0.0
      %v1181 = vmax.f32 %v1112, 0.0
      %v1182 = vmax.f32 %v1117, 0.0
      %v1183 = vmax.f32 %v1120, 0.0
      %v1184 = vmax.f32 %v1125, 0.0
      %v1185 = vmax.f32 %v1128, 0.0
      %v1186 = vmax.f32 %v1133, 0.0
      %v1187 = vmax.f32 %v1136, 0.0
      %v1188 = vmax.f32 %v1141, 0.0
      %v1189 = vmax.f32 %v1144, 0.0
      %v1190 = vmax.f32 %v1149, 0.0
      %v1191 = vmax.f32 %v1152, 0.0
      %v1192 = vmax.f32 %v1157, 0.0
      %v1193 = vmax.f32 %v1160, 0.0
      %v1194 = vmax.f32 %v1165, 0.0
      %v1195 = vld [vmem:[%s306] sm:$0xf]
      %v1196 = vld [vmem:[%s306 + $0x4] sm:$0xf]
      %v1197 = vld [vmem:[%s306 + $0x8] sm:$0xf]
      %v1198 = vld [vmem:[%s306 + $0xc] sm:$0xf]
      %v1199 = vld [vmem:[%s306 + $0x10] sm:$0xf]
      %v1200 = vld [vmem:[%s306 + $0x14] sm:$0xf]
      %v1201 = vld [vmem:[%s306 + $0x18] sm:$0xf]
      %v1202 = vld [vmem:[%s306 + $0x1c] sm:$0xf]
      %v1203 = vld [vmem:[%s306 + $0x20] sm:$0xf]
      %v1204 = vld [vmem:[%s306 + $0x24] sm:$0xf]
      %v1205 = vld [vmem:[%s306 + $0x28] sm:$0xf]
      %v1206 = vld [vmem:[%s306 + $0x2c] sm:$0xf]
      %v1207 = vld [vmem:[%s306 + $0x30] sm:$0xf]
      %v1208 = vld [vmem:[%s306 + $0x34] sm:$0xf]
      %v1209 = vld [vmem:[%s306 + $0x38] sm:$0xf]
      %v1210 = vld [vmem:[%s306 + $0x3c] sm:$0xf]
      %v1211 = vld [vmem:[%s306 + $0x40] sm:$0xf]
      %v1212 = vld [vmem:[%s306 + $0x44] sm:$0xf]
      %v1213 = vld [vmem:[%s306 + $0x48] sm:$0xf]
      %v1214 = vld [vmem:[%s306 + $0x4c] sm:$0xf]
      %v1215 = vld [vmem:[%s306 + $0x50] sm:$0xf]
      %v1216 = vld [vmem:[%s306 + $0x54] sm:$0xf]
      %v1217 = vld [vmem:[%s306 + $0x58] sm:$0xf]
      %v1218 = vld [vmem:[%s306 + $0x5c] sm:$0xf]
      %v1219 = vld [vmem:[%s306 + $0x60] sm:$0x3]
      %v1245 = vunpack.c.l.b16 %v1195
      %v1246 = vunpack.c.l.b16 %v1196
      %v1247 = vunpack.c.l.b16 %v1197
      %v1248 = vunpack.c.l.b16 %v1198
      %v1249 = vunpack.c.l.b16 %v1199
      %v1250 = vunpack.c.l.b16 %v1200
      %v1251 = vunpack.c.l.b16 %v1201
      %v1252 = vunpack.c.l.b16 %v1202
      %v1253 = vunpack.c.l.b16 %v1203
      %v1254 = vunpack.c.l.b16 %v1204
      %v1255 = vunpack.c.l.b16 %v1205
      %v1256 = vunpack.c.l.b16 %v1206
      %v1257 = vunpack.c.l.b16 %v1207
      %v1258 = vunpack.c.l.b16 %v1208
      %v1259 = vunpack.c.l.b16 %v1209
      %v1260 = vunpack.c.l.b16 %v1210
      %v1261 = vunpack.c.l.b16 %v1211
      %v1262 = vunpack.c.l.b16 %v1212
      %v1263 = vunpack.c.l.b16 %v1213
      %v1264 = vunpack.c.l.b16 %v1214
      %v1265 = vunpack.c.l.b16 %v1215
      %v1266 = vunpack.c.l.b16 %v1216
      %v1267 = vunpack.c.l.b16 %v1217
      %v1268 = vunpack.c.l.b16 %v1218
      %v1269 = vunpack.c.l.b16 %v1219
      %v1270 = vpack.c.b16 %v1246, %v1245
      %v1271 = vpack.c.b16 %v1248, %v1247
      %v1272 = vpack.c.b16 %v1250, %v1249
      %v1273 = vpack.c.b16 %v1252, %v1251
      %v1274 = vpack.c.b16 %v1254, %v1253
      %v1275 = vpack.c.b16 %v1256, %v1255
      %v1276 = vpack.c.b16 %v1258, %v1257
      %v1277 = vpack.c.b16 %v1260, %v1259
      %v1278 = vpack.c.b16 %v1262, %v1261
      %v1279 = vpack.c.b16 %v1264, %v1263
      %v1280 = vpack.c.b16 %v1266, %v1265
      %v1281 = vpack.c.b16 %v1268, %v1267
      %v1282 = vpack.c.b16 %v1269, %v1269
      %1296 = vmatprep.subr.bf16.mxu0 0
      %1297 = vmatpush1.bf16.msra.mxu0 %v476
      %1298 = vmatprep.subr.bf16.mxu0 0
      %1299 = vmatpush1.bf16.msra.mxu0 %v475
      %1300 = vmatprep.subr.bf16.mxu0 0
      %1301 = vmatpush1.bf16.msra.mxu0 %v474
      %1302 = vmatprep.subr.bf16.mxu0 0
      %1303 = vmatpush1.bf16.msra.mxu0 %v473
      %1304 = vmatprep.subr.bf16.mxu0 0
      %1305 = vmatpush1.bf16.msra.mxu0 %v472
      %1306 = vmatprep.subr.bf16.mxu0 0
      %1307 = vmatpush1.bf16.msra.mxu0 %v471
      %1308 = vmatprep.subr.bf16.mxu0 0
      %1309 = vmatpush1.bf16.msra.mxu0 %v470
      %1310 = vmatprep.subr.bf16.mxu0 0
      %1311 = vmatpush1.bf16.msra.mxu0 %v469
      %1312 = vmatprep.subr.bf16.mxu0 0
      %1313 = vmatpush2.bf16.msra.mxu0 0
      %1314 = vmatprep.subr.bf16.mxu0 0
      %1315 = vmatpush2.bf16.msra.mxu0 0
      %1316 = vmatprep.subr.bf16.mxu0 0
      %1317 = vmatpush2.bf16.msra.mxu0 0
      %1318 = vmatprep.subr.bf16.mxu0 0
      %1319 = vmatpush2.bf16.msra.mxu0 0
      %1320 = vmatprep.subr.bf16.mxu0 0
      %1321 = vmatpush2.bf16.msra.mxu0 0
      %1322 = vmatprep.subr.bf16.mxu0 0
      %1323 = vmatpush2.bf16.msra.mxu0 0
      %1324 = vmatprep.subr.bf16.mxu0 0
      %1325 = vmatpush2.bf16.msra.mxu0 0
      %1326 = vmatprep.subr.bf16.mxu0 0
      %1327 = vmatpush2.bf16.msra.mxu0 0
      %1328 = vmatprep.mubr.bf16.mxu0 0
      %1329 = vmatmul.mubr.bf16.gmra.mxu0 %v1270
      %v1330 = vpop.f32.mrf.mxu0
      %v1331 = vadd.f32 %v334, %v1330
      %v1332 = vpop.f32.mrf.mxu0
      %v1333 = vpop.f32.mrf.mxu0
      %v1334 = vadd.f32 %v334, %v1333
      %v1335 = vpop.f32.mrf.mxu0
      %1336 = vmatprep.mubr.bf16.mxu0 0
      %1337 = vmatmul.mubr.bf16.gmra.mxu0 %v1271
      %v1338 = vpop.f32.mrf.mxu0
      %v1339 = vadd.f32 %v334, %v1338
      %v1340 = vpop.f32.mrf.mxu0
      %v1341 = vpop.f32.mrf.mxu0
      %v1342 = vadd.f32 %v334, %v1341
      %v1343 = vpop.f32.mrf.mxu0
      %1344 = vmatprep.mubr.bf16.mxu0 0
      %1345 = vmatmul.mubr.bf16.gmra.mxu0 %v1272
      %v1346 = vpop.f32.mrf.mxu0
      %v1347 = vadd.f32 %v334, %v1346
      %v1348 = vpop.f32.mrf.mxu0
      %v1349 = vpop.f32.mrf.mxu0
      %v1350 = vadd.f32 %v334, %v1349
      %v1351 = vpop.f32.mrf.mxu0
      %1352 = vmatprep.mubr.bf16.mxu0 0
      %1353 = vmatmul.mubr.bf16.gmra.mxu0 %v1273
      %v1354 = vpop.f32.mrf.mxu0
      %v1355 = vadd.f32 %v334, %v1354
      %v1356 = vpop.f32.mrf.mxu0
      %v1357 = vpop.f32.mrf.mxu0
      %v1358 = vadd.f32 %v334, %v1357
      %v1359 = vpop.f32.mrf.mxu0
      %1360 = vmatprep.mubr.bf16.mxu0 0
      %1361 = vmatmul.mubr.bf16.gmra.mxu0 %v1274
      %v1362 = vpop.f32.mrf.mxu0
      %v1363 = vadd.f32 %v334, %v1362
      %v1364 = vpop.f32.mrf.mxu0
      %v1365 = vpop.f32.mrf.mxu0
      %v1366 = vadd.f32 %v334, %v1365
      %v1367 = vpop.f32.mrf.mxu0
      %1368 = vmatprep.mubr.bf16.mxu0 0
      %1369 = vmatmul.mubr.bf16.gmra.mxu0 %v1275
      %v1370 = vpop.f32.mrf.mxu0
      %v1371 = vadd.f32 %v334, %v1370
      %v1372 = vpop.f32.mrf.mxu0
      %v1373 = vpop.f32.mrf.mxu0
      %v1374 = vadd.f32 %v334, %v1373
      %v1375 = vpop.f32.mrf.mxu0
      %1376 = vmatprep.mubr.bf16.mxu0 0
      %1377 = vmatmul.mubr.bf16.gmra.mxu0 %v1276
      %v1378 = vpop.f32.mrf.mxu0
      %v1379 = vadd.f32 %v334, %v1378
      %v1380 = vpop.f32.mrf.mxu0
      %v1381 = vpop.f32.mrf.mxu0
      %v1382 = vadd.f32 %v334, %v1381
      %v1383 = vpop.f32.mrf.mxu0
      %1384 = vmatprep.mubr.bf16.mxu0 0
      %1385 = vmatmul.mubr.bf16.gmra.mxu0 %v1277
      %v1386 = vpop.f32.mrf.mxu0
      %v1387 = vadd.f32 %v334, %v1386
      %v1388 = vpop.f32.mrf.mxu0
      %v1389 = vpop.f32.mrf.mxu0
      %v1390 = vadd.f32 %v334, %v1389
      %v1391 = vpop.f32.mrf.mxu0
      %1392 = vmatprep.mubr.bf16.mxu0 0
      %1393 = vmatmul.mubr.bf16.gmra.mxu0 %v1278
      %v1394 = vpop.f32.mrf.mxu0
      %v1395 = vadd.f32 %v334, %v1394
      %v1396 = vpop.f32.mrf.mxu0
      %v1397 = vpop.f32.mrf.mxu0
      %v1398 = vadd.f32 %v334, %v1397
      %v1399 = vpop.f32.mrf.mxu0
      %1400 = vmatprep.mubr.bf16.mxu0 0
      %1401 = vmatmul.mubr.bf16.gmra.mxu0 %v1279
      %v1402 = vpop.f32.mrf.mxu0
      %v1403 = vadd.f32 %v334, %v1402
      %v1404 = vpop.f32.mrf.mxu0
      %v1405 = vpop.f32.mrf.mxu0
      %v1406 = vadd.f32 %v334, %v1405
      %v1407 = vpop.f32.mrf.mxu0
      %1408 = vmatprep.mubr.bf16.mxu0 0
      %1409 = vmatmul.mubr.bf16.gmra.mxu0 %v1280
      %v1410 = vpop.f32.mrf.mxu0
      %v1411 = vadd.f32 %v334, %v1410
      %v1412 = vpop.f32.mrf.mxu0
      %v1413 = vpop.f32.mrf.mxu0
      %v1414 = vadd.f32 %v334, %v1413
      %v1415 = vpop.f32.mrf.mxu0
      %1416 = vmatprep.mubr.bf16.mxu0 0
      %1417 = vmatmul.mubr.bf16.gmra.mxu0 %v1281
      %v1418 = vpop.f32.mrf.mxu0
      %v1419 = vadd.f32 %v334, %v1418
      %v1420 = vpop.f32.mrf.mxu0
      %v1421 = vpop.f32.mrf.mxu0
      %v1422 = vadd.f32 %v334, %v1421
      %v1423 = vpop.f32.mrf.mxu0
      %1424 = vmatprep.mubr.bf16.mxu0 0
      %1425 = vmatmul.mubr.bf16.gmra.mxu0 %v1282
      %v1426 = vpop.f32.mrf.mxu0
      %v1427 = vadd.f32 %v334, %v1426
      %v1428 = vpop.f32.mrf.mxu0
      %v1429 = vpop.f32.mrf.mxu0
      %v1430 = vpop.f32.mrf.mxu0
      %1431 = vdwg.mxu0
      %v1432 = vmax.f32 %v1331, 0.0
      %v1433 = vmax.f32 %v1334, 0.0
      %v1434 = vmax.f32 %v1339, 0.0
      %v1435 = vmax.f32 %v1342, 0.0
      %v1436 = vmax.f32 %v1347, 0.0
      %v1437 = vmax.f32 %v1350, 0.0
      %v1438 = vmax.f32 %v1355, 0.0
      %v1439 = vmax.f32 %v1358, 0.0
      %v1440 = vmax.f32 %v1363, 0.0
      %v1441 = vmax.f32 %v1366, 0.0
      %v1442 = vmax.f32 %v1371, 0.0
      %v1443 = vmax.f32 %v1374, 0.0
      %v1444 = vmax.f32 %v1379, 0.0
      %v1445 = vmax.f32 %v1382, 0.0
      %v1446 = vmax.f32 %v1387, 0.0
      %v1447 = vmax.f32 %v1390, 0.0
      %v1448 = vmax.f32 %v1395, 0.0
      %v1449 = vmax.f32 %v1398, 0.0
      %v1450 = vmax.f32 %v1403, 0.0
      %v1451 = vmax.f32 %v1406, 0.0
      %v1452 = vmax.f32 %v1411, 0.0
      %v1453 = vmax.f32 %v1414, 0.0
      %v1454 = vmax.f32 %v1419, 0.0
      %v1455 = vmax.f32 %v1422, 0.0
      %v1456 = vmax.f32 %v1427, 0.0
      %v1457 = vmax.f32 %v1170, %v1432
      %v1458 = vmax.f32 %v1171, %v1433
      %v1459 = vmax.f32 %v1172, %v1434
      %v1460 = vmax.f32 %v1173, %v1435
      %v1461 = vmax.f32 %v1174, %v1436
      %v1462 = vmax.f32 %v1175, %v1437
      %v1463 = vmax.f32 %v1176, %v1438
      %v1464 = vmax.f32 %v1177, %v1439
      %v1465 = vmax.f32 %v1178, %v1440
      %v1466 = vmax.f32 %v1179, %v1441
      %v1467 = vmax.f32 %v1180, %v1442
      %v1468 = vmax.f32 %v1181, %v1443
      %v1469 = vmax.f32 %v1182, %v1444
      %v1470 = vmax.f32 %v1183, %v1445
      %v1471 = vmax.f32 %v1184, %v1446
      %v1472 = vmax.f32 %v1185, %v1447
      %v1473 = vmax.f32 %v1186, %v1448
      %v1474 = vmax.f32 %v1187, %v1449
      %v1475 = vmax.f32 %v1188, %v1450
      %v1476 = vmax.f32 %v1189, %v1451
      %v1477 = vmax.f32 %v1190, %v1452
      %v1478 = vmax.f32 %v1191, %v1453
      %v1479 = vmax.f32 %v1192, %v1454
      %v1480 = vmax.f32 %v1193, %v1455
      %v1481 = vmax.f32 %v1194, %v1456
      %v1482 = vmax.f32 %v908, %v1457
      %v1483 = vmax.f32 %v909, %v1458
      %v1484 = vmax.f32 %v910, %v1459
      %v1485 = vmax.f32 %v911, %v1460
      %v1486 = vmax.f32 %v912, %v1461
      %v1487 = vmax.f32 %v913, %v1462
      %v1488 = vmax.f32 %v914, %v1463
      %v1489 = vmax.f32 %v915, %v1464
      %v1490 = vmax.f32 %v916, %v1465
      %v1491 = vmax.f32 %v917, %v1466
      %v1492 = vmax.f32 %v918, %v1467
      %v1493 = vmax.f32 %v919, %v1468
      %v1494 = vmax.f32 %v920, %v1469
      %v1495 = vmax.f32 %v921, %v1470
      %v1496 = vmax.f32 %v922, %v1471
      %v1497 = vmax.f32 %v923, %v1472
      %v1498 = vmax.f32 %v924, %v1473
      %v1499 = vmax.f32 %v925, %v1474
      %v1500 = vmax.f32 %v926, %v1475
      %v1501 = vmax.f32 %v927, %v1476
      %v1502 = vmax.f32 %v928, %v1477
      %v1503 = vmax.f32 %v929, %v1478
      %v1504 = vmax.f32 %v930, %v1479
      %v1505 = vmax.f32 %v931, %v1480
      %v1506 = vmax.f32 %v932, %v1481
      %v1507 = vpack.c.bf16 %v1483, %v1482
      %v1508 = vpack.c.bf16 %v1485, %v1484
      %v1509 = vpack.c.bf16 %v1487, %v1486
      %v1510 = vpack.c.bf16 %v1489, %v1488
      %v1511 = vpack.c.bf16 %v1491, %v1490
      %v1512 = vpack.c.bf16 %v1493, %v1492
      %v1513 = vpack.c.bf16 %v1495, %v1494
      %v1514 = vpack.c.bf16 %v1497, %v1496
      %v1515 = vpack.c.bf16 %v1499, %v1498
      %v1516 = vpack.c.bf16 %v1501, %v1500
      %v1517 = vpack.c.bf16 %v1503, %v1502
      %v1518 = vpack.c.bf16 %v1505, %v1504
      %v1519 = vpack.c.bf16 %v1506, %v1506
      %v1533 = vunpack.c.l.b16 %v1507
      %v1534 = vunpack.c.h.b16 %v1507
      %v1535 = vunpack.c.l.b16 %v1508
      %v1536 = vunpack.c.h.b16 %v1508
      %v1537 = vunpack.c.l.b16 %v1509
      %v1538 = vunpack.c.h.b16 %v1509
      %v1539 = vunpack.c.l.b16 %v1510
      %v1540 = vunpack.c.h.b16 %v1510
      %v1541 = vunpack.c.l.b16 %v1511
      %v1542 = vunpack.c.h.b16 %v1511
      %v1543 = vunpack.c.l.b16 %v1512
      %v1544 = vunpack.c.h.b16 %v1512
      %v1545 = vunpack.c.l.b16 %v1513
      %v1546 = vunpack.c.h.b16 %v1513
      %v1547 = vunpack.c.l.b16 %v1514
      %v1548 = vunpack.c.h.b16 %v1514
      %v1549 = vunpack.c.l.b16 %v1515
      %v1550 = vunpack.c.h.b16 %v1515
      %v1551 = vunpack.c.l.b16 %v1516
      %v1552 = vunpack.c.h.b16 %v1516
      %v1553 = vunpack.c.l.b16 %v1517
      %v1554 = vunpack.c.h.b16 %v1517
      %v1555 = vunpack.c.l.b16 %v1518
      %v1556 = vunpack.c.h.b16 %v1518
      %v1557 = vunpack.c.l.b16 %v1519
      %v1558 = vpack.c.b16 %v1533, %v1533
      %v1559 = vpack.c.b16 %v1534, %v1534
      %v1560 = vpack.c.b16 %v1535, %v1535
      %v1561 = vpack.c.b16 %v1536, %v1536
      %v1562 = vpack.c.b16 %v1537, %v1537
      %v1563 = vpack.c.b16 %v1538, %v1538
      %v1564 = vpack.c.b16 %v1539, %v1539
      %v1565 = vpack.c.b16 %v1540, %v1540
      %v1566 = vpack.c.b16 %v1541, %v1541
      %v1567 = vpack.c.b16 %v1542, %v1542
      %v1568 = vpack.c.b16 %v1543, %v1543
      %v1569 = vpack.c.b16 %v1544, %v1544
      %v1570 = vpack.c.b16 %v1545, %v1545
      %v1571 = vpack.c.b16 %v1546, %v1546
      %v1572 = vpack.c.b16 %v1547, %v1547
      %v1573 = vpack.c.b16 %v1548, %v1548
      %v1574 = vpack.c.b16 %v1549, %v1549
      %v1575 = vpack.c.b16 %v1550, %v1550
      %v1576 = vpack.c.b16 %v1551, %v1551
      %v1577 = vpack.c.b16 %v1552, %v1552
      %v1578 = vpack.c.b16 %v1553, %v1553
      %v1579 = vpack.c.b16 %v1554, %v1554
      %v1580 = vpack.c.b16 %v1555, %v1555
      %v1581 = vpack.c.b16 %v1556, %v1556
      %v1582 = vpack.c.b16 %v1557, %v1557
      %1608 = vst [vmem:[%s311] sm:$0xf] %v1558
      %1609 = vst [vmem:[%s311 + $0x4] sm:$0xf] %v1559
      %1610 = vst [vmem:[%s311 + $0x8] sm:$0xf] %v1560
      %1611 = vst [vmem:[%s311 + $0xc] sm:$0xf] %v1561
      %1612 = vst [vmem:[%s311 + $0x10] sm:$0xf] %v1562
      %1613 = vst [vmem:[%s311 + $0x14] sm:$0xf] %v1563
      %1614 = vst [vmem:[%s311 + $0x18] sm:$0xf] %v1564
      %1615 = vst [vmem:[%s311 + $0x1c] sm:$0xf] %v1565
      %1616 = vst [vmem:[%s311 + $0x20] sm:$0xf] %v1566
      %1617 = vst [vmem:[%s311 + $0x24] sm:$0xf] %v1567
      %1618 = vst [vmem:[%s311 + $0x28] sm:$0xf] %v1568
      %1619 = vst [vmem:[%s311 + $0x2c] sm:$0xf] %v1569
      %1620 = vst [vmem:[%s311 + $0x30] sm:$0xf] %v1570
      %1621 = vst [vmem:[%s311 + $0x34] sm:$0xf] %v1571
      %1622 = vst [vmem:[%s311 + $0x38] sm:$0xf] %v1572
      %1623 = vst [vmem:[%s311 + $0x3c] sm:$0xf] %v1573
      %1624 = vst [vmem:[%s311 + $0x40] sm:$0xf] %v1574
      %1625 = vst [vmem:[%s311 + $0x44] sm:$0xf] %v1575
      %1626 = vst [vmem:[%s311 + $0x48] sm:$0xf] %v1576
      %1627 = vst [vmem:[%s311 + $0x4c] sm:$0xf] %v1577
      %1628 = vst [vmem:[%s311 + $0x50] sm:$0xf] %v1578
      %1629 = vst [vmem:[%s311 + $0x54] sm:$0xf] %v1579
      %1630 = vst [vmem:[%s311 + $0x58] sm:$0xf] %v1580
      %1631 = vst [vmem:[%s311 + $0x5c] sm:$0xf] %v1581
      %1632 = vst [vmem:[%s311 + $0x60] sm:$0x3] %v1582
      %p1633 = scmp.lt.s32.totalorder %s17, 1
      %s1634 = scalar_select %p1633, %s17, 1
      %s1635 = smul.addr %s1634, 25
      %s1636 = smul.addr %s1635, 4
      %s1637 = scalar_lea.vmem %s6, %s1636
      // Predicated region
      $region45: #{_lambda_.2} parent=43 // pred_check
        %p1638 = pneg %p181
      $region46: #{_lambda_.2} parent=43 // pred_check_branch
        %1640 = sbr.rel (%p1638) target = $region48
      $region47: #{_lambda_.2} parent=43 // pred_region
        _
      $region48: #{_lambda_.2} parent=43 // pred_fallthru
        _
    $region44: #{_lambda_.2} parent=5 // pred_fallthru
      _
    %p1641 = scmp.le.s32.totalorder 2, %s12
    // Predicated region
    $region49: #{_lambda_.2} parent=5 // pred_check
      %p1642 = pneg %p1641
    $region50: #{_lambda_.2} parent=5 // pred_check_branch
      %1644 = sbr.rel (%p1642) target = $region52
    $region51: #{_lambda_.2} parent=5 // pred_region
      %s1645 = ssub.s32 %s12, 2
      // Predicated region
      $region53: #{_lambda_.2} parent=51 // pred_check
        %p1646 = pneg %p187
      $region54: #{_lambda_.2} parent=51 // pred_check_branch
        %1648 = sbr.rel (%p1646) target = $region56
      $region55: #{_lambda_.2} parent=51 // pred_region
        %p1649 = scmp.lt.s32.totalorder %s18, 1
        %s1650 = scalar_select %p1649, %s18, 1
        %s1651 = smul.addr %s1650, 25
        %s1652 = smul.addr %s1651, 4
        %s1653 = scalar_lea.vmem %s6, %s1652
      $region56: #{_lambda_.2} parent=51 // pred_fallthru
        _
    $region52: #{_lambda_.2} parent=5 // pred_fallthru
      _
  $region6: #{_lambda_.2} parent=0 // loop_footer
    %s16 = sadd.s32 1, %s12
  $region7: #{_lambda_.2} parent=0 // loop_footer_branch
    %11 = sbr.rel target = $region3
  $region8: #{_lambda_.2} parent=0 // loop_exit
    _

// kernel: _lambda_.3
$region0: #{_lambda_.3}
  #allocation0 [shape = 'u32[]', space=smem, size = 0x4, offset = 0x4, fixed_abs, tag = 'smem constant byte address 0x4 - core index']
  #allocation1 [shape = 'u32[144,128]{1,0:T(1,128)}', space=vmem, size = 0x12000, scoped, tag = 'internal scratch']
  %s0 = inlined_call_operand.vmem [shape: bf16[2,25,256], index: 0, kind: input, shape index: {}]
  %s1 = inlined_call_operand.vmem [shape: bf16[2,25,256], index: 1, kind: input, shape index: {}]
  %s2 = inlined_call_operand.vmem [shape: bf16[2,25,256], index: 2, kind: input, shape index: {}]
  %s3 = inlined_call_operand.vmem [shape: bf16[2,25,256], index: 3, kind: input, shape index: {}]
  %s4 = inlined_call_operand.vmem [shape: bf16[256,128], index: 4, kind: input, shape index: {}]
  %s5 = inlined_call_operand.vmem [shape: f32[1,128], index: 5, kind: input, shape index: {}]
  %s6 = inlined_call_operand.vmem [shape: bf16[25,128,128], index: 6, kind: input, shape index: {}]
  %s7 = inlined_call_operand.vmem [shape: f32[1,128], index: 7, kind: input, shape index: {}]
  %s8 = inlined_call_operand.vmem [shape: bf16[128,128], index: 8, kind: input, shape index: {}]
  %s9 = inlined_call_operand.vmem [shape: f32[1,128], index: 9, kind: input, shape index: {}]
  %s10 = inlined_call_operand.vmem [shape: bf16[128,128], index: 10, kind: input, shape index: {}]
  %s11 = inlined_call_operand.vmem [shape: f32[1,128], index: 11, kind: input, shape index: {}]
  %s12 = inlined_call_operand.hbm [shape: f32[2,1,128], index: 12, kind: output, shape index: {}]
  %s13 = sld [smem:[#allocation0]]
  $region81: #{_lambda_.3} parent=0
    _
  %s15 = ssub.s32 1, %s13
  %s16 = scalar_select 0, %s15, %s13
  $region1: #{_lambda_.3} parent=0
    #allocation2 [shape = 'u8[1024]{0}', space=vmem, size = 0x400, scoped, tag = 'output window, operand 0']
    #allocation3 [shape = 's32[2]{0}', space=sflag, size = 0x8, scoped, tag = 'scoped memory for _lambda_.3']
    %17 = vsyncpa [#allocation3], 0
    %s18 = scalar_lea.sflag [#allocation3], 1
    %19 = vsyncpa %s18, 0
    loop: start=0, step=1, limit=4
    $region2: #{_lambda_.3} parent=1 // loop_pre_header
      _
    $region3: #{_lambda_.3} parent=1 // loop_header
      %s21 = sphi 0, %s25
      %p22 = scmp.ge.s32.totalorder %s21, 4
      %s31 = sphi 0, %s33
      %s34 = sphi 0, %s31
      %s35 = sphi 0, %s34
      %s51 = sphi 0, %s35
      %s57 = sphi 0, %s59
      %s60 = sphi 0, %s57
      %s61 = sphi 0, %s60
      %s77 = sphi 0, %s61
      %s83 = sphi 0, %s85
      %s86 = sphi 0, %s83
      %s87 = sphi 0, %s86
      %s103 = sphi 0, %s87
      %s109 = sphi 0, %s111
      %s112 = sphi 0, %s109
      %s113 = sphi 0, %s112
      %s129 = sphi 0, %s113
      %s133 = sphi 0, %s133
      %s135 = sphi 0, %s133
      %s136 = sphi 0, %s135
      %s150 = sphi 0, %s136
      %s154 = sphi 0, %s154
      %s156 = sphi 0, %s154
      %s157 = sphi 0, %s156
      %s171 = sphi 0, %s157
      %s175 = sphi 0, %s175
      %s177 = sphi 0, %s175
      %s178 = sphi 0, %s177
      %s192 = sphi 0, %s178
      %s196 = sphi 0, %s196
      %s198 = sphi 0, %s196
      %s199 = sphi 0, %s198
      %s213 = sphi 0, %s199
      %s217 = sphi 0, %s217
      %s219 = sphi 0, %s217
      %s220 = sphi 0, %s219
      %s234 = sphi 0, %s220
      %s238 = sphi 0, %s238
      %s240 = sphi 0, %s238
      %s241 = sphi 0, %s240
      %s255 = sphi 0, %s241
      %s259 = sphi 0, %s259
      %s261 = sphi 0, %s259
      %s262 = sphi 0, %s261
      %s276 = sphi 0, %s262
      %s280 = sphi 0, %s280
      %s282 = sphi 0, %s280
      %s283 = sphi 0, %s282
      %s297 = sphi 0, %s283
      %s303 = sphi 0, %s305
      %s306 = sphi 0, %s303
      %s307 = sphi 0, %s306
      %s323 = sphi 0, %s307
    $region4: #{_lambda_.3} parent=1 // loop_header_branch
      %24 = sbr.rel (%p22) target = $region8
    $region5: #{_lambda_.3} parent=1 // loop_body
      %s26 = ssub.s32 %s21, 1
      %s27 = ssub.s32 %s21, 2
      %s28 = sadd.s32 %s21, 1
      %s29 = ssub.s32 %s21, %s28
      %p30 = scmp.eq.s32.totalorder %s29, 0
      %s32 = sadd.s32 %s31, 1
      %s33 = scalar_select %p30, %s31, %s32
      %p36 = pneg %p30
      %p37 = scmp.eq.s32.totalorder %s21, 1
      %p38 = por %p36, %p37
      %p39 = scmp.ne.s32.totalorder %s31, %s34
      %p40 = scmp.eq.s32.totalorder %s21, 0
      %p41 = por %p39, %p40
      %p42 = scmp.ne.s32.totalorder %s31, %s34
      %p43 = scmp.eq.s32.totalorder %s26, 1
      %p44 = por %p42, %p43
      %p45 = scmp.ne.s32.totalorder %s34, %s35
      %p46 = scmp.eq.s32.totalorder %s26, 0
      %p47 = por %p45, %p46
      %p48 = scmp.ne.s32.totalorder %s34, %s35
      %p49 = scmp.eq.s32.totalorder %s27, 1
      %p50 = por %p48, %p49
      %p52 = scmp.ne.s32.totalorder %s35, %s51
      %p53 = scmp.eq.s32.totalorder %s27, 0
      %p54 = por %p52, %p53
      %s55 = ssub.s32 %s21, %s28
      %p56 = scmp.eq.s32.totalorder %s55, 0
      %s58 = sadd.s32 %s57, 1
      %s59 = scalar_select %p56, %s57, %s58
      %p62 = pneg %p56
      %p63 = scmp.eq.s32.totalorder %s21, 1
      %p64 = por %p62, %p63
      %p65 = scmp.ne.s32.totalorder %s57, %s60
      %p66 = scmp.eq.s32.totalorder %s21, 0
      %p67 = por %p65, %p66
      %p68 = scmp.ne.s32.totalorder %s57, %s60
      %p69 = scmp.eq.s32.totalorder %s26, 1
      %p70 = por %p68, %p69
      %p71 = scmp.ne.s32.totalorder %s60, %s61
      %p72 = scmp.eq.s32.totalorder %s26, 0
      %p73 = por %p71, %p72
      %p74 = scmp.ne.s32.totalorder %s60, %s61
      %p75 = scmp.eq.s32.totalorder %s27, 1
      %p76 = por %p74, %p75
      %p78 = scmp.ne.s32.totalorder %s61, %s77
      %p79 = scmp.eq.s32.totalorder %s27, 0
      %p80 = por %p78, %p79
      %s81 = ssub.s32 %s21, %s28
      %p82 = scmp.eq.s32.totalorder %s81, 0
      %s84 = sadd.s32 %s83, 1
      %s85 = scalar_select %p82, %s83, %s84
      %p88 = pneg %p82
      %p89 = scmp.eq.s32.totalorder %s21, 1
      %p90 = por %p88, %p89
      %p91 = scmp.ne.s32.totalorder %s83, %s86
      %p92 = scmp.eq.s32.totalorder %s21, 0
      %p93 = por %p91, %p92
      %p94 = scmp.ne.s32.totalorder %s83, %s86
      %p95 = scmp.eq.s32.totalorder %s26, 1
      %p96 = por %p94, %p95
      %p97 = scmp.ne.s32.totalorder %s86, %s87
      %p98 = scmp.eq.s32.totalorder %s26, 0
      %p99 = por %p97, %p98
      %p100 = scmp.ne.s32.totalorder %s86, %s87
      %p101 = scmp.eq.s32.totalorder %s27, 1
      %p102 = por %p100, %p101
      %p104 = scmp.ne.s32.totalorder %s87, %s103
      %p105 = scmp.eq.s32.totalorder %s27, 0
      %p106 = por %p104, %p105
      %s107 = ssub.s32 %s21, %s28
      %p108 = scmp.eq.s32.totalorder %s107, 0
      %s110 = sadd.s32 %s109, 1
      %s111 = scalar_select %p108, %s109, %s110
      %p114 = pneg %p108
      %p115 = scmp.eq.s32.totalorder %s21, 1
      %p116 = por %p114, %p115
      %p117 = scmp.ne.s32.totalorder %s109, %s112
      %p118 = scmp.eq.s32.totalorder %s21, 0
      %p119 = por %p117, %p118
      %p120 = scmp.ne.s32.totalorder %s109, %s112
      %p121 = scmp.eq.s32.totalorder %s26, 1
      %p122 = por %p120, %p121
      %p123 = scmp.ne.s32.totalorder %s112, %s113
      %p124 = scmp.eq.s32.totalorder %s26, 0
      %p125 = por %p123, %p124
      %p126 = scmp.ne.s32.totalorder %s112, %s113
      %p127 = scmp.eq.s32.totalorder %s27, 1
      %p128 = por %p126, %p127
      %p130 = scmp.ne.s32.totalorder %s113, %s129
      %p131 = scmp.eq.s32.totalorder %s27, 0
      %p132 = por %p130, %p131
      %s134 = sadd.s32 %s133, 1
      %p137 = scmp.eq.s32.totalorder %s21, 1
      %p138 = scmp.ne.s32.totalorder %s133, %s135
      %p139 = scmp.eq.s32.totalorder %s21, 0
      %p140 = por %p138, %p139
      %p141 = scmp.ne.s32.totalorder %s133, %s135
      %p142 = scmp.eq.s32.totalorder %s26, 1
      %p143 = por %p141, %p142
      %p144 = scmp.ne.s32.totalorder %s135, %s136
      %p145 = scmp.eq.s32.totalorder %s26, 0
      %p146 = por %p144, %p145
      %p147 = scmp.ne.s32.totalorder %s135, %s136
      %p148 = scmp.eq.s32.totalorder %s27, 1
      %p149 = por %p147, %p148
      %p151 = scmp.ne.s32.totalorder %s136, %s150
      %p152 = scmp.eq.s32.totalorder %s27, 0
      %p153 = por %p151, %p152
      %s155 = sadd.s32 %s154, 1
      %p158 = scmp.eq.s32.totalorder %s21, 1
      %p159 = scmp.ne.s32.totalorder %s154, %s156
      %p160 = scmp.eq.s32.totalorder %s21, 0
      %p161 = por %p159, %p160
      %p162 = scmp.ne.s32.totalorder %s154, %s156
      %p163 = scmp.eq.s32.totalorder %s26, 1
      %p164 = por %p162, %p163
      %p165 = scmp.ne.s32.totalorder %s156, %s157
      %p166 = scmp.eq.s32.totalorder %s26, 0
      %p167 = por %p165, %p166
      %p168 = scmp.ne.s32.totalorder %s156, %s157
      %p169 = scmp.eq.s32.totalorder %s27, 1
      %p170 = por %p168, %p169
      %p172 = scmp.ne.s32.totalorder %s157, %s171
      %p173 = scmp.eq.s32.totalorder %s27, 0
      %p174 = por %p172, %p173
      %s176 = sadd.s32 %s175, 1
      %p179 = scmp.eq.s32.totalorder %s21, 1
      %p180 = scmp.ne.s32.totalorder %s175, %s177
      %p181 = scmp.eq.s32.totalorder %s21, 0
      %p182 = por %p180, %p181
      %p183 = scmp.ne.s32.totalorder %s175, %s177
      %p184 = scmp.eq.s32.totalorder %s26, 1
      %p185 = por %p183, %p184
      %p186 = scmp.ne.s32.totalorder %s177, %s178
      %p187 = scmp.eq.s32.totalorder %s26, 0
      %p188 = por %p186, %p187
      %p189 = scmp.ne.s32.totalorder %s177, %s178
      %p190 = scmp.eq.s32.totalorder %s27, 1
      %p191 = por %p189, %p190
      %p193 = scmp.ne.s32.totalorder %s178, %s192
      %p194 = scmp.eq.s32.totalorder %s27, 0
      %p195 = por %p193, %p194
      %s197 = sadd.s32 %s196, 1
      %p200 = scmp.eq.s32.totalorder %s21, 1
      %p201 = scmp.ne.s32.totalorder %s196, %s198
      %p202 = scmp.eq.s32.totalorder %s21, 0
      %p203 = por %p201, %p202
      %p204 = scmp.ne.s32.totalorder %s196, %s198
      %p205 = scmp.eq.s32.totalorder %s26, 1
      %p206 = por %p204, %p205
      %p207 = scmp.ne.s32.totalorder %s198, %s199
      %p208 = scmp.eq.s32.totalorder %s26, 0
      %p209 = por %p207, %p208
      %p210 = scmp.ne.s32.totalorder %s198, %s199
      %p211 = scmp.eq.s32.totalorder %s27, 1
      %p212 = por %p210, %p211
      %p214 = scmp.ne.s32.totalorder %s199, %s213
      %p215 = scmp.eq.s32.totalorder %s27, 0
      %p216 = por %p214, %p215
      %s218 = sadd.s32 %s217, 1
      %p221 = scmp.eq.s32.totalorder %s21, 1
      %p222 = scmp.ne.s32.totalorder %s217, %s219
      %p223 = scmp.eq.s32.totalorder %s21, 0
      %p224 = por %p222, %p223
      %p225 = scmp.ne.s32.totalorder %s217, %s219
      %p226 = scmp.eq.s32.totalorder %s26, 1
      %p227 = por %p225, %p226
      %p228 = scmp.ne.s32.totalorder %s219, %s220
      %p229 = scmp.eq.s32.totalorder %s26, 0
      %p230 = por %p228, %p229
      %p231 = scmp.ne.s32.totalorder %s219, %s220
      %p232 = scmp.eq.s32.totalorder %s27, 1
      %p233 = por %p231, %p232
      %p235 = scmp.ne.s32.totalorder %s220, %s234
      %p236 = scmp.eq.s32.totalorder %s27, 0
      %p237 = por %p235, %p236
      %s239 = sadd.s32 %s238, 1
      %p242 = scmp.eq.s32.totalorder %s21, 1
      %p243 = scmp.ne.s32.totalorder %s238, %s240
      %p244 = scmp.eq.s32.totalorder %s21, 0
      %p245 = por %p243, %p244
      %p246 = scmp.ne.s32.totalorder %s238, %s240
      %p247 = scmp.eq.s32.totalorder %s26, 1
      %p248 = por %p246, %p247
      %p249 = scmp.ne.s32.totalorder %s240, %s241
      %p250 = scmp.eq.s32.totalorder %s26, 0
      %p251 = por %p249, %p250
      %p252 = scmp.ne.s32.totalorder %s240, %s241
      %p253 = scmp.eq.s32.totalorder %s27, 1
      %p254 = por %p252, %p253
      %p256 = scmp.ne.s32.totalorder %s241, %s255
      %p257 = scmp.eq.s32.totalorder %s27, 0
      %p258 = por %p256, %p257
      %s260 = sadd.s32 %s259, 1
      %p263 = scmp.eq.s32.totalorder %s21, 1
      %p264 = scmp.ne.s32.totalorder %s259, %s261
      %p265 = scmp.eq.s32.totalorder %s21, 0
      %p266 = por %p264, %p265
      %p267 = scmp.ne.s32.totalorder %s259, %s261
      %p268 = scmp.eq.s32.totalorder %s26, 1
      %p269 = por %p267, %p268
      %p270 = scmp.ne.s32.totalorder %s261, %s262
      %p271 = scmp.eq.s32.totalorder %s26, 0
      %p272 = por %p270, %p271
      %p273 = scmp.ne.s32.totalorder %s261, %s262
      %p274 = scmp.eq.s32.totalorder %s27, 1
      %p275 = por %p273, %p274
      %p277 = scmp.ne.s32.totalorder %s262, %s276
      %p278 = scmp.eq.s32.totalorder %s27, 0
      %p279 = por %p277, %p278
      %s281 = sadd.s32 %s280, 1
      %p284 = scmp.eq.s32.totalorder %s21, 1
      %p285 = scmp.ne.s32.totalorder %s280, %s282
      %p286 = scmp.eq.s32.totalorder %s21, 0
      %p287 = por %p285, %p286
      %p288 = scmp.ne.s32.totalorder %s280, %s282
      %p289 = scmp.eq.s32.totalorder %s26, 1
      %p290 = por %p288, %p289
      %p291 = scmp.ne.s32.totalorder %s282, %s283
      %p292 = scmp.eq.s32.totalorder %s26, 0
      %p293 = por %p291, %p292
      %p294 = scmp.ne.s32.totalorder %s282, %s283
      %p295 = scmp.eq.s32.totalorder %s27, 1
      %p296 = por %p294, %p295
      %p298 = scmp.ne.s32.totalorder %s283, %s297
      %p299 = scmp.eq.s32.totalorder %s27, 0
      %p300 = por %p298, %p299
      %s301 = ssub.s32 %s21, %s28
      %p302 = scmp.eq.s32.totalorder %s301, 0
      %s304 = sadd.s32 %s303, 1
      %s305 = scalar_select %p302, %s303, %s304
      %p308 = pneg %p302
      %p309 = scmp.eq.s32.totalorder %s21, 1
      %p310 = por %p308, %p309
      %p311 = scmp.ne.s32.totalorder %s303, %s306
      %p312 = scmp.eq.s32.totalorder %s21, 0
      %p313 = por %p311, %p312
      %p314 = scmp.ne.s32.totalorder %s303, %s306
      %p315 = scmp.eq.s32.totalorder %s26, 1
      %p316 = por %p314, %p315
      %p317 = scmp.ne.s32.totalorder %s306, %s307
      %p318 = scmp.eq.s32.totalorder %s26, 0
      %p319 = por %p317, %p318
      %p320 = scmp.ne.s32.totalorder %s306, %s307
      %p321 = scmp.eq.s32.totalorder %s27, 1
      %p322 = por %p320, %p321
      %p324 = scmp.ne.s32.totalorder %s307, %s323
      %p325 = scmp.eq.s32.totalorder %s27, 0
      %p326 = por %p324, %p325
      %p327 = scmp.le.s32.totalorder 1, %s21
      %p328 = scmp.lt.s32.totalorder %s21, 3
      %p329 = pnand %p327, %p328
      %p330 = pneg %p329
      // Predicated region
      $region9: #{_lambda_.3} parent=5 // pred_check
        _
      $region10: #{_lambda_.3} parent=5 // pred_check_branch
        %332 = sbr.rel (%p329) target = $region12
      $region11: #{_lambda_.3} parent=5 // pred_region
        %s333 = ssub.s32 %s21, 1
        // Predicated region
        $region13: #{_lambda_.3} parent=11 // pred_check
          %p334 = pneg %p146
        $region14: #{_lambda_.3} parent=11 // pred_check_branch
          %336 = sbr.rel (%p334) target = $region16
        $region15: #{_lambda_.3} parent=11 // pred_region
          _
        $region16: #{_lambda_.3} parent=11 // pred_fallthru
          _
        // Predicated region
        $region17: #{_lambda_.3} parent=11 // pred_check
          %p337 = pneg %p167
        $region18: #{_lambda_.3} parent=11 // pred_check_branch
          %339 = sbr.rel (%p337) target = $region20
        $region19: #{_lambda_.3} parent=11 // pred_region
          _
        $region20: #{_lambda_.3} parent=11 // pred_fallthru
          _
        // Predicated region
        $region21: #{_lambda_.3} parent=11 // pred_check
          %p340 = pneg %p188
        $region22: #{_lambda_.3} parent=11 // pred_check_branch
          %342 = sbr.rel (%p340) target = $region24
        $region23: #{_lambda_.3} parent=11 // pred_region
          _
        $region24: #{_lambda_.3} parent=11 // pred_fallthru
          _
        // Predicated region
        $region25: #{_lambda_.3} parent=11 // pred_check
          %p343 = pneg %p209
        $region26: #{_lambda_.3} parent=11 // pred_check_branch
          %345 = sbr.rel (%p343) target = $region28
        $region27: #{_lambda_.3} parent=11 // pred_region
          _
        $region28: #{_lambda_.3} parent=11 // pred_fallthru
          _
        // Predicated region
        $region29: #{_lambda_.3} parent=11 // pred_check
          %p346 = pneg %p230
        $region30: #{_lambda_.3} parent=11 // pred_check_branch
          %348 = sbr.rel (%p346) target = $region32
        $region31: #{_lambda_.3} parent=11 // pred_region
          _
        $region32: #{_lambda_.3} parent=11 // pred_fallthru
          _
        // Predicated region
        $region33: #{_lambda_.3} parent=11 // pred_check
          %p349 = pneg %p251
        $region34: #{_lambda_.3} parent=11 // pred_check_branch
          %351 = sbr.rel (%p349) target = $region36
        $region35: #{_lambda_.3} parent=11 // pred_region
          _
        $region36: #{_lambda_.3} parent=11 // pred_fallthru
          _
        // Predicated region
        $region37: #{_lambda_.3} parent=11 // pred_check
          %p352 = pneg %p272
        $region38: #{_lambda_.3} parent=11 // pred_check_branch
          %354 = sbr.rel (%p352) target = $region40
        $region39: #{_lambda_.3} parent=11 // pred_region
          _
        $region40: #{_lambda_.3} parent=11 // pred_fallthru
          _
        // Predicated region
        $region41: #{_lambda_.3} parent=11 // pred_check
          %p355 = pneg %p293
        $region42: #{_lambda_.3} parent=11 // pred_check_branch
          %357 = sbr.rel (%p355) target = $region44
        $region43: #{_lambda_.3} parent=11 // pred_region
          _
        $region44: #{_lambda_.3} parent=11 // pred_fallthru
          _
      $region12: #{_lambda_.3} parent=5 // pred_fallthru
        _
      %p358 = scmp.lt.s32.totalorder %s21, 2
      // Predicated region
      $region45: #{_lambda_.3} parent=5 // pred_check
        %p359 = pneg %p358
      $region46: #{_lambda_.3} parent=5 // pred_check_branch
        %361 = sbr.rel (%p359) target = $region48
      $region47: #{_lambda_.3} parent=5 // pred_region
        // Predicated region
        $region49: #{_lambda_.3} parent=47 // pred_check
          %p362 = pneg %p41
        $region50: #{_lambda_.3} parent=47 // pred_check_branch
          %364 = sbr.rel (%p362) target = $region52
        $region51: #{_lambda_.3} parent=47 // pred_region
          %p365 = scmp.lt.s32.totalorder %s21, 1
          %s366 = scalar_select %p365, %s21, 1
          %s367 = smul.addr %s366, 8
          %s368 = smul.addr %s367, 4
          %s369 = scalar_lea.vmem %s0, %s368
        $region52: #{_lambda_.3} parent=47 // pred_fallthru
          _
        // Predicated region
        $region53: #{_lambda_.3} parent=47 // pred_check
          %p370 = pneg %p67
        $region54: #{_lambda_.3} parent=47 // pred_check_branch
          %372 = sbr.rel (%p370) target = $region56
        $region55: #{_lambda_.3} parent=47 // pred_region
          %p373 = scmp.lt.s32.totalorder %s21, 1
          %s374 = scalar_select %p373, %s21, 1
          %s375 = smul.addr %s374, 8
          %s376 = smul.addr %s375, 4
          %s377 = scalar_lea.vmem %s1, %s376
        $region56: #{_lambda_.3} parent=47 // pred_fallthru
          _
        // Predicated region
        $region57: #{_lambda_.3} parent=47 // pred_check
          %p378 = pneg %p93
        $region58: #{_lambda_.3} parent=47 // pred_check_branch
          %380 = sbr.rel (%p378) target = $region60
        $region59: #{_lambda_.3} parent=47 // pred_region
          %p381 = scmp.lt.s32.totalorder %s21, 1
          %s382 = scalar_select %p381, %s21, 1
          %s383 = smul.addr %s382, 8
          %s384 = smul.addr %s383, 4
          %s385 = scalar_lea.vmem %s2, %s384
        $region60: #{_lambda_.3} parent=47 // pred_fallthru
          _
        // Predicated region
        $region61: #{_lambda_.3} parent=47 // pred_check
          %p386 = pneg %p119
        $region62: #{_lambda_.3} parent=47 // pred_check_branch
          %388 = sbr.rel (%p386) target = $region64
        $region63: #{_lambda_.3} parent=47 // pred_region
          %p389 = scmp.lt.s32.totalorder %s21, 1
          %s390 = scalar_select %p389, %s21, 1
          %s391 = smul.addr %s390, 8
          %s392 = smul.addr %s391, 4
          %s393 = scalar_lea.vmem %s3, %s392
        $region64: #{_lambda_.3} parent=47 // pred_fallthru
          _
      $region48: #{_lambda_.3} parent=5 // pred_fallthru
        _
      %p394 = scmp.le.s32.totalorder 1, %s21
      %p395 = scmp.lt.s32.totalorder %s21, 3
      %p396 = pnand %p394, %p395
      %p397 = pneg %p396
      // Predicated region
      $region65: #{_lambda_.3} parent=5 // pred_check
        _
      $region66: #{_lambda_.3} parent=5 // pred_check_branch
        %399 = sbr.rel (%p396) target = $region68
      $region67: #{_lambda_.3} parent=5 // pred_region
        %s400 = ssub.s32 %s21, 1
        %p401 = scmp.lt.s32.totalorder %s26, 1
        %s402 = scalar_select %p401, %s26, 1
        %s403 = smul.addr %s402, 8
        %s404 = smul.addr %s403, 4
        %s405 = scalar_lea.vmem %s0, %s404
        %p406 = pneg %p47
        %p407 = pneg %p44
        %p408 = scmp.lt.s32.totalorder %s26, 1
        %s409 = scalar_select %p408, %s26, 1
        %s410 = smul.addr %s409, 8
        %s411 = smul.addr %s410, 4
        %s412 = scalar_lea.vmem %s1, %s411
        %p413 = pneg %p73
        %p414 = pneg %p70
        %p415 = scmp.lt.s32.totalorder %s26, 1
        %s416 = scalar_select %p415, %s26, 1
        %s417 = smul.addr %s416, 8
        %s418 = smul.addr %s417, 4
        %s419 = scalar_lea.vmem %s2, %s418
        %p420 = pneg %p99
        %p421 = pneg %p96
        %p422 = scmp.lt.s32.totalorder %s26, 1
        %s423 = scalar_select %p422, %s26, 1
        %s424 = smul.addr %s423, 8
        %s425 = smul.addr %s424, 4
        %s426 = scalar_lea.vmem %s3, %s425
        %p427 = pneg %p125
        %p428 = pneg %p122
        %p429 = pneg %p146
        %p430 = pneg %p143
        %p431 = pneg %p167
        %p432 = pneg %p164
        %p433 = pneg %p188
        %p434 = pneg %p185
        %p435 = pneg %p209
        %p436 = pneg %p206
        %p437 = pneg %p230
        %p438 = pneg %p227
        %p439 = pneg %p251
        %p440 = pneg %p248
        %p441 = pneg %p272
        %p442 = pneg %p269
        %p443 = pneg %p293
        %p444 = pneg %p290
        %p445 = pneg %p319
        %p446 = pneg %p316
        %s447 = sand.u32 %s306, 1
        %s448 = scalar_lea.sflag [#allocation3], %s447
        %s449 = sand.u32 %s306, 1
        %s450 = scalar_lea.vmem [#allocation2], %s449
        %p451 = scmp.lt.s32.totalorder %s26, 1
        %s452 = scalar_select %p451, %s26, 1
        %s453 = smul.addr %s452, 8
        %s454 = smul.addr %s453, 4
        %s455 = scalar_lea.vmem %s0, %s454
        %p456 = scmp.lt.s32.totalorder %s26, 1
        %s457 = scalar_select %p456, %s26, 1
        %s458 = smul.addr %s457, 8
        %s459 = smul.addr %s458, 4
        %s460 = scalar_lea.vmem %s1, %s459
        %p461 = scmp.lt.s32.totalorder %s26, 1
        %s462 = scalar_select %p461, %s26, 1
        %s463 = smul.addr %s462, 8
        %s464 = smul.addr %s463, 4
        %s465 = scalar_lea.vmem %s2, %s464
        %p466 = scmp.lt.s32.totalorder %s26, 1
        %s467 = scalar_select %p466, %s26, 1
        %s468 = smul.addr %s467, 8
        %s469 = smul.addr %s468, 4
        %s470 = scalar_lea.vmem %s3, %s469
        %v472 = vld [vmem:[%s4] sm:$0xf]
        %v473 = vld [vmem:[%s4 + $0x4] sm:$0xf]
        %v474 = vld [vmem:[%s4 + $0x8] sm:$0xf]
        %v475 = vld [vmem:[%s4 + $0xc] sm:$0xf]
        %v476 = vld [vmem:[%s4 + $0x10] sm:$0xf]
        %v477 = vld [vmem:[%s4 + $0x14] sm:$0xf]
        %v478 = vld [vmem:[%s4 + $0x18] sm:$0xf]
        %v479 = vld [vmem:[%s4 + $0x1c] sm:$0xf]
        %v480 = vld [vmem:[%s4 + $0x20] sm:$0xf]
        %v481 = vld [vmem:[%s4 + $0x24] sm:$0xf]
        %v482 = vld [vmem:[%s4 + $0x28] sm:$0xf]
        %v483 = vld [vmem:[%s4 + $0x2c] sm:$0xf]
        %v484 = vld [vmem:[%s4 + $0x30] sm:$0xf]
        %v485 = vld [vmem:[%s4 + $0x34] sm:$0xf]
        %v486 = vld [vmem:[%s4 + $0x38] sm:$0xf]
        %v487 = vld [vmem:[%s4 + $0x3c] sm:$0xf]
        %v488 = vld [vmem:[%s4 + $0x40] sm:$0xf]
        %v489 = vld [vmem:[%s4 + $0x44] sm:$0xf]
        %v490 = vld [vmem:[%s4 + $0x48] sm:$0xf]
        %v491 = vld [vmem:[%s4 + $0x4c] sm:$0xf]
        %v492 = vld [vmem:[%s4 + $0x50] sm:$0xf]
        %v493 = vld [vmem:[%s4 + $0x54] sm:$0xf]
        %v494 = vld [vmem:[%s4 + $0x58] sm:$0xf]
        %v495 = vld [vmem:[%s4 + $0x5c] sm:$0xf]
        %v496 = vld [vmem:[%s4 + $0x60] sm:$0xf]
        %v497 = vld [vmem:[%s4 + $0x64] sm:$0xf]
        %v498 = vld [vmem:[%s4 + $0x68] sm:$0xf]
        %v499 = vld [vmem:[%s4 + $0x6c] sm:$0xf]
        %v500 = vld [vmem:[%s4 + $0x70] sm:$0xf]
        %v501 = vld [vmem:[%s4 + $0x74] sm:$0xf]
        %v502 = vld [vmem:[%s4 + $0x78] sm:$0xf]
        %v503 = vld [vmem:[%s4 + $0x7c] sm:$0xf]
        %v504 = vld [vmem:[%s5] sm:$0x1]
        %v506 = vlaneseq
        %v507 = vshrl.u32 %v506, 7
        %v508 = vsub.s32 0, %v507
        %v509 = vrot.slane %v504, %v508
        %v511 = vld [vmem:[%s455] sm:$0xff]
        %v512 = vld [vmem:[%s455 + $0x8] sm:$0xff]
        %v513 = vld [vmem:[%s455 + $0x10] sm:$0xff]
        %v514 = vld [vmem:[%s455 + $0x18] sm:$0x11]
        %v519 = vunpack.c.l.b16 %v511
        %v520 = vunpack.c.h.b16 %v511
        %v521 = vunpack.c.l.b16 %v512
        %v522 = vunpack.c.h.b16 %v512
        %v523 = vunpack.c.l.b16 %v513
        %v524 = vunpack.c.h.b16 %v513
        %v525 = vunpack.c.l.b16 %v514
        %v526 = vunpack.c.h.b16 %v514
        %v527 = vpack.c.b16 %v521, %v519
        %v528 = vpack.c.b16 %v522, %v520
        %v529 = vpack.c.b16 %v525, %v523
        %v530 = vpack.c.b16 %v526, %v524
        %v567 = vunpack.c.l.b16 %v472
        %v568 = vunpack.c.l.b16 %v473
        %v569 = vunpack.c.l.b16 %v474
        %v570 = vunpack.c.l.b16 %v475
        %v571 = vunpack.c.l.b16 %v476
        %v572 = vunpack.c.l.b16 %v477
        %v573 = vunpack.c.l.b16 %v478
        %v574 = vunpack.c.l.b16 %v479
        %v575 = vunpack.c.l.b16 %v480
        %v576 = vunpack.c.l.b16 %v481
        %v577 = vunpack.c.l.b16 %v482
        %v578 = vunpack.c.l.b16 %v483
        %v579 = vunpack.c.l.b16 %v484
        %v580 = vunpack.c.l.b16 %v485
        %v581 = vunpack.c.l.b16 %v486
        %v582 = vunpack.c.l.b16 %v487
        %v583 = vunpack.c.l.b16 %v488
        %v584 = vunpack.c.l.b16 %v489
        %v585 = vunpack.c.l.b16 %v490
        %v586 = vunpack.c.l.b16 %v491
        %v587 = vunpack.c.l.b16 %v492
        %v588 = vunpack.c.l.b16 %v493
        %v589 = vunpack.c.l.b16 %v494
        %v590 = vunpack.c.l.b16 %v495
        %v591 = vunpack.c.l.b16 %v496
        %v592 = vunpack.c.l.b16 %v497
        %v593 = vunpack.c.l.b16 %v498
        %v594 = vunpack.c.l.b16 %v499
        %v595 = vunpack.c.l.b16 %v500
        %v596 = vunpack.c.l.b16 %v501
        %v597 = vunpack.c.l.b16 %v502
        %v598 = vunpack.c.l.b16 %v503
        %v599 = vpack.c.b16 %v568, %v567
        %v600 = vpack.c.b16 %v570, %v569
        %v601 = vpack.c.b16 %v572, %v571
        %v602 = vpack.c.b16 %v574, %v573
        %v603 = vpack.c.b16 %v576, %v575
        %v604 = vpack.c.b16 %v578, %v577
        %v605 = vpack.c.b16 %v580, %v579
        %v606 = vpack.c.b16 %v582, %v581
        %v607 = vpack.c.b16 %v584, %v583
        %v608 = vpack.c.b16 %v586, %v585
        %v609 = vpack.c.b16 %v588, %v587
        %v610 = vpack.c.b16 %v590, %v589
        %v611 = vpack.c.b16 %v592, %v591
        %v612 = vpack.c.b16 %v594, %v593
        %v613 = vpack.c.b16 %v596, %v595
        %v614 = vpack.c.b16 %v598, %v597
        %631 = vmatprep.subr.bf16.mxu0 0
        %632 = vmatpush1.bf16.msra.mxu0 %v606
        %633 = vmatprep.subr.bf16.mxu0 0
        %634 = vmatpush1.bf16.msra.mxu0 %v605
        %635 = vmatprep.subr.bf16.mxu0 0
        %636 = vmatpush1.bf16.msra.mxu0 %v604
        %637 = vmatprep.subr.bf16.mxu0 0
        %638 = vmatpush1.bf16.msra.mxu0 %v603
        %639 = vmatprep.subr.bf16.mxu0 0
        %640 = vmatpush1.bf16.msra.mxu0 %v602
        %641 = vmatprep.subr.bf16.mxu0 0
        %642 = vmatpush1.bf16.msra.mxu0 %v601
        %643 = vmatprep.subr.bf16.mxu0 0
        %644 = vmatpush1.bf16.msra.mxu0 %v600
        %645 = vmatprep.subr.bf16.mxu0 0
        %646 = vmatpush1.bf16.msra.mxu0 %v599
        %647 = vmatprep.subr.bf16.mxu0 0
        %648 = vmatpush2.bf16.msra.mxu0 %v614
        %649 = vmatprep.subr.bf16.mxu0 0
        %650 = vmatpush2.bf16.msra.mxu0 %v613
        %651 = vmatprep.subr.bf16.mxu0 0
        %652 = vmatpush2.bf16.msra.mxu0 %v612
        %653 = vmatprep.subr.bf16.mxu0 0
        %654 = vmatpush2.bf16.msra.mxu0 %v611
        %655 = vmatprep.subr.bf16.mxu0 0
        %656 = vmatpush2.bf16.msra.mxu0 %v610
        %657 = vmatprep.subr.bf16.mxu0 0
        %658 = vmatpush2.bf16.msra.mxu0 %v609
        %659 = vmatprep.subr.bf16.mxu0 0
        %660 = vmatpush2.bf16.msra.mxu0 %v608
        %661 = vmatprep.subr.bf16.mxu0 0
        %662 = vmatpush2.bf16.msra.mxu0 %v607
        %663 = vmatprep.mubr.bf16.mxu0 %v528
        %664 = vmatmul.mubr.bf16.gmra.mxu0 %v527
        %v665 = vpop.f32.mrf.mxu0
        %v666 = vadd.f32 %v509, %v665
        %v667 = vpop.f32.mrf.mxu0
        %v668 = vpop.f32.mrf.mxu0
        %v669 = vadd.f32 %v509, %v668
        %v670 = vpop.f32.mrf.mxu0
        %671 = vmatprep.mubr.bf16.mxu0 %v530
        %672 = vmatmul.mubr.bf16.gmra.mxu0 %v529
        %v673 = vpop.f32.mrf.mxu0
        %v674 = vadd.f32 %v509, %v673
        %v675 = vpop.f32.mrf.mxu0
        %v676 = vpop.f32.mrf.mxu0
        %v677 = vadd.f32 %v509, %v676
        %v678 = vpop.f32.mrf.mxu0
        %679 = vdwg.mxu0
        %v680 = vmax.f32 %v666, 0.0
        %v681 = vmax.f32 %v669, 0.0
        %v682 = vmax.f32 %v674, 0.0
        %v683 = vmax.f32 %v677, 0.0
        %v684 = vld [vmem:[%s460] sm:$0xff]
        %v685 = vld [vmem:[%s460 + $0x8] sm:$0xff]
        %v686 = vld [vmem:[%s460 + $0x10] sm:$0xff]
        %v687 = vld [vmem:[%s460 + $0x18] sm:$0x11]
        %v692 = vunpack.c.l.b16 %v684
        %v693 = vunpack.c.h.b16 %v684
        %v694 = vunpack.c.l.b16 %v685
        %v695 = vunpack.c.h.b16 %v685
        %v696 = vunpack.c.l.b16 %v686
        %v697 = vunpack.c.h.b16 %v686
        %v698 = vunpack.c.l.b16 %v687
        %v699 = vunpack.c.h.b16 %v687
        %v700 = vpack.c.b16 %v694, %v692
        %v701 = vpack.c.b16 %v695, %v693
        %v702 = vpack.c.b16 %v698, %v696
        %v703 = vpack.c.b16 %v699, %v697
        %708 = vmatprep.subr.bf16.mxu0 0
        %709 = vmatpush1.bf16.msra.mxu0 %v606
        %710 = vmatprep.subr.bf16.mxu0 0
        %711 = vmatpush1.bf16.msra.mxu0 %v605
        %712 = vmatprep.subr.bf16.mxu0 0
        %713 = vmatpush1.bf16.msra.mxu0 %v604
        %714 = vmatprep.subr.bf16.mxu0 0
        %715 = vmatpush1.bf16.msra.mxu0 %v603
        %716 = vmatprep.subr.bf16.mxu0 0
        %717 = vmatpush1.bf16.msra.mxu0 %v602
        %718 = vmatprep.subr.bf16.mxu0 0
        %719 = vmatpush1.bf16.msra.mxu0 %v601
        %720 = vmatprep.subr.bf16.mxu0 0
        %721 = vmatpush1.bf16.msra.mxu0 %v600
        %722 = vmatprep.subr.bf16.mxu0 0
        %723 = vmatpush1.bf16.msra.mxu0 %v599
        %724 = vmatprep.subr.bf16.mxu0 0
        %725 = vmatpush2.bf16.msra.mxu0 %v614
        %726 = vmatprep.subr.bf16.mxu0 0
        %727 = vmatpush2.bf16.msra.mxu0 %v613
        %728 = vmatprep.subr.bf16.mxu0 0
        %729 = vmatpush2.bf16.msra.mxu0 %v612
        %730 = vmatprep.subr.bf16.mxu0 0
        %731 = vmatpush2.bf16.msra.mxu0 %v611
        %732 = vmatprep.subr.bf16.mxu0 0
        %733 = vmatpush2.bf16.msra.mxu0 %v610
        %734 = vmatprep.subr.bf16.mxu0 0
        %735 = vmatpush2.bf16.msra.mxu0 %v609
        %736 = vmatprep.subr.bf16.mxu0 0
        %737 = vmatpush2.bf16.msra.mxu0 %v608
        %738 = vmatprep.subr.bf16.mxu0 0
        %739 = vmatpush2.bf16.msra.mxu0 %v607
        %740 = vmatprep.mubr.bf16.mxu0 %v701
        %741 = vmatmul.mubr.bf16.gmra.mxu0 %v700
        %v742 = vpop.f32.mrf.mxu0
        %v743 = vadd.f32 %v509, %v742
        %v744 = vpop.f32.mrf.mxu0
        %v745 = vpop.f32.mrf.mxu0
        %v746 = vadd.f32 %v509, %v745
        %v747 = vpop.f32.mrf.mxu0
        %748 = vmatprep.mubr.bf16.mxu0 %v703
        %749 = vmatmul.mubr.bf16.gmra.mxu0 %v702
        %v750 = vpop.f32.mrf.mxu0
        %v751 = vadd.f32 %v509, %v750
        %v752 = vpop.f32.mrf.mxu0
        %v753 = vpop.f32.mrf.mxu0
        %v754 = vadd.f32 %v509, %v753
        %v755 = vpop.f32.mrf.mxu0
        %756 = vdwg.mxu0
        %v757 = vmax.f32 %v743, 0.0
        %v758 = vmax.f32 %v746, 0.0
        %v759 = vmax.f32 %v751, 0.0
        %v760 = vmax.f32 %v754, 0.0
        %v761 = vmax.f32 %v680, %v757
        %v762 = vmax.f32 %v681, %v758
        %v763 = vmax.f32 %v682, %v759
        %v764 = vmax.f32 %v683, %v760
        %v765 = vld [vmem:[%s465] sm:$0xff]
        %v766 = vld [vmem:[%s465 + $0x8] sm:$0xff]
        %v767 = vld [vmem:[%s465 + $0x10] sm:$0xff]
        %v768 = vld [vmem:[%s465 + $0x18] sm:$0x11]
        %v773 = vunpack.c.l.b16 %v765
        %v774 = vunpack.c.h.b16 %v765
        %v775 = vunpack.c.l.b16 %v766
        %v776 = vunpack.c.h.b16 %v766
        %v777 = vunpack.c.l.b16 %v767
        %v778 = vunpack.c.h.b16 %v767
        %v779 = vunpack.c.l.b16 %v768
        %v780 = vunpack.c.h.b16 %v768
        %v781 = vpack.c.b16 %v775, %v773
        %v782 = vpack.c.b16 %v776, %v774
        %v783 = vpack.c.b16 %v779, %v777
        %v784 = vpack.c.b16 %v780, %v778
        %789 = vmatprep.subr.bf16.mxu0 0
        %790 = vmatpush1.bf16.msra.mxu0 %v606
        %791 = vmatprep.subr.bf16.mxu0 0
        %792 = vmatpush1.bf16.msra.mxu0 %v605
        %793 = vmatprep.subr.bf16.mxu0 0
        %794 = vmatpush1.bf16.msra.mxu0 %v604
        %795 = vmatprep.subr.bf16.mxu0 0
        %796 = vmatpush1.bf16.msra.mxu0 %v603
        %797 = vmatprep.subr.bf16.mxu0 0
        %798 = vmatpush1.bf16.msra.mxu0 %v602
        %799 = vmatprep.subr.bf16.mxu0 0
        %800 = vmatpush1.bf16.msra.mxu0 %v601
        %801 = vmatprep.subr.bf16.mxu0 0
        %802 = vmatpush1.bf16.msra.mxu0 %v600
        %803 = vmatprep.subr.bf16.mxu0 0
        %804 = vmatpush1.bf16.msra.mxu0 %v599
        %805 = vmatprep.subr.bf16.mxu0 0
        %806 = vmatpush2.bf16.msra.mxu0 %v614
        %807 = vmatprep.subr.bf16.mxu0 0
        %808 = vmatpush2.bf16.msra.mxu0 %v613
        %809 = vmatprep.subr.bf16.mxu0 0
        %810 = vmatpush2.bf16.msra.mxu0 %v612
        %811 = vmatprep.subr.bf16.mxu0 0
        %812 = vmatpush2.bf16.msra.mxu0 %v611
        %813 = vmatprep.subr.bf16.mxu0 0
        %814 = vmatpush2.bf16.msra.mxu0 %v610
        %815 = vmatprep.subr.bf16.mxu0 0
        %816 = vmatpush2.bf16.msra.mxu0 %v609
        %817 = vmatprep.subr.bf16.mxu0 0
        %818 = vmatpush2.bf16.msra.mxu0 %v608
        %819 = vmatprep.subr.bf16.mxu0 0
        %820 = vmatpush2.bf16.msra.mxu0 %v607
        %821 = vmatprep.mubr.bf16.mxu0 %v782
        %822 = vmatmul.mubr.bf16.gmra.mxu0 %v781
        %v823 = vpop.f32.mrf.mxu0
        %v824 = vadd.f32 %v509, %v823
        %v825 = vpop.f32.mrf.mxu0
        %v826 = vpop.f32.mrf.mxu0
        %v827 = vadd.f32 %v509, %v826
        %v828 = vpop.f32.mrf.mxu0
        %829 = vmatprep.mubr.bf16.mxu0 %v784
        %830 = vmatmul.mubr.bf16.gmra.mxu0 %v783
        %v831 = vpop.f32.mrf.mxu0
        %v832 = vadd.f32 %v509, %v831
        %v833 = vpop.f32.mrf.mxu0
        %v834 = vpop.f32.mrf.mxu0
        %v835 = vadd.f32 %v509, %v834
        %v836 = vpop.f32.mrf.mxu0
        %837 = vdwg.mxu0
        %v838 = vmax.f32 %v824, 0.0
        %v839 = vmax.f32 %v827, 0.0
        %v840 = vmax.f32 %v832, 0.0
        %v841 = vmax.f32 %v835, 0.0
        %v842 = vld [vmem:[%s470] sm:$0xff]
        %v843 = vld [vmem:[%s470 + $0x8] sm:$0xff]
        %v844 = vld [vmem:[%s470 + $0x10] sm:$0xff]
        %v845 = vld [vmem:[%s470 + $0x18] sm:$0x11]
        %v850 = vunpack.c.l.b16 %v842
        %v851 = vunpack.c.h.b16 %v842
        %v852 = vunpack.c.l.b16 %v843
        %v853 = vunpack.c.h.b16 %v843
        %v854 = vunpack.c.l.b16 %v844
        %v855 = vunpack.c.h.b16 %v844
        %v856 = vunpack.c.l.b16 %v845
        %v857 = vunpack.c.h.b16 %v845
        %v858 = vpack.c.b16 %v852, %v850
        %v859 = vpack.c.b16 %v853, %v851
        %v860 = vpack.c.b16 %v856, %v854
        %v861 = vpack.c.b16 %v857, %v855
        %866 = vmatprep.subr.bf16.mxu0 0
        %867 = vmatpush1.bf16.msra.mxu0 %v606
        %868 = vmatprep.subr.bf16.mxu0 0
        %869 = vmatpush1.bf16.msra.mxu0 %v605
        %870 = vmatprep.subr.bf16.mxu0 0
        %871 = vmatpush1.bf16.msra.mxu0 %v604
        %872 = vmatprep.subr.bf16.mxu0 0
        %873 = vmatpush1.bf16.msra.mxu0 %v603
        %874 = vmatprep.subr.bf16.mxu0 0
        %875 = vmatpush1.bf16.msra.mxu0 %v602
        %876 = vmatprep.subr.bf16.mxu0 0
        %877 = vmatpush1.bf16.msra.mxu0 %v601
        %878 = vmatprep.subr.bf16.mxu0 0
        %879 = vmatpush1.bf16.msra.mxu0 %v600
        %880 = vmatprep.subr.bf16.mxu0 0
        %881 = vmatpush1.bf16.msra.mxu0 %v599
        %882 = vmatprep.subr.bf16.mxu0 0
        %883 = vmatpush2.bf16.msra.mxu0 %v614
        %884 = vmatprep.subr.bf16.mxu0 0
        %885 = vmatpush2.bf16.msra.mxu0 %v613
        %886 = vmatprep.subr.bf16.mxu0 0
        %887 = vmatpush2.bf16.msra.mxu0 %v612
        %888 = vmatprep.subr.bf16.mxu0 0
        %889 = vmatpush2.bf16.msra.mxu0 %v611
        %890 = vmatprep.subr.bf16.mxu0 0
        %891 = vmatpush2.bf16.msra.mxu0 %v610
        %892 = vmatprep.subr.bf16.mxu0 0
        %893 = vmatpush2.bf16.msra.mxu0 %v609
        %894 = vmatprep.subr.bf16.mxu0 0
        %895 = vmatpush2.bf16.msra.mxu0 %v608
        %896 = vmatprep.subr.bf16.mxu0 0
        %897 = vmatpush2.bf16.msra.mxu0 %v607
        %898 = vmatprep.mubr.bf16.mxu0 %v859
        %899 = vmatmul.mubr.bf16.gmra.mxu0 %v858
        %v900 = vpop.f32.mrf.mxu0
        %v901 = vadd.f32 %v509, %v900
        %v902 = vpop.f32.mrf.mxu0
        %v903 = vpop.f32.mrf.mxu0
        %v904 = vadd.f32 %v509, %v903
        %v905 = vpop.f32.mrf.mxu0
        %906 = vmatprep.mubr.bf16.mxu0 %v861
        %907 = vmatmul.mubr.bf16.gmra.mxu0 %v860
        %v908 = vpop.f32.mrf.mxu0
        %v909 = vadd.f32 %v509, %v908
        %v910 = vpop.f32.mrf.mxu0
        %v911 = vpop.f32.mrf.mxu0
        %v912 = vadd.f32 %v509, %v911
        %v913 = vpop.f32.mrf.mxu0
        %914 = vdwg.mxu0
        %v915 = vmax.f32 %v901, 0.0
        %v916 = vmax.f32 %v904, 0.0
        %v917 = vmax.f32 %v909, 0.0
        %v918 = vmax.f32 %v912, 0.0
        %v919 = vmax.f32 %v838, %v915
        %v920 = vmax.f32 %v839, %v916
        %v921 = vmax.f32 %v840, %v917
        %v922 = vmax.f32 %v841, %v918
        %v923 = vmax.f32 %v761, %v919
        %v924 = vmax.f32 %v762, %v920
        %v925 = vmax.f32 %v763, %v921
        %v926 = vmax.f32 %v764, %v922
        %v927 = vld [vmem:[%s7] sm:$0x1]
        %v928 = vpack.c.bf16 %v923, %v923
        %v929 = vld [vmem:[%s6] sm:$0xf]
        %v930 = vld [vmem:[%s6 + $0x4] sm:$0xf]
        %v931 = vld [vmem:[%s6 + $0x8] sm:$0xf]
        %v932 = vld [vmem:[%s6 + $0xc] sm:$0xf]
        %v933 = vld [vmem:[%s6 + $0x10] sm:$0xf]
        %v934 = vld [vmem:[%s6 + $0x14] sm:$0xf]
        %v935 = vld [vmem:[%s6 + $0x18] sm:$0xf]
        %v936 = vld [vmem:[%s6 + $0x1c] sm:$0xf]
        %v937 = vld [vmem:[%s6 + $0x20] sm:$0xf]
        %v938 = vld [vmem:[%s6 + $0x24] sm:$0xf]
        %v939 = vld [vmem:[%s6 + $0x28] sm:$0xf]
        %v940 = vld [vmem:[%s6 + $0x2c] sm:$0xf]
        %v941 = vld [vmem:[%s6 + $0x30] sm:$0xf]
        %v942 = vld [vmem:[%s6 + $0x34] sm:$0xf]
        %v943 = vld [vmem:[%s6 + $0x38] sm:$0xf]
        %v944 = vld [vmem:[%s6 + $0x3c] sm:$0xf]
        %v961 = vunpack.c.l.b16 %v929
        %v962 = vunpack.c.l.b16 %v930
        %v963 = vunpack.c.l.b16 %v931
        %v964 = vunpack.c.l.b16 %v932
        %v965 = vunpack.c.l.b16 %v933
        %v966 = vunpack.c.l.b16 %v934
        %v967 = vunpack.c.l.b16 %v935
        %v968 = vunpack.c.l.b16 %v936
        %v969 = vunpack.c.l.b16 %v937
        %v970 = vunpack.c.l.b16 %v938
        %v971 = vunpack.c.l.b16 %v939
        %v972 = vunpack.c.l.b16 %v940
        %v973 = vunpack.c.l.b16 %v941
        %v974 = vunpack.c.l.b16 %v942
        %v975 = vunpack.c.l.b16 %v943
        %v976 = vunpack.c.l.b16 %v944
        %v977 = vpack.c.b16 %v962, %v961
        %v978 = vpack.c.b16 %v964, %v963
        %v979 = vpack.c.b16 %v966, %v965
        %v980 = vpack.c.b16 %v968, %v967
        %v981 = vpack.c.b16 %v970, %v969
        %v982 = vpack.c.b16 %v972, %v971
        %v983 = vpack.c.b16 %v974, %v973
        %v984 = vpack.c.b16 %v976, %v975
        %993 = vmatprep.subr.bf16.mxu0 0
        %994 = vmatpush1.bf16.msra.mxu0 %v984
        %995 = vmatprep.subr.bf16.mxu0 0
        %996 = vmatpush1.bf16.msra.mxu0 %v983
        %997 = vmatprep.subr.bf16.mxu0 0
        %998 = vmatpush1.bf16.msra.mxu0 %v982
        %999 = vmatprep.subr.bf16.mxu0 0
        %1000 = vmatpush1.bf16.msra.mxu0 %v981
        %1001 = vmatprep.subr.bf16.mxu0 0
        %1002 = vmatpush1.bf16.msra.mxu0 %v980
        %1003 = vmatprep.subr.bf16.mxu0 0
        %1004 = vmatpush1.bf16.msra.mxu0 %v979
        %1005 = vmatprep.subr.bf16.mxu0 0
        %1006 = vmatpush1.bf16.msra.mxu0 %v978
        %1007 = vmatprep.subr.bf16.mxu0 0
        %1008 = vmatpush1.bf16.msra.mxu0 %v977
        %1009 = vmatprep.subr.bf16.mxu0 0
        %1010 = vmatpush2.bf16.msra.mxu0 0
        %1011 = vmatprep.subr.bf16.mxu0 0
        %1012 = vmatpush2.bf16.msra.mxu0 0
        %1013 = vmatprep.subr.bf16.mxu0 0
        %1014 = vmatpush2.bf16.msra.mxu0 0
        %1015 = vmatprep.subr.bf16.mxu0 0
        %1016 = vmatpush2.bf16.msra.mxu0 0
        %1017 = vmatprep.subr.bf16.mxu0 0
        %1018 = vmatpush2.bf16.msra.mxu0 0
        %1019 = vmatprep.subr.bf16.mxu0 0
        %1020 = vmatpush2.bf16.msra.mxu0 0
        %1021 = vmatprep.subr.bf16.mxu0 0
        %1022 = vmatpush2.bf16.msra.mxu0 0
        %1023 = vmatprep.subr.bf16.mxu0 0
        %1024 = vmatpush2.bf16.msra.mxu0 0
        %1025 = vmatprep.mubr.bf16.mxu0 0
        %1026 = vmatmul.mubr.bf16.gmra.mxu0 %v928
        %v1027 = vpop.f32.mrf.mxu0
        %v1028 = vadd.f32 0.0, %v1027
        %v1029 = vpop.f32.mrf.mxu0
        %v1030 = vpop.f32.mrf.mxu0
        %v1031 = vpop.f32.mrf.mxu0
        %1032 = vdwg.mxu0
        %v1033 = vadd.f32 %v927, %v1028
        %s1034 = scalar_lea.vmem %s6, 64
        %v1035 = vld [vmem:[%s1034] sm:$0xf]
        %v1036 = vld [vmem:[%s1034 + $0x4] sm:$0xf]
        %v1037 = vld [vmem:[%s1034 + $0x8] sm:$0xf]
        %v1038 = vld [vmem:[%s1034 + $0xc] sm:$0xf]
        %v1039 = vld [vmem:[%s1034 + $0x10] sm:$0xf]
        %v1040 = vld [vmem:[%s1034 + $0x14] sm:$0xf]
        %v1041 = vld [vmem:[%s1034 + $0x18] sm:$0xf]
        %v1042 = vld [vmem:[%s1034 + $0x1c] sm:$0xf]
        %v1043 = vld [vmem:[%s1034 + $0x20] sm:$0xf]
        %v1044 = vld [vmem:[%s1034 + $0x24] sm:$0xf]
        %v1045 = vld [vmem:[%s1034 + $0x28] sm:$0xf]
        %v1046 = vld [vmem:[%s1034 + $0x2c] sm:$0xf]
        %v1047 = vld [vmem:[%s1034 + $0x30] sm:$0xf]
        %v1048 = vld [vmem:[%s1034 + $0x34] sm:$0xf]
        %v1049 = vld [vmem:[%s1034 + $0x38] sm:$0xf]
        %v1050 = vld [vmem:[%s1034 + $0x3c] sm:$0xf]
        %v1052 = vshrl.u32 %v928, 16
        %v1071 = vunpack.c.l.b16 %v1035
        %v1072 = vunpack.c.l.b16 %v1036
        %v1073 = vunpack.c.l.b16 %v1037
        %v1074 = vunpack.c.l.b16 %v1038
        %v1075 = vunpack.c.l.b16 %v1039
        %v1076 = vunpack.c.l.b16 %v1040
        %v1077 = vunpack.c.l.b16 %v1041
        %v1078 = vunpack.c.l.b16 %v1042
        %v1079 = vunpack.c.l.b16 %v1043
        %v1080 = vunpack.c.l.b16 %v1044
        %v1081 = vunpack.c.l.b16 %v1045
        %v1082 = vunpack.c.l.b16 %v1046
        %v1083 = vunpack.c.l.b16 %v1047
        %v1084 = vunpack.c.l.b16 %v1048
        %v1085 = vunpack.c.l.b16 %v1049
        %v1086 = vunpack.c.l.b16 %v1050
        %v1087 = vpack.c.b16 %v1072, %v1071
        %v1088 = vpack.c.b16 %v1074, %v1073
        %v1089 = vpack.c.b16 %v1076, %v1075
        %v1090 = vpack.c.b16 %v1078, %v1077
        %v1091 = vpack.c.b16 %v1080, %v1079
        %v1092 = vpack.c.b16 %v1082, %v1081
        %v1093 = vpack.c.b16 %v1084, %v1083
        %v1094 = vpack.c.b16 %v1086, %v1085
        %1103 = vmatprep.subr.bf16.mxu0 0
        %1104 = vmatpush1.bf16.msra.mxu0 %v1094
        %1105 = vmatprep.subr.bf16.mxu0 0
        %1106 = vmatpush1.bf16.msra.mxu0 %v1093
        %1107 = vmatprep.subr.bf16.mxu0 0
        %1108 = vmatpush1.bf16.msra.mxu0 %v1092
        %1109 = vmatprep.subr.bf16.mxu0 0
        %1110 = vmatpush1.bf16.msra.mxu0 %v1091
        %1111 = vmatprep.subr.bf16.mxu0 0
        %1112 = vmatpush1.bf16.msra.mxu0 %v1090
        %1113 = vmatprep.subr.bf16.mxu0 0
        %1114 = vmatpush1.bf16.msra.mxu0 %v1089
        %1115 = vmatprep.subr.bf16.mxu0 0
        %1116 = vmatpush1.bf16.msra.mxu0 %v1088
        %1117 = vmatprep.subr.bf16.mxu0 0
        %1118 = vmatpush1.bf16.msra.mxu0 %v1087
        %1119 = vmatprep.subr.bf16.mxu0 0
        %1120 = vmatpush2.bf16.msra.mxu0 0
        %1121 = vmatprep.subr.bf16.mxu0 0
        %1122 = vmatpush2.bf16.msra.mxu0 0
        %1123 = vmatprep.subr.bf16.mxu0 0
        %1124 = vmatpush2.bf16.msra.mxu0 0
        %1125 = vmatprep.subr.bf16.mxu0 0
        %1126 = vmatpush2.bf16.msra.mxu0 0
        %1127 = vmatprep.subr.bf16.mxu0 0
        %1128 = vmatpush2.bf16.msra.mxu0 0
        %1129 = vmatprep.subr.bf16.mxu0 0
        %1130 = vmatpush2.bf16.msra.mxu0 0
        %1131 = vmatprep.subr.bf16.mxu0 0
        %1132 = vmatpush2.bf16.msra.mxu0 0
        %1133 = vmatprep.subr.bf16.mxu0 0
        %1134 = vmatpush2.bf16.msra.mxu0 0
        %1135 = vmatprep.mubr.bf16.mxu0 0
        %1136 = vmatmul.mubr.bf16.gmra.mxu0 %v1052
        %v1137 = vpop.f32.mrf.mxu0
        %v1138 = vadd.f32 0.0, %v1137
        %v1139 = vpop.f32.mrf.mxu0
        %v1140 = vpop.f32.mrf.mxu0
        %v1141 = vpop.f32.mrf.mxu0
        %1142 = vdwg.mxu0
        %v1143 = vadd.f32 %v1033, %v1138
        %s1144 = scalar_lea.vmem %s6, 128
        %v1145 = vld [vmem:[%s1144] sm:$0xf]
        %v1146 = vld [vmem:[%s1144 + $0x4] sm:$0xf]
        %v1147 = vld [vmem:[%s1144 + $0x8] sm:$0xf]
        %v1148 = vld [vmem:[%s1144 + $0xc] sm:$0xf]
        %v1149 = vld [vmem:[%s1144 + $0x10] sm:$0xf]
        %v1150 = vld [vmem:[%s1144 + $0x14] sm:$0xf]
        %v1151 = vld [vmem:[%s1144 + $0x18] sm:$0xf]
        %v1152 = vld [vmem:[%s1144 + $0x1c] sm:$0xf]
        %v1153 = vld [vmem:[%s1144 + $0x20] sm:$0xf]
        %v1154 = vld [vmem:[%s1144 + $0x24] sm:$0xf]
        %v1155 = vld [vmem:[%s1144 + $0x28] sm:$0xf]
        %v1156 = vld [vmem:[%s1144 + $0x2c] sm:$0xf]
        %v1157 = vld [vmem:[%s1144 + $0x30] sm:$0xf]
        %v1158 = vld [vmem:[%s1144 + $0x34] sm:$0xf]
        %v1159 = vld [vmem:[%s1144 + $0x38] sm:$0xf]
        %v1160 = vld [vmem:[%s1144 + $0x3c] sm:$0xf]
        %v1162 = vrot.slane %v928, 1
        %v1180 = vunpack.c.l.b16 %v1145
        %v1181 = vunpack.c.l.b16 %v1146
        %v1182 = vunpack.c.l.b16 %v1147
        %v1183 = vunpack.c.l.b16 %v1148
        %v1184 = vunpack.c.l.b16 %v1149
        %v1185 = vunpack.c.l.b16 %v1150
        %v1186 = vunpack.c.l.b16 %v1151
        %v1187 = vunpack.c.l.b16 %v1152
        %v1188 = vunpack.c.l.b16 %v1153
        %v1189 = vunpack.c.l.b16 %v1154
        %v1190 = vunpack.c.l.b16 %v1155
        %v1191 = vunpack.c.l.b16 %v1156
        %v1192 = vunpack.c.l.b16 %v1157
        %v1193 = vunpack.c.l.b16 %v1158
        %v1194 = vunpack.c.l.b16 %v1159
        %v1195 = vunpack.c.l.b16 %v1160
        %v1196 = vpack.c.b16 %v1181, %v1180
        %v1197 = vpack.c.b16 %v1183, %v1182
        %v1198 = vpack.c.b16 %v1185, %v1184
        %v1199 = vpack.c.b16 %v1187, %v1186
        %v1200 = vpack.c.b16 %v1189, %v1188
        %v1201 = vpack.c.b16 %v1191, %v1190
        %v1202 = vpack.c.b16 %v1193, %v1192
        %v1203 = vpack.c.b16 %v1195, %v1194
        %1212 = vmatprep.subr.bf16.mxu0 0
        %1213 = vmatpush1.bf16.msra.mxu0 %v1203
        %1214 = vmatprep.subr.bf16.mxu0 0
        %1215 = vmatpush1.bf16.msra.mxu0 %v1202
        %1216 = vmatprep.subr.bf16.mxu0 0
        %1217 = vmatpush1.bf16.msra.mxu0 %v1201
        %1218 = vmatprep.subr.bf16.mxu0 0
        %1219 = vmatpush1.bf16.msra.mxu0 %v1200
        %1220 = vmatprep.subr.bf16.mxu0 0
        %1221 = vmatpush1.bf16.msra.mxu0 %v1199
        %1222 = vmatprep.subr.bf16.mxu0 0
        %1223 = vmatpush1.bf16.msra.mxu0 %v1198
        %1224 = vmatprep.subr.bf16.mxu0 0
        %1225 = vmatpush1.bf16.msra.mxu0 %v1197
        %1226 = vmatprep.subr.bf16.mxu0 0
        %1227 = vmatpush1.bf16.msra.mxu0 %v1196
        %1228 = vmatprep.subr.bf16.mxu0 0
        %1229 = vmatpush2.bf16.msra.mxu0 0
        %1230 = vmatprep.subr.bf16.mxu0 0
        %1231 = vmatpush2.bf16.msra.mxu0 0
        %1232 = vmatprep.subr.bf16.mxu0 0
        %1233 = vmatpush2.bf16.msra.mxu0 0
        %1234 = vmatprep.subr.bf16.mxu0 0
        %1235 = vmatpush2.bf16.msra.mxu0 0
        %1236 = vmatprep.subr.bf16.mxu0 0
        %1237 = vmatpush2.bf16.msra.mxu0 0
        %1238 = vmatprep.subr.bf16.mxu0 0
        %1239 = vmatpush2.bf16.msra.mxu0 0
        %1240 = vmatprep.subr.bf16.mxu0 0
        %1241 = vmatpush2.bf16.msra.mxu0 0
        %1242 = vmatprep.subr.bf16.mxu0 0
        %1243 = vmatpush2.bf16.msra.mxu0 0
        %1244 = vmatprep.mubr.bf16.mxu0 0
        %1245 = vmatmul.mubr.bf16.gmra.mxu0 %v1162
        %v1246 = vpop.f32.mrf.mxu0
        %v1247 = vadd.f32 0.0, %v1246
        %v1248 = vpop.f32.mrf.mxu0
        %v1249 = vpop.f32.mrf.mxu0
        %v1250 = vpop.f32.mrf.mxu0
        %1251 = vdwg.mxu0
        %v1252 = vadd.f32 %v1143, %v1247
        %s1253 = scalar_lea.vmem %s6, 192
        %v1254 = vld [vmem:[%s1253] sm:$0xf]
        %v1255 = vld [vmem:[%s1253 + $0x4] sm:$0xf]
        %v1256 = vld [vmem:[%s1253 + $0x8] sm:$0xf]
        %v1257 = vld [vmem:[%s1253 + $0xc] sm:$0xf]
        %v1258 = vld [vmem:[%s1253 + $0x10] sm:$0xf]
        %v1259 = vld [vmem:[%s1253 + $0x14] sm:$0xf]
        %v1260 = vld [vmem:[%s1253 + $0x18] sm:$0xf]
        %v1261 = vld [vmem:[%s1253 + $0x1c] sm:$0xf]
        %v1262 = vld [vmem:[%s1253 + $0x20] sm:$0xf]
        %v1263 = vld [vmem:[%s1253 + $0x24] sm:$0xf]
        %v1264 = vld [vmem:[%s1253 + $0x28] sm:$0xf]
        %v1265 = vld [vmem:[%s1253 + $0x2c] sm:$0xf]
        %v1266 = vld [vmem:[%s1253 + $0x30] sm:$0xf]
        %v1267 = vld [vmem:[%s1253 + $0x34] sm:$0xf]
        %v1268 = vld [vmem:[%s1253 + $0x38] sm:$0xf]
        %v1269 = vld [vmem:[%s1253 + $0x3c] sm:$0xf]
        %v1270 = vrot.slane %v1052, 1
        %v1288 = vunpack.c.l.b16 %v1254
        %v1289 = vunpack.c.l.b16 %v1255
        %v1290 = vunpack.c.l.b16 %v1256
        %v1291 = vunpack.c.l.b16 %v1257
        %v1292 = vunpack.c.l.b16 %v1258
        %v1293 = vunpack.c.l.b16 %v1259
        %v1294 = vunpack.c.l.b16 %v1260
        %v1295 = vunpack.c.l.b16 %v1261
        %v1296 = vunpack.c.l.b16 %v1262
        %v1297 = vunpack.c.l.b16 %v1263
        %v1298 = vunpack.c.l.b16 %v1264
        %v1299 = vunpack.c.l.b16 %v1265
        %v1300 = vunpack.c.l.b16 %v1266
        %v1301 = vunpack.c.l.b16 %v1267
        %v1302 = vunpack.c.l.b16 %v1268
        %v1303 = vunpack.c.l.b16 %v1269
        %v1304 = vpack.c.b16 %v1289, %v1288
        %v1305 = vpack.c.b16 %v1291, %v1290
        %v1306 = vpack.c.b16 %v1293, %v1292
        %v1307 = vpack.c.b16 %v1295, %v1294
        %v1308 = vpack.c.b16 %v1297, %v1296
        %v1309 = vpack.c.b16 %v1299, %v1298
        %v1310 = vpack.c.b16 %v1301, %v1300
        %v1311 = vpack.c.b16 %v1303, %v1302
        %1320 = vmatprep.subr.bf16.mxu0 0
        %1321 = vmatpush1.bf16.msra.mxu0 %v1311
        %1322 = vmatprep.subr.bf16.mxu0 0
        %1323 = vmatpush1.bf16.msra.mxu0 %v1310
        %1324 = vmatprep.subr.bf16.mxu0 0
        %1325 = vmatpush1.bf16.msra.mxu0 %v1309
        %1326 = vmatprep.subr.bf16.mxu0 0
        %1327 = vmatpush1.bf16.msra.mxu0 %v1308
        %1328 = vmatprep.subr.bf16.mxu0 0
        %1329 = vmatpush1.bf16.msra.mxu0 %v1307
        %1330 = vmatprep.subr.bf16.mxu0 0
        %1331 = vmatpush1.bf16.msra.mxu0 %v1306
        %1332 = vmatprep.subr.bf16.mxu0 0
        %1333 = vmatpush1.bf16.msra.mxu0 %v1305
        %1334 = vmatprep.subr.bf16.mxu0 0
        %1335 = vmatpush1.bf16.msra.mxu0 %v1304
        %1336 = vmatprep.subr.bf16.mxu0 0
        %1337 = vmatpush2.bf16.msra.mxu0 0
        %1338 = vmatprep.subr.bf16.mxu0 0
        %1339 = vmatpush2.bf16.msra.mxu0 0
        %1340 = vmatprep.subr.bf16.mxu0 0
        %1341 = vmatpush2.bf16.msra.mxu0 0
        %1342 = vmatprep.subr.bf16.mxu0 0
        %1343 = vmatpush2.bf16.msra.mxu0 0
        %1344 = vmatprep.subr.bf16.mxu0 0
        %1345 = vmatpush2.bf16.msra.mxu0 0
        %1346 = vmatprep.subr.bf16.mxu0 0
        %1347 = vmatpush2.bf16.msra.mxu0 0
        %1348 = vmatprep.subr.bf16.mxu0 0
        %1349 = vmatpush2.bf16.msra.mxu0 0
        %1350 = vmatprep.subr.bf16.mxu0 0
        %1351 = vmatpush2.bf16.msra.mxu0 0
        %1352 = vmatprep.mubr.bf16.mxu0 0
        %1353 = vmatmul.mubr.bf16.gmra.mxu0 %v1270
        %v1354 = vpop.f32.mrf.mxu0
        %v1355 = vadd.f32 0.0, %v1354
        %v1356 = vpop.f32.mrf.mxu0
        %v1357 = vpop.f32.mrf.mxu0
        %v1358 = vpop.f32.mrf.mxu0
        %1359 = vdwg.mxu0
        %v1360 = vadd.f32 %v1252, %v1355
        %s1361 = scalar_lea.vmem %s6, 256
        %v1362 = vld [vmem:[%s1361] sm:$0xf]
        %v1363 = vld [vmem:[%s1361 + $0x4] sm:$0xf]
        %v1364 = vld [vmem:[%s1361 + $0x8] sm:$0xf]
        %v1365 = vld [vmem:[%s1361 + $0xc] sm:$0xf]
        %v1366 = vld [vmem:[%s1361 + $0x10] sm:$0xf]
        %v1367 = vld [vmem:[%s1361 + $0x14] sm:$0xf]
        %v1368 = vld [vmem:[%s1361 + $0x18] sm:$0xf]
        %v1369 = vld [vmem:[%s1361 + $0x1c] sm:$0xf]
        %v1370 = vld [vmem:[%s1361 + $0x20] sm:$0xf]
        %v1371 = vld [vmem:[%s1361 + $0x24] sm:$0xf]
        %v1372 = vld [vmem:[%s1361 + $0x28] sm:$0xf]
        %v1373 = vld [vmem:[%s1361 + $0x2c] sm:$0xf]
        %v1374 = vld [vmem:[%s1361 + $0x30] sm:$0xf]
        %v1375 = vld [vmem:[%s1361 + $0x34] sm:$0xf]
        %v1376 = vld [vmem:[%s1361 + $0x38] sm:$0xf]
        %v1377 = vld [vmem:[%s1361 + $0x3c] sm:$0xf]
        %v1378 = vrot.slane %v928, 2
        %v1396 = vunpack.c.l.b16 %v1362
        %v1397 = vunpack.c.l.b16 %v1363
        %v1398 = vunpack.c.l.b16 %v1364
        %v1399 = vunpack.c.l.b16 %v1365
        %v1400 = vunpack.c.l.b16 %v1366
        %v1401 = vunpack.c.l.b16 %v1367
        %v1402 = vunpack.c.l.b16 %v1368
        %v1403 = vunpack.c.l.b16 %v1369
        %v1404 = vunpack.c.l.b16 %v1370
        %v1405 = vunpack.c.l.b16 %v1371
        %v1406 = vunpack.c.l.b16 %v1372
        %v1407 = vunpack.c.l.b16 %v1373
        %v1408 = vunpack.c.l.b16 %v1374
        %v1409 = vunpack.c.l.b16 %v1375
        %v1410 = vunpack.c.l.b16 %v1376
        %v1411 = vunpack.c.l.b16 %v1377
        %v1412 = vpack.c.b16 %v1397, %v1396
        %v1413 = vpack.c.b16 %v1399, %v1398
        %v1414 = vpack.c.b16 %v1401, %v1400
        %v1415 = vpack.c.b16 %v1403, %v1402
        %v1416 = vpack.c.b16 %v1405, %v1404
        %v1417 = vpack.c.b16 %v1407, %v1406
        %v1418 = vpack.c.b16 %v1409, %v1408
        %v1419 = vpack.c.b16 %v1411, %v1410
        %1428 = vmatprep.subr.bf16.mxu0 0
        %1429 = vmatpush1.bf16.msra.mxu0 %v1419
        %1430 = vmatprep.subr.bf16.mxu0 0
        %1431 = vmatpush1.bf16.msra.mxu0 %v1418
        %1432 = vmatprep.subr.bf16.mxu0 0
        %1433 = vmatpush1.bf16.msra.mxu0 %v1417
        %1434 = vmatprep.subr.bf16.mxu0 0
        %1435 = vmatpush1.bf16.msra.mxu0 %v1416
        %1436 = vmatprep.subr.bf16.mxu0 0
        %1437 = vmatpush1.bf16.msra.mxu0 %v1415
        %1438 = vmatprep.subr.bf16.mxu0 0
        %1439 = vmatpush1.bf16.msra.mxu0 %v1414
        %1440 = vmatprep.subr.bf16.mxu0 0
        %1441 = vmatpush1.bf16.msra.mxu0 %v1413
        %1442 = vmatprep.subr.bf16.mxu0 0
        %1443 = vmatpush1.bf16.msra.mxu0 %v1412
        %1444 = vmatprep.subr.bf16.mxu0 0
        %1445 = vmatpush2.bf16.msra.mxu0 0
        %1446 = vmatprep.subr.bf16.mxu0 0
        %1447 = vmatpush2.bf16.msra.mxu0 0
        %1448 = vmatprep.subr.bf16.mxu0 0
        %1449 = vmatpush2.bf16.msra.mxu0 0
        %1450 = vmatprep.subr.bf16.mxu0 0
        %1451 = vmatpush2.bf16.msra.mxu0 0
        %1452 = vmatprep.subr.bf16.mxu0 0
        %1453 = vmatpush2.bf16.msra.mxu0 0
        %1454 = vmatprep.subr.bf16.mxu0 0
        %1455 = vmatpush2.bf16.msra.mxu0 0
        %1456 = vmatprep.subr.bf16.mxu0 0
        %1457 = vmatpush2.bf16.msra.mxu0 0
        %1458 = vmatprep.subr.bf16.mxu0 0
        %1459 = vmatpush2.bf16.msra.mxu0 0
        %1460 = vmatprep.mubr.bf16.mxu0 0
        %1461 = vmatmul.mubr.bf16.gmra.mxu0 %v1378
        %v1462 = vpop.f32.mrf.mxu0
        %v1463 = vadd.f32 0.0, %v1462
        %v1464 = vpop.f32.mrf.mxu0
        %v1465 = vpop.f32.mrf.mxu0
        %v1466 = vpop.f32.mrf.mxu0
        %1467 = vdwg.mxu0
        %v1468 = vadd.f32 %v1360, %v1463
        %s1469 = scalar_lea.vmem %s6, 320
        %v1470 = vld [vmem:[%s1469] sm:$0xf]
        %v1471 = vld [vmem:[%s1469 + $0x4] sm:$0xf]
        %v1472 = vld [vmem:[%s1469 + $0x8] sm:$0xf]
        %v1473 = vld [vmem:[%s1469 + $0xc] sm:$0xf]
        %v1474 = vld [vmem:[%s1469 + $0x10] sm:$0xf]
        %v1475 = vld [vmem:[%s1469 + $0x14] sm:$0xf]
        %v1476 = vld [vmem:[%s1469 + $0x18] sm:$0xf]
        %v1477 = vld [vmem:[%s1469 + $0x1c] sm:$0xf]
        %v1478 = vld [vmem:[%s1469 + $0x20] sm:$0xf]
        %v1479 = vld [vmem:[%s1469 + $0x24] sm:$0xf]
        %v1480 = vld [vmem:[%s1469 + $0x28] sm:$0xf]
        %v1481 = vld [vmem:[%s1469 + $0x2c] sm:$0xf]
        %v1482 = vld [vmem:[%s1469 + $0x30] sm:$0xf]
        %v1483 = vld [vmem:[%s1469 + $0x34] sm:$0xf]
        %v1484 = vld [vmem:[%s1469 + $0x38] sm:$0xf]
        %v1485 = vld [vmem:[%s1469 + $0x3c] sm:$0xf]
        %v1486 = vrot.slane %v1052, 2
        %v1504 = vunpack.c.l.b16 %v1470
        %v1505 = vunpack.c.l.b16 %v1471
        %v1506 = vunpack.c.l.b16 %v1472
        %v1507 = vunpack.c.l.b16 %v1473
        %v1508 = vunpack.c.l.b16 %v1474
        %v1509 = vunpack.c.l.b16 %v1475
        %v1510 = vunpack.c.l.b16 %v1476
        %v1511 = vunpack.c.l.b16 %v1477
        %v1512 = vunpack.c.l.b16 %v1478
        %v1513 = vunpack.c.l.b16 %v1479
        %v1514 = vunpack.c.l.b16 %v1480
        %v1515 = vunpack.c.l.b16 %v1481
        %v1516 = vunpack.c.l.b16 %v1482
        %v1517 = vunpack.c.l.b16 %v1483
        %v1518 = vunpack.c.l.b16 %v1484
        %v1519 = vunpack.c.l.b16 %v1485
        %v1520 = vpack.c.b16 %v1505, %v1504
        %v1521 = vpack.c.b16 %v1507, %v1506
        %v1522 = vpack.c.b16 %v1509, %v1508
        %v1523 = vpack.c.b16 %v1511, %v1510
        %v1524 = vpack.c.b16 %v1513, %v1512
        %v1525 = vpack.c.b16 %v1515, %v1514
        %v1526 = vpack.c.b16 %v1517, %v1516
        %v1527 = vpack.c.b16 %v1519, %v1518
        %1536 = vmatprep.subr.bf16.mxu0 0
        %1537 = vmatpush1.bf16.msra.mxu0 %v1527
        %1538 = vmatprep.subr.bf16.mxu0 0
        %1539 = vmatpush1.bf16.msra.mxu0 %v1526
        %1540 = vmatprep.subr.bf16.mxu0 0
        %1541 = vmatpush1.bf16.msra.mxu0 %v1525
        %1542 = vmatprep.subr.bf16.mxu0 0
        %1543 = vmatpush1.bf16.msra.mxu0 %v1524
        %1544 = vmatprep.subr.bf16.mxu0 0
        %1545 = vmatpush1.bf16.msra.mxu0 %v1523
        %1546 = vmatprep.subr.bf16.mxu0 0
        %1547 = vmatpush1.bf16.msra.mxu0 %v1522
        %1548 = vmatprep.subr.bf16.mxu0 0
        %1549 = vmatpush1.bf16.msra.mxu0 %v1521
        %1550 = vmatprep.subr.bf16.mxu0 0
        %1551 = vmatpush1.bf16.msra.mxu0 %v1520
        %1552 = vmatprep.subr.bf16.mxu0 0
        %1553 = vmatpush2.bf16.msra.mxu0 0
        %1554 = vmatprep.subr.bf16.mxu0 0
        %1555 = vmatpush2.bf16.msra.mxu0 0
        %1556 = vmatprep.subr.bf16.mxu0 0
        %1557 = vmatpush2.bf16.msra.mxu0 0
        %1558 = vmatprep.subr.bf16.mxu0 0
        %1559 = vmatpush2.bf16.msra.mxu0 0
        %1560 = vmatprep.subr.bf16.mxu0 0
        %1561 = vmatpush2.bf16.msra.mxu0 0
        %1562 = vmatprep.subr.bf16.mxu0 0
        %1563 = vmatpush2.bf16.msra.mxu0 0
        %1564 = vmatprep.subr.bf16.mxu0 0
        %1565 = vmatpush2.bf16.msra.mxu0 0
        %1566 = vmatprep.subr.bf16.mxu0 0
        %1567 = vmatpush2.bf16.msra.mxu0 0
        %1568 = vmatprep.mubr.bf16.mxu0 0
        %1569 = vmatmul.mubr.bf16.gmra.mxu0 %v1486
        %v1570 = vpop.f32.mrf.mxu0
        %v1571 = vadd.f32 0.0, %v1570
        %v1572 = vpop.f32.mrf.mxu0
        %v1573 = vpop.f32.mrf.mxu0
        %v1574 = vpop.f32.mrf.mxu0
        %1575 = vdwg.mxu0
        %v1576 = vadd.f32 %v1468, %v1571
        %s1577 = scalar_lea.vmem %s6, 384
        %v1578 = vld [vmem:[%s1577] sm:$0xf]
        %v1579 = vld [vmem:[%s1577 + $0x4] sm:$0xf]
        %v1580 = vld [vmem:[%s1577 + $0x8] sm:$0xf]
        %v1581 = vld [vmem:[%s1577 + $0xc] sm:$0xf]
        %v1582 = vld [vmem:[%s1577 + $0x10] sm:$0xf]
        %v1583 = vld [vmem:[%s1577 + $0x14] sm:$0xf]
        %v1584 = vld [vmem:[%s1577 + $0x18] sm:$0xf]
        %v1585 = vld [vmem:[%s1577 + $0x1c] sm:$0xf]
        %v1586 = vld [vmem:[%s1577 + $0x20] sm:$0xf]
        %v1587 = vld [vmem:[%s1577 + $0x24] sm:$0xf]
        %v1588 = vld [vmem:[%s1577 + $0x28] sm:$0xf]
        %v1589 = vld [vmem:[%s1577 + $0x2c] sm:$0xf]
        %v1590 = vld [vmem:[%s1577 + $0x30] sm:$0xf]
        %v1591 = vld [vmem:[%s1577 + $0x34] sm:$0xf]
        %v1592 = vld [vmem:[%s1577 + $0x38] sm:$0xf]
        %v1593 = vld [vmem:[%s1577 + $0x3c] sm:$0xf]
        %v1594 = vrot.slane %v928, 3
        %v1612 = vunpack.c.l.b16 %v1578
        %v1613 = vunpack.c.l.b16 %v1579
        %v1614 = vunpack.c.l.b16 %v1580
        %v1615 = vunpack.c.l.b16 %v1581
        %v1616 = vunpack.c.l.b16 %v1582
        %v1617 = vunpack.c.l.b16 %v1583
        %v1618 = vunpack.c.l.b16 %v1584
        %v1619 = vunpack.c.l.b16 %v1585
        %v1620 = vunpack.c.l.b16 %v1586
        %v1621 = vunpack.c.l.b16 %v1587
        %v1622 = vunpack.c.l.b16 %v1588
        %v1623 = vunpack.c.l.b16 %v1589
        %v1624 = vunpack.c.l.b16 %v1590
        %v1625 = vunpack.c.l.b16 %v1591
        %v1626 = vunpack.c.l.b16 %v1592
        %v1627 = vunpack.c.l.b16 %v1593
        %v1628 = vpack.c.b16 %v1613, %v1612
        %v1629 = vpack.c.b16 %v1615, %v1614
        %v1630 = vpack.c.b16 %v1617, %v1616
        %v1631 = vpack.c.b16 %v1619, %v1618
        %v1632 = vpack.c.b16 %v1621, %v1620
        %v1633 = vpack.c.b16 %v1623, %v1622
        %v1634 = vpack.c.b16 %v1625, %v1624
        %v1635 = vpack.c.b16 %v1627, %v1626
        %1644 = vmatprep.subr.bf16.mxu0 0
        %1645 = vmatpush1.bf16.msra.mxu0 %v1635
        %1646 = vmatprep.subr.bf16.mxu0 0
        %1647 = vmatpush1.bf16.msra.mxu0 %v1634
        %1648 = vmatprep.subr.bf16.mxu0 0
        %1649 = vmatpush1.bf16.msra.mxu0 %v1633
        %1650 = vmatprep.subr.bf16.mxu0 0
        %1651 = vmatpush1.bf16.msra.mxu0 %v1632
        %1652 = vmatprep.subr.bf16.mxu0 0
        %1653 = vmatpush1.bf16.msra.mxu0 %v1631
        %1654 = vmatprep.subr.bf16.mxu0 0
        %1655 = vmatpush1.bf16.msra.mxu0 %v1630
        %1656 = vmatprep.subr.bf16.mxu0 0
        %1657 = vmatpush1.bf16.msra.mxu0 %v1629
        %1658 = vmatprep.subr.bf16.mxu0 0
        %1659 = vmatpush1.bf16.msra.mxu0 %v1628
        %1660 = vmatprep.subr.bf16.mxu0 0
        %1661 = vmatpush2.bf16.msra.mxu0 0
        %1662 = vmatprep.subr.bf16.mxu0 0
        %1663 = vmatpush2.bf16.msra.mxu0 0
        %1664 = vmatprep.subr.bf16.mxu0 0
        %1665 = vmatpush2.bf16.msra.mxu0 0
        %1666 = vmatprep.subr.bf16.mxu0 0
        %1667 = vmatpush2.bf16.msra.mxu0 0
        %1668 = vmatprep.subr.bf16.mxu0 0
        %1669 = vmatpush2.bf16.msra.mxu0 0
        %1670 = vmatprep.subr.bf16.mxu0 0
        %1671 = vmatpush2.bf16.msra.mxu0 0
        %1672 = vmatprep.subr.bf16.mxu0 0
        %1673 = vmatpush2.bf16.msra.mxu0 0
        %1674 = vmatprep.subr.bf16.mxu0 0
        %1675 = vmatpush2.bf16.msra.mxu0 0
        %1676 = vmatprep.mubr.bf16.mxu0 0
        %1677 = vmatmul.mubr.bf16.gmra.mxu0 %v1594
        %v1678 = vpop.f32.mrf.mxu0
        %v1679 = vadd.f32 0.0, %v1678
        %v1680 = vpop.f32.mrf.mxu0
        %v1681 = vpop.f32.mrf.mxu0
        %v1682 = vpop.f32.mrf.mxu0
        %1683 = vdwg.mxu0
        %v1684 = vadd.f32 %v1576, %v1679
        %s1685 = scalar_lea.vmem %s6, 448
        %v1686 = vld [vmem:[%s1685] sm:$0xf]
        %v1687 = vld [vmem:[%s1685 + $0x4] sm:$0xf]
        %v1688 = vld [vmem:[%s1685 + $0x8] sm:$0xf]
        %v1689 = vld [vmem:[%s1685 + $0xc] sm:$0xf]
        %v1690 = vld [vmem:[%s1685 + $0x10] sm:$0xf]
        %v1691 = vld [vmem:[%s1685 + $0x14] sm:$0xf]
        %v1692 = vld [vmem:[%s1685 + $0x18] sm:$0xf]
        %v1693 = vld [vmem:[%s1685 + $0x1c] sm:$0xf]
        %v1694 = vld [vmem:[%s1685 + $0x20] sm:$0xf]
        %v1695 = vld [vmem:[%s1685 + $0x24] sm:$0xf]
        %v1696 = vld [vmem:[%s1685 + $0x28] sm:$0xf]
        %v1697 = vld [vmem:[%s1685 + $0x2c] sm:$0xf]
        %v1698 = vld [vmem:[%s1685 + $0x30] sm:$0xf]
        %v1699 = vld [vmem:[%s1685 + $0x34] sm:$0xf]
        %v1700 = vld [vmem:[%s1685 + $0x38] sm:$0xf]
        %v1701 = vld [vmem:[%s1685 + $0x3c] sm:$0xf]
        %v1702 = vrot.slane %v1052, 3
        %v1720 = vunpack.c.l.b16 %v1686
        %v1721 = vunpack.c.l.b16 %v1687
        %v1722 = vunpack.c.l.b16 %v1688
        %v1723 = vunpack.c.l.b16 %v1689
        %v1724 = vunpack.c.l.b16 %v1690
        %v1725 = vunpack.c.l.b16 %v1691
        %v1726 = vunpack.c.l.b16 %v1692
        %v1727 = vunpack.c.l.b16 %v1693
        %v1728 = vunpack.c.l.b16 %v1694
        %v1729 = vunpack.c.l.b16 %v1695
        %v1730 = vunpack.c.l.b16 %v1696
        %v1731 = vunpack.c.l.b16 %v1697
        %v1732 = vunpack.c.l.b16 %v1698
        %v1733 = vunpack.c.l.b16 %v1699
        %v1734 = vunpack.c.l.b16 %v1700
        %v1735 = vunpack.c.l.b16 %v1701
        %v1736 = vpack.c.b16 %v1721, %v1720
        %v1737 = vpack.c.b16 %v1723, %v1722
        %v1738 = vpack.c.b16 %v1725, %v1724
        %v1739 = vpack.c.b16 %v1727, %v1726
        %v1740 = vpack.c.b16 %v1729, %v1728
        %v1741 = vpack.c.b16 %v1731, %v1730
        %v1742 = vpack.c.b16 %v1733, %v1732
        %v1743 = vpack.c.b16 %v1735, %v1734
        %1752 = vmatprep.subr.bf16.mxu0 0
        %1753 = vmatpush1.bf16.msra.mxu0 %v1743
        %1754 = vmatprep.subr.bf16.mxu0 0
        %1755 = vmatpush1.bf16.msra.mxu0 %v1742
        %1756 = vmatprep.subr.bf16.mxu0 0
        %1757 = vmatpush1.bf16.msra.mxu0 %v1741
        %1758 = vmatprep.subr.bf16.mxu0 0
        %1759 = vmatpush1.bf16.msra.mxu0 %v1740
        %1760 = vmatprep.subr.bf16.mxu0 0
        %1761 = vmatpush1.bf16.msra.mxu0 %v1739
        %1762 = vmatprep.subr.bf16.mxu0 0
        %1763 = vmatpush1.bf16.msra.mxu0 %v1738
        %1764 = vmatprep.subr.bf16.mxu0 0
        %1765 = vmatpush1.bf16.msra.mxu0 %v1737
        %1766 = vmatprep.subr.bf16.mxu0 0
        %1767 = vmatpush1.bf16.msra.mxu0 %v1736
        %1768 = vmatprep.subr.bf16.mxu0 0
        %1769 = vmatpush2.bf16.msra.mxu0 0
        %1770 = vmatprep.subr.bf16.mxu0 0
        %1771 = vmatpush2.bf16.msra.mxu0 0
        %1772 = vmatprep.subr.bf16.mxu0 0
        %1773 = vmatpush2.bf16.msra.mxu0 0
        %1774 = vmatprep.subr.bf16.mxu0 0
        %1775 = vmatpush2.bf16.msra.mxu0 0
        %1776 = vmatprep.subr.bf16.mxu0 0
        %1777 = vmatpush2.bf16.msra.mxu0 0
        %1778 = vmatprep.subr.bf16.mxu0 0
        %1779 = vmatpush2.bf16.msra.mxu0 0
        %1780 = vmatprep.subr.bf16.mxu0 0
        %1781 = vmatpush2.bf16.msra.mxu0 0
        %1782 = vmatprep.subr.bf16.mxu0 0
        %1783 = vmatpush2.bf16.msra.mxu0 0
        %1784 = vmatprep.mubr.bf16.mxu0 0
        %1785 = vmatmul.mubr.bf16.gmra.mxu0 %v1702
        %v1786 = vpop.f32.mrf.mxu0
        %v1787 = vadd.f32 0.0, %v1786
        %v1788 = vpop.f32.mrf.mxu0
        %v1789 = vpop.f32.mrf.mxu0
        %v1790 = vpop.f32.mrf.mxu0
        %1791 = vdwg.mxu0
        %v1792 = vadd.f32 %v1684, %v1787
        %v1793 = vpack.c.bf16 %v924, %v924
        %s1794 = scalar_lea.vmem %s6, 512
        %v1795 = vld [vmem:[%s1794] sm:$0xf]
        %v1796 = vld [vmem:[%s1794 + $0x4] sm:$0xf]
        %v1797 = vld [vmem:[%s1794 + $0x8] sm:$0xf]
        %v1798 = vld [vmem:[%s1794 + $0xc] sm:$0xf]
        %v1799 = vld [vmem:[%s1794 + $0x10] sm:$0xf]
        %v1800 = vld [vmem:[%s1794 + $0x14] sm:$0xf]
        %v1801 = vld [vmem:[%s1794 + $0x18] sm:$0xf]
        %v1802 = vld [vmem:[%s1794 + $0x1c] sm:$0xf]
        %v1803 = vld [vmem:[%s1794 + $0x20] sm:$0xf]
        %v1804 = vld [vmem:[%s1794 + $0x24] sm:$0xf]
        %v1805 = vld [vmem:[%s1794 + $0x28] sm:$0xf]
        %v1806 = vld [vmem:[%s1794 + $0x2c] sm:$0xf]
        %v1807 = vld [vmem:[%s1794 + $0x30] sm:$0xf]
        %v1808 = vld [vmem:[%s1794 + $0x34] sm:$0xf]
        %v1809 = vld [vmem:[%s1794 + $0x38] sm:$0xf]
        %v1810 = vld [vmem:[%s1794 + $0x3c] sm:$0xf]
        %v1827 = vunpack.c.l.b16 %v1795
        %v1828 = vunpack.c.l.b16 %v1796
        %v1829 = vunpack.c.l.b16 %v1797
        %v1830 = vunpack.c.l.b16 %v1798
        %v1831 = vunpack.c.l.b16 %v1799
        %v1832 = vunpack.c.l.b16 %v1800
        %v1833 = vunpack.c.l.b16 %v1801
        %v1834 = vunpack.c.l.b16 %v1802
        %v1835 = vunpack.c.l.b16 %v1803
        %v1836 = vunpack.c.l.b16 %v1804
        %v1837 = vunpack.c.l.b16 %v1805
        %v1838 = vunpack.c.l.b16 %v1806
        %v1839 = vunpack.c.l.b16 %v1807
        %v1840 = vunpack.c.l.b16 %v1808
        %v1841 = vunpack.c.l.b16 %v1809
        %v1842 = vunpack.c.l.b16 %v1810
        %v1843 = vpack.c.b16 %v1828, %v1827
        %v1844 = vpack.c.b16 %v1830, %v1829
        %v1845 = vpack.c.b16 %v1832, %v1831
        %v1846 = vpack.c.b16 %v1834, %v1833
        %v1847 = vpack.c.b16 %v1836, %v1835
        %v1848 = vpack.c.b16 %v1838, %v1837
        %v1849 = vpack.c.b16 %v1840, %v1839
        %v1850 = vpack.c.b16 %v1842, %v1841
        %1859 = vmatprep.subr.bf16.mxu0 0
        %1860 = vmatpush1.bf16.msra.mxu0 %v1850
        %1861 = vmatprep.subr.bf16.mxu0 0
        %1862 = vmatpush1.bf16.msra.mxu0 %v1849
        %1863 = vmatprep.subr.bf16.mxu0 0
        %1864 = vmatpush1.bf16.msra.mxu0 %v1848
        %1865 = vmatprep.subr.bf16.mxu0 0
        %1866 = vmatpush1.bf16.msra.mxu0 %v1847
        %1867 = vmatprep.subr.bf16.mxu0 0
        %1868 = vmatpush1.bf16.msra.mxu0 %v1846
        %1869 = vmatprep.subr.bf16.mxu0 0
        %1870 = vmatpush1.bf16.msra.mxu0 %v1845
        %1871 = vmatprep.subr.bf16.mxu0 0
        %1872 = vmatpush1.bf16.msra.mxu0 %v1844
        %1873 = vmatprep.subr.bf16.mxu0 0
        %1874 = vmatpush1.bf16.msra.mxu0 %v1843
        %1875 = vmatprep.subr.bf16.mxu0 0
        %1876 = vmatpush2.bf16.msra.mxu0 0
        %1877 = vmatprep.subr.bf16.mxu0 0
        %1878 = vmatpush2.bf16.msra.mxu0 0
        %1879 = vmatprep.subr.bf16.mxu0 0
        %1880 = vmatpush2.bf16.msra.mxu0 0
        %1881 = vmatprep.subr.bf16.mxu0 0
        %1882 = vmatpush2.bf16.msra.mxu0 0
        %1883 = vmatprep.subr.bf16.mxu0 0
        %1884 = vmatpush2.bf16.msra.mxu0 0
        %1885 = vmatprep.subr.bf16.mxu0 0
        %1886 = vmatpush2.bf16.msra.mxu0 0
        %1887 = vmatprep.subr.bf16.mxu0 0
        %1888 = vmatpush2.bf16.msra.mxu0 0
        %1889 = vmatprep.subr.bf16.mxu0 0
        %1890 = vmatpush2.bf16.msra.mxu0 0
        %1891 = vmatprep.mubr.bf16.mxu0 0
        %1892 = vmatmul.mubr.bf16.gmra.mxu0 %v1793
        %v1893 = vpop.f32.mrf.mxu0
        %v1894 = vadd.f32 0.0, %v1893
        %v1895 = vpop.f32.mrf.mxu0
        %v1896 = vpop.f32.mrf.mxu0
        %v1897 = vpop.f32.mrf.mxu0
        %1898 = vdwg.mxu0
        %v1899 = vadd.f32 %v1792, %v1894
        %s1900 = scalar_lea.vmem %s6, 576
        %v1901 = vld [vmem:[%s1900] sm:$0xf]
        %v1902 = vld [vmem:[%s1900 + $0x4] sm:$0xf]
        %v1903 = vld [vmem:[%s1900 + $0x8] sm:$0xf]
        %v1904 = vld [vmem:[%s1900 + $0xc] sm:$0xf]
        %v1905 = vld [vmem:[%s1900 + $0x10] sm:$0xf]
        %v1906 = vld [vmem:[%s1900 + $0x14] sm:$0xf]
        %v1907 = vld [vmem:[%s1900 + $0x18] sm:$0xf]
        %v1908 = vld [vmem:[%s1900 + $0x1c] sm:$0xf]
        %v1909 = vld [vmem:[%s1900 + $0x20] sm:$0xf]
        %v1910 = vld [vmem:[%s1900 + $0x24] sm:$0xf]
        %v1911 = vld [vmem:[%s1900 + $0x28] sm:$0xf]
        %v1912 = vld [vmem:[%s1900 + $0x2c] sm:$0xf]
        %v1913 = vld [vmem:[%s1900 + $0x30] sm:$0xf]
        %v1914 = vld [vmem:[%s1900 + $0x34] sm:$0xf]
        %v1915 = vld [vmem:[%s1900 + $0x38] sm:$0xf]
        %v1916 = vld [vmem:[%s1900 + $0x3c] sm:$0xf]
        %v1918 = vshrl.u32 %v1793, 16
        %v1937 = vunpack.c.l.b16 %v1901
        %v1938 = vunpack.c.l.b16 %v1902
        %v1939 = vunpack.c.l.b16 %v1903
        %v1940 = vunpack.c.l.b16 %v1904
        %v1941 = vunpack.c.l.b16 %v1905
        %v1942 = vunpack.c.l.b16 %v1906
        %v1943 = vunpack.c.l.b16 %v1907
        %v1944 = vunpack.c.l.b16 %v1908
        %v1945 = vunpack.c.l.b16 %v1909
        %v1946 = vunpack.c.l.b16 %v1910
        %v1947 = vunpack.c.l.b16 %v1911
        %v1948 = vunpack.c.l.b16 %v1912
        %v1949 = vunpack.c.l.b16 %v1913
        %v1950 = vunpack.c.l.b16 %v1914
        %v1951 = vunpack.c.l.b16 %v1915
        %v1952 = vunpack.c.l.b16 %v1916
        %v1953 = vpack.c.b16 %v1938, %v1937
        %v1954 = vpack.c.b16 %v1940, %v1939
        %v1955 = vpack.c.b16 %v1942, %v1941
        %v1956 = vpack.c.b16 %v1944, %v1943
        %v1957 = vpack.c.b16 %v1946, %v1945
        %v1958 = vpack.c.b16 %v1948, %v1947
        %v1959 = vpack.c.b16 %v1950, %v1949
        %v1960 = vpack.c.b16 %v1952, %v1951
        %1969 = vmatprep.subr.bf16.mxu0 0
        %1970 = vmatpush1.bf16.msra.mxu0 %v1960
        %1971 = vmatprep.subr.bf16.mxu0 0
        %1972 = vmatpush1.bf16.msra.mxu0 %v1959
        %1973 = vmatprep.subr.bf16.mxu0 0
        %1974 = vmatpush1.bf16.msra.mxu0 %v1958
        %1975 = vmatprep.subr.bf16.mxu0 0
        %1976 = vmatpush1.bf16.msra.mxu0 %v1957
        %1977 = vmatprep.subr.bf16.mxu0 0
        %1978 = vmatpush1.bf16.msra.mxu0 %v1956
        %1979 = vmatprep.subr.bf16.mxu0 0
        %1980 = vmatpush1.bf16.msra.mxu0 %v1955
        %1981 = vmatprep.subr.bf16.mxu0 0
        %1982 = vmatpush1.bf16.msra.mxu0 %v1954
        %1983 = vmatprep.subr.bf16.mxu0 0
        %1984 = vmatpush1.bf16.msra.mxu0 %v1953
        %1985 = vmatprep.subr.bf16.mxu0 0
        %1986 = vmatpush2.bf16.msra.mxu0 0
        %1987 = vmatprep.subr.bf16.mxu0 0
        %1988 = vmatpush2.bf16.msra.mxu0 0
        %1989 = vmatprep.subr.bf16.mxu0 0
        %1990 = vmatpush2.bf16.msra.mxu0 0
        %1991 = vmatprep.subr.bf16.mxu0 0
        %1992 = vmatpush2.bf16.msra.mxu0 0
        %1993 = vmatprep.subr.bf16.mxu0 0
        %1994 = vmatpush2.bf16.msra.mxu0 0
        %1995 = vmatprep.subr.bf16.mxu0 0
        %1996 = vmatpush2.bf16.msra.mxu0 0
        %1997 = vmatprep.subr.bf16.mxu0 0
        %1998 = vmatpush2.bf16.msra.mxu0 0
        %1999 = vmatprep.subr.bf16.mxu0 0
        %2000 = vmatpush2.bf16.msra.mxu0 0
        %2001 = vmatprep.mubr.bf16.mxu0 0
        %2002 = vmatmul.mubr.bf16.gmra.mxu0 %v1918
        %v2003 = vpop.f32.mrf.mxu0
        %v2004 = vadd.f32 0.0, %v2003
        %v2005 = vpop.f32.mrf.mxu0
        %v2006 = vpop.f32.mrf.mxu0
        %v2007 = vpop.f32.mrf.mxu0
        %2008 = vdwg.mxu0
        %v2009 = vadd.f32 %v1899, %v2004
        %s2010 = scalar_lea.vmem %s6, 640
        %v2011 = vld [vmem:[%s2010] sm:$0xf]
        %v2012 = vld [vmem:[%s2010 + $0x4] sm:$0xf]
        %v2013 = vld [vmem:[%s2010 + $0x8] sm:$0xf]
        %v2014 = vld [vmem:[%s2010 + $0xc] sm:$0xf]
        %v2015 = vld [vmem:[%s2010 + $0x10] sm:$0xf]
        %v2016 = vld [vmem:[%s2010 + $0x14] sm:$0xf]
        %v2017 = vld [vmem:[%s2010 + $0x18] sm:$0xf]
        %v2018 = vld [vmem:[%s2010 + $0x1c] sm:$0xf]
        %v2019 = vld [vmem:[%s2010 + $0x20] sm:$0xf]
        %v2020 = vld [vmem:[%s2010 + $0x24] sm:$0xf]
        %v2021 = vld [vmem:[%s2010 + $0x28] sm:$0xf]
        %v2022 = vld [vmem:[%s2010 + $0x2c] sm:$0xf]
        %v2023 = vld [vmem:[%s2010 + $0x30] sm:$0xf]
        %v2024 = vld [vmem:[%s2010 + $0x34] sm:$0xf]
        %v2025 = vld [vmem:[%s2010 + $0x38] sm:$0xf]
        %v2026 = vld [vmem:[%s2010 + $0x3c] sm:$0xf]
        %v2028 = vrot.slane %v1793, 1
        %v2046 = vunpack.c.l.b16 %v2011
        %v2047 = vunpack.c.l.b16 %v2012
        %v2048 = vunpack.c.l.b16 %v2013
        %v2049 = vunpack.c.l.b16 %v2014
        %v2050 = vunpack.c.l.b16 %v2015
        %v2051 = vunpack.c.l.b16 %v2016
        %v2052 = vunpack.c.l.b16 %v2017
        %v2053 = vunpack.c.l.b16 %v2018
        %v2054 = vunpack.c.l.b16 %v2019
        %v2055 = vunpack.c.l.b16 %v2020
        %v2056 = vunpack.c.l.b16 %v2021
        %v2057 = vunpack.c.l.b16 %v2022
        %v2058 = vunpack.c.l.b16 %v2023
        %v2059 = vunpack.c.l.b16 %v2024
        %v2060 = vunpack.c.l.b16 %v2025
        %v2061 = vunpack.c.l.b16 %v2026
        %v2062 = vpack.c.b16 %v2047, %v2046
        %v2063 = vpack.c.b16 %v2049, %v2048
        %v2064 = vpack.c.b16 %v2051, %v2050
        %v2065 = vpack.c.b16 %v2053, %v2052
        %v2066 = vpack.c.b16 %v2055, %v2054
        %v2067 = vpack.c.b16 %v2057, %v2056
        %v2068 = vpack.c.b16 %v2059, %v2058
        %v2069 = vpack.c.b16 %v2061, %v2060
        %2078 = vmatprep.subr.bf16.mxu0 0
        %2079 = vmatpush1.bf16.msra.mxu0 %v2069
        %2080 = vmatprep.subr.bf16.mxu0 0
        %2081 = vmatpush1.bf16.msra.mxu0 %v2068
        %2082 = vmatprep.subr.bf16.mxu0 0
        %2083 = vmatpush1.bf16.msra.mxu0 %v2067
        %2084 = vmatprep.subr.bf16.mxu0 0
        %2085 = vmatpush1.bf16.msra.mxu0 %v2066
        %2086 = vmatprep.subr.bf16.mxu0 0
        %2087 = vmatpush1.bf16.msra.mxu0 %v2065
        %2088 = vmatprep.subr.bf16.mxu0 0
        %2089 = vmatpush1.bf16.msra.mxu0 %v2064
        %2090 = vmatprep.subr.bf16.mxu0 0
        %2091 = vmatpush1.bf16.msra.mxu0 %v2063
        %2092 = vmatprep.subr.bf16.mxu0 0
        %2093 = vmatpush1.bf16.msra.mxu0 %v2062
        %2094 = vmatprep.subr.bf16.mxu0 0
        %2095 = vmatpush2.bf16.msra.mxu0 0
        %2096 = vmatprep.subr.bf16.mxu0 0
        %2097 = vmatpush2.bf16.msra.mxu0 0
        %2098 = vmatprep.subr.bf16.mxu0 0
        %2099 = vmatpush2.bf16.msra.mxu0 0
        %2100 = vmatprep.subr.bf16.mxu0 0
        %2101 = vmatpush2.bf16.msra.mxu0 0
        %2102 = vmatprep.subr.bf16.mxu0 0
        %2103 = vmatpush2.bf16.msra.mxu0 0
        %2104 = vmatprep.subr.bf16.mxu0 0
        %2105 = vmatpush2.bf16.msra.mxu0 0
        %2106 = vmatprep.subr.bf16.mxu0 0
        %2107 = vmatpush2.bf16.msra.mxu0 0
        %2108 = vmatprep.subr.bf16.mxu0 0
        %2109 = vmatpush2.bf16.msra.mxu0 0
        %2110 = vmatprep.mubr.bf16.mxu0 0
        %2111 = vmatmul.mubr.bf16.gmra.mxu0 %v2028
        %v2112 = vpop.f32.mrf.mxu0
        %v2113 = vadd.f32 0.0, %v2112
        %v2114 = vpop.f32.mrf.mxu0
        %v2115 = vpop.f32.mrf.mxu0
        %v2116 = vpop.f32.mrf.mxu0
        %2117 = vdwg.mxu0
        %v2118 = vadd.f32 %v2009, %v2113
        %s2119 = scalar_lea.vmem %s6, 704
        %v2120 = vld [vmem:[%s2119] sm:$0xf]
        %v2121 = vld [vmem:[%s2119 + $0x4] sm:$0xf]
        %v2122 = vld [vmem:[%s2119 + $0x8] sm:$0xf]
        %v2123 = vld [vmem:[%s2119 + $0xc] sm:$0xf]
        %v2124 = vld [vmem:[%s2119 + $0x10] sm:$0xf]
        %v2125 = vld [vmem:[%s2119 + $0x14] sm:$0xf]
        %v2126 = vld [vmem:[%s2119 + $0x18] sm:$0xf]
        %v2127 = vld [vmem:[%s2119 + $0x1c] sm:$0xf]
        %v2128 = vld [vmem:[%s2119 + $0x20] sm:$0xf]
        %v2129 = vld [vmem:[%s2119 + $0x24] sm:$0xf]
        %v2130 = vld [vmem:[%s2119 + $0x28] sm:$0xf]
        %v2131 = vld [vmem:[%s2119 + $0x2c] sm:$0xf]
        %v2132 = vld [vmem:[%s2119 + $0x30] sm:$0xf]
        %v2133 = vld [vmem:[%s2119 + $0x34] sm:$0xf]
        %v2134 = vld [vmem:[%s2119 + $0x38] sm:$0xf]
        %v2135 = vld [vmem:[%s2119 + $0x3c] sm:$0xf]
        %v2136 = vrot.slane %v1918, 1
        %v2154 = vunpack.c.l.b16 %v2120
        %v2155 = vunpack.c.l.b16 %v2121
        %v2156 = vunpack.c.l.b16 %v2122
        %v2157 = vunpack.c.l.b16 %v2123
        %v2158 = vunpack.c.l.b16 %v2124
        %v2159 = vunpack.c.l.b16 %v2125
        %v2160 = vunpack.c.l.b16 %v2126
        %v2161 = vunpack.c.l.b16 %v2127
        %v2162 = vunpack.c.l.b16 %v2128
        %v2163 = vunpack.c.l.b16 %v2129
        %v2164 = vunpack.c.l.b16 %v2130
        %v2165 = vunpack.c.l.b16 %v2131
        %v2166 = vunpack.c.l.b16 %v2132
        %v2167 = vunpack.c.l.b16 %v2133
        %v2168 = vunpack.c.l.b16 %v2134
        %v2169 = vunpack.c.l.b16 %v2135
        %v2170 = vpack.c.b16 %v2155, %v2154
        %v2171 = vpack.c.b16 %v2157, %v2156
        %v2172 = vpack.c.b16 %v2159, %v2158
        %v2173 = vpack.c.b16 %v2161, %v2160
        %v2174 = vpack.c.b16 %v2163, %v2162
        %v2175 = vpack.c.b16 %v2165, %v2164
        %v2176 = vpack.c.b16 %v2167, %v2166
        %v2177 = vpack.c.b16 %v2169, %v2168
        %2186 = vmatprep.subr.bf16.mxu0 0
        %2187 = vmatpush1.bf16.msra.mxu0 %v2177
        %2188 = vmatprep.subr.bf16.mxu0 0
        %2189 = vmatpush1.bf16.msra.mxu0 %v2176
        %2190 = vmatprep.subr.bf16.mxu0 0
        %2191 = vmatpush1.bf16.msra.mxu0 %v2175
        %2192 = vmatprep.subr.bf16.mxu0 0
        %2193 = vmatpush1.bf16.msra.mxu0 %v2174
        %2194 = vmatprep.subr.bf16.mxu0 0
        %2195 = vmatpush1.bf16.msra.mxu0 %v2173
        %2196 = vmatprep.subr.bf16.mxu0 0
        %2197 = vmatpush1.bf16.msra.mxu0 %v2172
        %2198 = vmatprep.subr.bf16.mxu0 0
        %2199 = vmatpush1.bf16.msra.mxu0 %v2171
        %2200 = vmatprep.subr.bf16.mxu0 0
        %2201 = vmatpush1.bf16.msra.mxu0 %v2170
        %2202 = vmatprep.subr.bf16.mxu0 0
        %2203 = vmatpush2.bf16.msra.mxu0 0
        %2204 = vmatprep.subr.bf16.mxu0 0
        %2205 = vmatpush2.bf16.msra.mxu0 0
        %2206 = vmatprep.subr.bf16.mxu0 0
        %2207 = vmatpush2.bf16.msra.mxu0 0
        %2208 = vmatprep.subr.bf16.mxu0 0
        %2209 = vmatpush2.bf16.msra.mxu0 0
        %2210 = vmatprep.subr.bf16.mxu0 0
        %2211 = vmatpush2.bf16.msra.mxu0 0
        %2212 = vmatprep.subr.bf16.mxu0 0
        %2213 = vmatpush2.bf16.msra.mxu0 0
        %2214 = vmatprep.subr.bf16.mxu0 0
        %2215 = vmatpush2.bf16.msra.mxu0 0
        %2216 = vmatprep.subr.bf16.mxu0 0
        %2217 = vmatpush2.bf16.msra.mxu0 0
        %2218 = vmatprep.mubr.bf16.mxu0 0
        %2219 = vmatmul.mubr.bf16.gmra.mxu0 %v2136
        %v2220 = vpop.f32.mrf.mxu0
        %v2221 = vadd.f32 0.0, %v2220
        %v2222 = vpop.f32.mrf.mxu0
        %v2223 = vpop.f32.mrf.mxu0
        %v2224 = vpop.f32.mrf.mxu0
        %2225 = vdwg.mxu0
        %v2226 = vadd.f32 %v2118, %v2221
        %s2227 = scalar_lea.vmem %s6, 768
        %v2228 = vld [vmem:[%s2227] sm:$0xf]
        %v2229 = vld [vmem:[%s2227 + $0x4] sm:$0xf]
        %v2230 = vld [vmem:[%s2227 + $0x8] sm:$0xf]
        %v2231 = vld [vmem:[%s2227 + $0xc] sm:$0xf]
        %v2232 = vld [vmem:[%s2227 + $0x10] sm:$0xf]
        %v2233 = vld [vmem:[%s2227 + $0x14] sm:$0xf]
        %v2234 = vld [vmem:[%s2227 + $0x18] sm:$0xf]
        %v2235 = vld [vmem:[%s2227 + $0x1c] sm:$0xf]
        %v2236 = vld [vmem:[%s2227 + $0x20] sm:$0xf]
        %v2237 = vld [vmem:[%s2227 + $0x24] sm:$0xf]
        %v2238 = vld [vmem:[%s2227 + $0x28] sm:$0xf]
        %v2239 = vld [vmem:[%s2227 + $0x2c] sm:$0xf]
        %v2240 = vld [vmem:[%s2227 + $0x30] sm:$0xf]
        %v2241 = vld [vmem:[%s2227 + $0x34] sm:$0xf]
        %v2242 = vld [vmem:[%s2227 + $0x38] sm:$0xf]
        %v2243 = vld [vmem:[%s2227 + $0x3c] sm:$0xf]
        %v2244 = vrot.slane %v1793, 2
        %v2262 = vunpack.c.l.b16 %v2228
        %v2263 = vunpack.c.l.b16 %v2229
        %v2264 = vunpack.c.l.b16 %v2230
        %v2265 = vunpack.c.l.b16 %v2231
        %v2266 = vunpack.c.l.b16 %v2232
        %v2267 = vunpack.c.l.b16 %v2233
        %v2268 = vunpack.c.l.b16 %v2234
        %v2269 = vunpack.c.l.b16 %v2235
        %v2270 = vunpack.c.l.b16 %v2236
        %v2271 = vunpack.c.l.b16 %v2237
        %v2272 = vunpack.c.l.b16 %v2238
        %v2273 = vunpack.c.l.b16 %v2239
        %v2274 = vunpack.c.l.b16 %v2240
        %v2275 = vunpack.c.l.b16 %v2241
        %v2276 = vunpack.c.l.b16 %v2242
        %v2277 = vunpack.c.l.b16 %v2243
        %v2278 = vpack.c.b16 %v2263, %v2262
        %v2279 = vpack.c.b16 %v2265, %v2264
        %v2280 = vpack.c.b16 %v2267, %v2266
        %v2281 = vpack.c.b16 %v2269, %v2268
        %v2282 = vpack.c.b16 %v2271, %v2270
        %v2283 = vpack.c.b16 %v2273, %v2272
        %v2284 = vpack.c.b16 %v2275, %v2274
        %v2285 = vpack.c.b16 %v2277, %v2276
        %2294 = vmatprep.subr.bf16.mxu0 0
        %2295 = vmatpush1.bf16.msra.mxu0 %v2285
        %2296 = vmatprep.subr.bf16.mxu0 0
        %2297 = vmatpush1.bf16.msra.mxu0 %v2284
        %2298 = vmatprep.subr.bf16.mxu0 0
        %2299 = vmatpush1.bf16.msra.mxu0 %v2283
        %2300 = vmatprep.subr.bf16.mxu0 0
        %2301 = vmatpush1.bf16.msra.mxu0 %v2282
        %2302 = vmatprep.subr.bf16.mxu0 0
        %2303 = vmatpush1.bf16.msra.mxu0 %v2281
        %2304 = vmatprep.subr.bf16.mxu0 0
        %2305 = vmatpush1.bf16.msra.mxu0 %v2280
        %2306 = vmatprep.subr.bf16.mxu0 0
        %2307 = vmatpush1.bf16.msra.mxu0 %v2279
        %2308 = vmatprep.subr.bf16.mxu0 0
        %2309 = vmatpush1.bf16.msra.mxu0 %v2278
        %2310 = vmatprep.subr.bf16.mxu0 0
        %2311 = vmatpush2.bf16.msra.mxu0 0
        %2312 = vmatprep.subr.bf16.mxu0 0
        %2313 = vmatpush2.bf16.msra.mxu0 0
        %2314 = vmatprep.subr.bf16.mxu0 0
        %2315 = vmatpush2.bf16.msra.mxu0 0
        %2316 = vmatprep.subr.bf16.mxu0 0
        %2317 = vmatpush2.bf16.msra.mxu0 0
        %2318 = vmatprep.subr.bf16.mxu0 0
        %2319 = vmatpush2.bf16.msra.mxu0 0
        %2320 = vmatprep.subr.bf16.mxu0 0
        %2321 = vmatpush2.bf16.msra.mxu0 0
        %2322 = vmatprep.subr.bf16.mxu0 0
        %2323 = vmatpush2.bf16.msra.mxu0 0
        %2324 = vmatprep.subr.bf16.mxu0 0
        %2325 = vmatpush2.bf16.msra.mxu0 0
        %2326 = vmatprep.mubr.bf16.mxu0 0
        %2327 = vmatmul.mubr.bf16.gmra.mxu0 %v2244
        %v2328 = vpop.f32.mrf.mxu0
        %v2329 = vadd.f32 0.0, %v2328
        %v2330 = vpop.f32.mrf.mxu0
        %v2331 = vpop.f32.mrf.mxu0
        %v2332 = vpop.f32.mrf.mxu0
        %2333 = vdwg.mxu0
        %v2334 = vadd.f32 %v2226, %v2329
        %s2335 = scalar_lea.vmem %s6, 832
        %v2336 = vld [vmem:[%s2335] sm:$0xf]
        %v2337 = vld [vmem:[%s2335 + $0x4] sm:$0xf]
        %v2338 = vld [vmem:[%s2335 + $0x8] sm:$0xf]
        %v2339 = vld [vmem:[%s2335 + $0xc] sm:$0xf]
        %v2340 = vld [vmem:[%s2335 + $0x10] sm:$0xf]
        %v2341 = vld [vmem:[%s2335 + $0x14] sm:$0xf]
        %v2342 = vld [vmem:[%s2335 + $0x18] sm:$0xf]
        %v2343 = vld [vmem:[%s2335 + $0x1c] sm:$0xf]
        %v2344 = vld [vmem:[%s2335 + $0x20] sm:$0xf]
        %v2345 = vld [vmem:[%s2335 + $0x24] sm:$0xf]
        %v2346 = vld [vmem:[%s2335 + $0x28] sm:$0xf]
        %v2347 = vld [vmem:[%s2335 + $0x2c] sm:$0xf]
        %v2348 = vld [vmem:[%s2335 + $0x30] sm:$0xf]
        %v2349 = vld [vmem:[%s2335 + $0x34] sm:$0xf]
        %v2350 = vld [vmem:[%s2335 + $0x38] sm:$0xf]
        %v2351 = vld [vmem:[%s2335 + $0x3c] sm:$0xf]
        %v2352 = vrot.slane %v1918, 2
        %v2370 = vunpack.c.l.b16 %v2336
        %v2371 = vunpack.c.l.b16 %v2337
        %v2372 = vunpack.c.l.b16 %v2338
        %v2373 = vunpack.c.l.b16 %v2339
        %v2374 = vunpack.c.l.b16 %v2340
        %v2375 = vunpack.c.l.b16 %v2341
        %v2376 = vunpack.c.l.b16 %v2342
        %v2377 = vunpack.c.l.b16 %v2343
        %v2378 = vunpack.c.l.b16 %v2344
        %v2379 = vunpack.c.l.b16 %v2345
        %v2380 = vunpack.c.l.b16 %v2346
        %v2381 = vunpack.c.l.b16 %v2347
        %v2382 = vunpack.c.l.b16 %v2348
        %v2383 = vunpack.c.l.b16 %v2349
        %v2384 = vunpack.c.l.b16 %v2350
        %v2385 = vunpack.c.l.b16 %v2351
        %v2386 = vpack.c.b16 %v2371, %v2370
        %v2387 = vpack.c.b16 %v2373, %v2372
        %v2388 = vpack.c.b16 %v2375, %v2374
        %v2389 = vpack.c.b16 %v2377, %v2376
        %v2390 = vpack.c.b16 %v2379, %v2378
        %v2391 = vpack.c.b16 %v2381, %v2380
        %v2392 = vpack.c.b16 %v2383, %v2382
        %v2393 = vpack.c.b16 %v2385, %v2384
        %2402 = vmatprep.subr.bf16.mxu0 0
        %2403 = vmatpush1.bf16.msra.mxu0 %v2393
        %2404 = vmatprep.subr.bf16.mxu0 0
        %2405 = vmatpush1.bf16.msra.mxu0 %v2392
        %2406 = vmatprep.subr.bf16.mxu0 0
        %2407 = vmatpush1.bf16.msra.mxu0 %v2391
        %2408 = vmatprep.subr.bf16.mxu0 0
        %2409 = vmatpush1.bf16.msra.mxu0 %v2390
        %2410 = vmatprep.subr.bf16.mxu0 0
        %2411 = vmatpush1.bf16.msra.mxu0 %v2389
        %2412 = vmatprep.subr.bf16.mxu0 0
        %2413 = vmatpush1.bf16.msra.mxu0 %v2388
        %2414 = vmatprep.subr.bf16.mxu0 0
        %2415 = vmatpush1.bf16.msra.mxu0 %v2387
        %2416 = vmatprep.subr.bf16.mxu0 0
        %2417 = vmatpush1.bf16.msra.mxu0 %v2386
        %2418 = vmatprep.subr.bf16.mxu0 0
        %2419 = vmatpush2.bf16.msra.mxu0 0
        %2420 = vmatprep.subr.bf16.mxu0 0
        %2421 = vmatpush2.bf16.msra.mxu0 0
        %2422 = vmatprep.subr.bf16.mxu0 0
        %2423 = vmatpush2.bf16.msra.mxu0 0
        %2424 = vmatprep.subr.bf16.mxu0 0
        %2425 = vmatpush2.bf16.msra.mxu0 0
        %2426 = vmatprep.subr.bf16.mxu0 0
        %2427 = vmatpush2.bf16.msra.mxu0 0
        %2428 = vmatprep.subr.bf16.mxu0 0
        %2429 = vmatpush2.bf16.msra.mxu0 0
        %2430 = vmatprep.subr.bf16.mxu0 0
        %2431 = vmatpush2.bf16.msra.mxu0 0
        %2432 = vmatprep.subr.bf16.mxu0 0
        %2433 = vmatpush2.bf16.msra.mxu0 0
        %2434 = vmatprep.mubr.bf16.mxu0 0
        %2435 = vmatmul.mubr.bf16.gmra.mxu0 %v2352
        %v2436 = vpop.f32.mrf.mxu0
        %v2437 = vadd.f32 0.0, %v2436
        %v2438 = vpop.f32.mrf.mxu0
        %v2439 = vpop.f32.mrf.mxu0
        %v2440 = vpop.f32.mrf.mxu0
        %2441 = vdwg.mxu0
        %v2442 = vadd.f32 %v2334, %v2437
        %s2443 = scalar_lea.vmem %s6, 896
        %v2444 = vld [vmem:[%s2443] sm:$0xf]
        %v2445 = vld [vmem:[%s2443 + $0x4] sm:$0xf]
        %v2446 = vld [vmem:[%s2443 + $0x8] sm:$0xf]
        %v2447 = vld [vmem:[%s2443 + $0xc] sm:$0xf]
        %v2448 = vld [vmem:[%s2443 + $0x10] sm:$0xf]
        %v2449 = vld [vmem:[%s2443 + $0x14] sm:$0xf]
        %v2450 = vld [vmem:[%s2443 + $0x18] sm:$0xf]
        %v2451 = vld [vmem:[%s2443 + $0x1c] sm:$0xf]
        %v2452 = vld [vmem:[%s2443 + $0x20] sm:$0xf]
        %v2453 = vld [vmem:[%s2443 + $0x24] sm:$0xf]
        %v2454 = vld [vmem:[%s2443 + $0x28] sm:$0xf]
        %v2455 = vld [vmem:[%s2443 + $0x2c] sm:$0xf]
        %v2456 = vld [vmem:[%s2443 + $0x30] sm:$0xf]
        %v2457 = vld [vmem:[%s2443 + $0x34] sm:$0xf]
        %v2458 = vld [vmem:[%s2443 + $0x38] sm:$0xf]
        %v2459 = vld [vmem:[%s2443 + $0x3c] sm:$0xf]
        %v2460 = vrot.slane %v1793, 3
        %v2478 = vunpack.c.l.b16 %v2444
        %v2479 = vunpack.c.l.b16 %v2445
        %v2480 = vunpack.c.l.b16 %v2446
        %v2481 = vunpack.c.l.b16 %v2447
        %v2482 = vunpack.c.l.b16 %v2448
        %v2483 = vunpack.c.l.b16 %v2449
        %v2484 = vunpack.c.l.b16 %v2450
        %v2485 = vunpack.c.l.b16 %v2451
        %v2486 = vunpack.c.l.b16 %v2452
        %v2487 = vunpack.c.l.b16 %v2453
        %v2488 = vunpack.c.l.b16 %v2454
        %v2489 = vunpack.c.l.b16 %v2455
        %v2490 = vunpack.c.l.b16 %v2456
        %v2491 = vunpack.c.l.b16 %v2457
        %v2492 = vunpack.c.l.b16 %v2458
        %v2493 = vunpack.c.l.b16 %v2459
        %v2494 = vpack.c.b16 %v2479, %v2478
        %v2495 = vpack.c.b16 %v2481, %v2480
        %v2496 = vpack.c.b16 %v2483, %v2482
        %v2497 = vpack.c.b16 %v2485, %v2484
        %v2498 = vpack.c.b16 %v2487, %v2486
        %v2499 = vpack.c.b16 %v2489, %v2488
        %v2500 = vpack.c.b16 %v2491, %v2490
        %v2501 = vpack.c.b16 %v2493, %v2492
        %2510 = vmatprep.subr.bf16.mxu0 0
        %2511 = vmatpush1.bf16.msra.mxu0 %v2501
        %2512 = vmatprep.subr.bf16.mxu0 0
        %2513 = vmatpush1.bf16.msra.mxu0 %v2500
        %2514 = vmatprep.subr.bf16.mxu0 0
        %2515 = vmatpush1.bf16.msra.mxu0 %v2499
        %2516 = vmatprep.subr.bf16.mxu0 0
        %2517 = vmatpush1.bf16.msra.mxu0 %v2498
        %2518 = vmatprep.subr.bf16.mxu0 0
        %2519 = vmatpush1.bf16.msra.mxu0 %v2497
        %2520 = vmatprep.subr.bf16.mxu0 0
        %2521 = vmatpush1.bf16.msra.mxu0 %v2496
        %2522 = vmatprep.subr.bf16.mxu0 0
        %2523 = vmatpush1.bf16.msra.mxu0 %v2495
        %2524 = vmatprep.subr.bf16.mxu0 0
        %2525 = vmatpush1.bf16.msra.mxu0 %v2494
        %2526 = vmatprep.subr.bf16.mxu0 0
        %2527 = vmatpush2.bf16.msra.mxu0 0
        %2528 = vmatprep.subr.bf16.mxu0 0
        %2529 = vmatpush2.bf16.msra.mxu0 0
        %2530 = vmatprep.subr.bf16.mxu0 0
        %2531 = vmatpush2.bf16.msra.mxu0 0
        %2532 = vmatprep.subr.bf16.mxu0 0
        %2533 = vmatpush2.bf16.msra.mxu0 0
        %2534 = vmatprep.subr.bf16.mxu0 0
        %2535 = vmatpush2.bf16.msra.mxu0 0
        %2536 = vmatprep.subr.bf16.mxu0 0
        %2537 = vmatpush2.bf16.msra.mxu0 0
        %2538 = vmatprep.subr.bf16.mxu0 0
        %2539 = vmatpush2.bf16.msra.mxu0 0
        %2540 = vmatprep.subr.bf16.mxu0 0
        %2541 = vmatpush2.bf16.msra.mxu0 0
        %2542 = vmatprep.mubr.bf16.mxu0 0
        %2543 = vmatmul.mubr.bf16.gmra.mxu0 %v2460
        %v2544 = vpop.f32.mrf.mxu0
        %v2545 = vadd.f32 0.0, %v2544
        %v2546 = vpop.f32.mrf.mxu0
        %v2547 = vpop.f32.mrf.mxu0
        %v2548 = vpop.f32.mrf.mxu0
        %2549 = vdwg.mxu0
        %v2550 = vadd.f32 %v2442, %v2545
        %s2551 = scalar_lea.vmem %s6, 960
        %v2552 = vld [vmem:[%s2551] sm:$0xf]
        %v2553 = vld [vmem:[%s2551 + $0x4] sm:$0xf]
        %v2554 = vld [vmem:[%s2551 + $0x8] sm:$0xf]
        %v2555 = vld [vmem:[%s2551 + $0xc] sm:$0xf]
        %v2556 = vld [vmem:[%s2551 + $0x10] sm:$0xf]
        %v2557 = vld [vmem:[%s2551 + $0x14] sm:$0xf]
        %v2558 = vld [vmem:[%s2551 + $0x18] sm:$0xf]
        %v2559 = vld [vmem:[%s2551 + $0x1c] sm:$0xf]
        %v2560 = vld [vmem:[%s2551 + $0x20] sm:$0xf]
        %v2561 = vld [vmem:[%s2551 + $0x24] sm:$0xf]
        %v2562 = vld [vmem:[%s2551 + $0x28] sm:$0xf]
        %v2563 = vld [vmem:[%s2551 + $0x2c] sm:$0xf]
        %v2564 = vld [vmem:[%s2551 + $0x30] sm:$0xf]
        %v2565 = vld [vmem:[%s2551 + $0x34] sm:$0xf]
        %v2566 = vld [vmem:[%s2551 + $0x38] sm:$0xf]
        %v2567 = vld [vmem:[%s2551 + $0x3c] sm:$0xf]
        %v2568 = vrot.slane %v1918, 3
        %v2586 = vunpack.c.l.b16 %v2552
        %v2587 = vunpack.c.l.b16 %v2553
        %v2588 = vunpack.c.l.b16 %v2554
        %v2589 = vunpack.c.l.b16 %v2555
        %v2590 = vunpack.c.l.b16 %v2556
        %v2591 = vunpack.c.l.b16 %v2557
        %v2592 = vunpack.c.l.b16 %v2558
        %v2593 = vunpack.c.l.b16 %v2559
        %v2594 = vunpack.c.l.b16 %v2560
        %v2595 = vunpack.c.l.b16 %v2561
        %v2596 = vunpack.c.l.b16 %v2562
        %v2597 = vunpack.c.l.b16 %v2563
        %v2598 = vunpack.c.l.b16 %v2564
        %v2599 = vunpack.c.l.b16 %v2565
        %v2600 = vunpack.c.l.b16 %v2566
        %v2601 = vunpack.c.l.b16 %v2567
        %v2602 = vpack.c.b16 %v2587, %v2586
        %v2603 = vpack.c.b16 %v2589, %v2588
        %v2604 = vpack.c.b16 %v2591, %v2590
        %v2605 = vpack.c.b16 %v2593, %v2592
        %v2606 = vpack.c.b16 %v2595, %v2594
        %v2607 = vpack.c.b16 %v2597, %v2596
        %v2608 = vpack.c.b16 %v2599, %v2598
        %v2609 = vpack.c.b16 %v2601, %v2600
        %2618 = vmatprep.subr.bf16.mxu0 0
        %2619 = vmatpush1.bf16.msra.mxu0 %v2609
        %2620 = vmatprep.subr.bf16.mxu0 0
        %2621 = vmatpush1.bf16.msra.mxu0 %v2608
        %2622 = vmatprep.subr.bf16.mxu0 0
        %2623 = vmatpush1.bf16.msra.mxu0 %v2607
        %2624 = vmatprep.subr.bf16.mxu0 0
        %2625 = vmatpush1.bf16.msra.mxu0 %v2606
        %2626 = vmatprep.subr.bf16.mxu0 0
        %2627 = vmatpush1.bf16.msra.mxu0 %v2605
        %2628 = vmatprep.subr.bf16.mxu0 0
        %2629 = vmatpush1.bf16.msra.mxu0 %v2604
        %2630 = vmatprep.subr.bf16.mxu0 0
        %2631 = vmatpush1.bf16.msra.mxu0 %v2603
        %2632 = vmatprep.subr.bf16.mxu0 0
        %2633 = vmatpush1.bf16.msra.mxu0 %v2602
        %2634 = vmatprep.subr.bf16.mxu0 0
        %2635 = vmatpush2.bf16.msra.mxu0 0
        %2636 = vmatprep.subr.bf16.mxu0 0
        %2637 = vmatpush2.bf16.msra.mxu0 0
        %2638 = vmatprep.subr.bf16.mxu0 0
        %2639 = vmatpush2.bf16.msra.mxu0 0
        %2640 = vmatprep.subr.bf16.mxu0 0
        %2641 = vmatpush2.bf16.msra.mxu0 0
        %2642 = vmatprep.subr.bf16.mxu0 0
        %2643 = vmatpush2.bf16.msra.mxu0 0
        %2644 = vmatprep.subr.bf16.mxu0 0
        %2645 = vmatpush2.bf16.msra.mxu0 0
        %2646 = vmatprep.subr.bf16.mxu0 0
        %2647 = vmatpush2.bf16.msra.mxu0 0
        %2648 = vmatprep.subr.bf16.mxu0 0
        %2649 = vmatpush2.bf16.msra.mxu0 0
        %2650 = vmatprep.mubr.bf16.mxu0 0
        %2651 = vmatmul.mubr.bf16.gmra.mxu0 %v2568
        %v2652 = vpop.f32.mrf.mxu0
        %v2653 = vadd.f32 0.0, %v2652
        %v2654 = vpop.f32.mrf.mxu0
        %v2655 = vpop.f32.mrf.mxu0
        %v2656 = vpop.f32.mrf.mxu0
        %2657 = vdwg.mxu0
        %v2658 = vadd.f32 %v2550, %v2653
        %v2659 = vpack.c.bf16 %v925, %v925
        %s2660 = scalar_lea.vmem %s6, 1024
        %v2661 = vld [vmem:[%s2660] sm:$0xf]
        %v2662 = vld [vmem:[%s2660 + $0x4] sm:$0xf]
        %v2663 = vld [vmem:[%s2660 + $0x8] sm:$0xf]
        %v2664 = vld [vmem:[%s2660 + $0xc] sm:$0xf]
        %v2665 = vld [vmem:[%s2660 + $0x10] sm:$0xf]
        %v2666 = vld [vmem:[%s2660 + $0x14] sm:$0xf]
        %v2667 = vld [vmem:[%s2660 + $0x18] sm:$0xf]
        %v2668 = vld [vmem:[%s2660 + $0x1c] sm:$0xf]
        %v2669 = vld [vmem:[%s2660 + $0x20] sm:$0xf]
        %v2670 = vld [vmem:[%s2660 + $0x24] sm:$0xf]
        %v2671 = vld [vmem:[%s2660 + $0x28] sm:$0xf]
        %v2672 = vld [vmem:[%s2660 + $0x2c] sm:$0xf]
        %v2673 = vld [vmem:[%s2660 + $0x30] sm:$0xf]
        %v2674 = vld [vmem:[%s2660 + $0x34] sm:$0xf]
        %v2675 = vld [vmem:[%s2660 + $0x38] sm:$0xf]
        %v2676 = vld [vmem:[%s2660 + $0x3c] sm:$0xf]
        %v2693 = vunpack.c.l.b16 %v2661
        %v2694 = vunpack.c.l.b16 %v2662
        %v2695 = vunpack.c.l.b16 %v2663
        %v2696 = vunpack.c.l.b16 %v2664
        %v2697 = vunpack.c.l.b16 %v2665
        %v2698 = vunpack.c.l.b16 %v2666
        %v2699 = vunpack.c.l.b16 %v2667
        %v2700 = vunpack.c.l.b16 %v2668
        %v2701 = vunpack.c.l.b16 %v2669
        %v2702 = vunpack.c.l.b16 %v2670
        %v2703 = vunpack.c.l.b16 %v2671
        %v2704 = vunpack.c.l.b16 %v2672
        %v2705 = vunpack.c.l.b16 %v2673
        %v2706 = vunpack.c.l.b16 %v2674
        %v2707 = vunpack.c.l.b16 %v2675
        %v2708 = vunpack.c.l.b16 %v2676
        %v2709 = vpack.c.b16 %v2694, %v2693
        %v2710 = vpack.c.b16 %v2696, %v2695
        %v2711 = vpack.c.b16 %v2698, %v2697
        %v2712 = vpack.c.b16 %v2700, %v2699
        %v2713 = vpack.c.b16 %v2702, %v2701
        %v2714 = vpack.c.b16 %v2704, %v2703
        %v2715 = vpack.c.b16 %v2706, %v2705
        %v2716 = vpack.c.b16 %v2708, %v2707
        %2725 = vmatprep.subr.bf16.mxu0 0
        %2726 = vmatpush1.bf16.msra.mxu0 %v2716
        %2727 = vmatprep.subr.bf16.mxu0 0
        %2728 = vmatpush1.bf16.msra.mxu0 %v2715
        %2729 = vmatprep.subr.bf16.mxu0 0
        %2730 = vmatpush1.bf16.msra.mxu0 %v2714
        %2731 = vmatprep.subr.bf16.mxu0 0
        %2732 = vmatpush1.bf16.msra.mxu0 %v2713
        %2733 = vmatprep.subr.bf16.mxu0 0
        %2734 = vmatpush1.bf16.msra.mxu0 %v2712
        %2735 = vmatprep.subr.bf16.mxu0 0
        %2736 = vmatpush1.bf16.msra.mxu0 %v2711
        %2737 = vmatprep.subr.bf16.mxu0 0
        %2738 = vmatpush1.bf16.msra.mxu0 %v2710
        %2739 = vmatprep.subr.bf16.mxu0 0
        %2740 = vmatpush1.bf16.msra.mxu0 %v2709
        %2741 = vmatprep.subr.bf16.mxu0 0
        %2742 = vmatpush2.bf16.msra.mxu0 0
        %2743 = vmatprep.subr.bf16.mxu0 0
        %2744 = vmatpush2.bf16.msra.mxu0 0
        %2745 = vmatprep.subr.bf16.mxu0 0
        %2746 = vmatpush2.bf16.msra.mxu0 0
        %2747 = vmatprep.subr.bf16.mxu0 0
        %2748 = vmatpush2.bf16.msra.mxu0 0
        %2749 = vmatprep.subr.bf16.mxu0 0
        %2750 = vmatpush2.bf16.msra.mxu0 0
        %2751 = vmatprep.subr.bf16.mxu0 0
        %2752 = vmatpush2.bf16.msra.mxu0 0
        %2753 = vmatprep.subr.bf16.mxu0 0
        %2754 = vmatpush2.bf16.msra.mxu0 0
        %2755 = vmatprep.subr.bf16.mxu0 0
        %2756 = vmatpush2.bf16.msra.mxu0 0
        %2757 = vmatprep.mubr.bf16.mxu0 0
        %2758 = vmatmul.mubr.bf16.gmra.mxu0 %v2659
        %v2759 = vpop.f32.mrf.mxu0
        %v2760 = vadd.f32 0.0, %v2759
        %v2761 = vpop.f32.mrf.mxu0
        %v2762 = vpop.f32.mrf.mxu0
        %v2763 = vpop.f32.mrf.mxu0
        %2764 = vdwg.mxu0
        %v2765 = vadd.f32 %v2658, %v2760
        %s2766 = scalar_lea.vmem %s6, 1088
        %v2767 = vld [vmem:[%s2766] sm:$0xf]
        %v2768 = vld [vmem:[%s2766 + $0x4] sm:$0xf]
        %v2769 = vld [vmem:[%s2766 + $0x8] sm:$0xf]
        %v2770 = vld [vmem:[%s2766 + $0xc] sm:$0xf]
        %v2771 = vld [vmem:[%s2766 + $0x10] sm:$0xf]
        %v2772 = vld [vmem:[%s2766 + $0x14] sm:$0xf]
        %v2773 = vld [vmem:[%s2766 + $0x18] sm:$0xf]
        %v2774 = vld [vmem:[%s2766 + $0x1c] sm:$0xf]
        %v2775 = vld [vmem:[%s2766 + $0x20] sm:$0xf]
        %v2776 = vld [vmem:[%s2766 + $0x24] sm:$0xf]
        %v2777 = vld [vmem:[%s2766 + $0x28] sm:$0xf]
        %v2778 = vld [vmem:[%s2766 + $0x2c] sm:$0xf]
        %v2779 = vld [vmem:[%s2766 + $0x30] sm:$0xf]
        %v2780 = vld [vmem:[%s2766 + $0x34] sm:$0xf]
        %v2781 = vld [vmem:[%s2766 + $0x38] sm:$0xf]
        %v2782 = vld [vmem:[%s2766 + $0x3c] sm:$0xf]
        %v2784 = vshrl.u32 %v2659, 16
        %v2803 = vunpack.c.l.b16 %v2767
        %v2804 = vunpack.c.l.b16 %v2768
        %v2805 = vunpack.c.l.b16 %v2769
        %v2806 = vunpack.c.l.b16 %v2770
        %v2807 = vunpack.c.l.b16 %v2771
        %v2808 = vunpack.c.l.b16 %v2772
        %v2809 = vunpack.c.l.b16 %v2773
        %v2810 = vunpack.c.l.b16 %v2774
        %v2811 = vunpack.c.l.b16 %v2775
        %v2812 = vunpack.c.l.b16 %v2776
        %v2813 = vunpack.c.l.b16 %v2777
        %v2814 = vunpack.c.l.b16 %v2778
        %v2815 = vunpack.c.l.b16 %v2779
        %v2816 = vunpack.c.l.b16 %v2780
        %v2817 = vunpack.c.l.b16 %v2781
        %v2818 = vunpack.c.l.b16 %v2782
        %v2819 = vpack.c.b16 %v2804, %v2803
        %v2820 = vpack.c.b16 %v2806, %v2805
        %v2821 = vpack.c.b16 %v2808, %v2807
        %v2822 = vpack.c.b16 %v2810, %v2809
        %v2823 = vpack.c.b16 %v2812, %v2811
        %v2824 = vpack.c.b16 %v2814, %v2813
        %v2825 = vpack.c.b16 %v2816, %v2815
        %v2826 = vpack.c.b16 %v2818, %v2817
        %2835 = vmatprep.subr.bf16.mxu0 0
        %2836 = vmatpush1.bf16.msra.mxu0 %v2826
        %2837 = vmatprep.subr.bf16.mxu0 0
        %2838 = vmatpush1.bf16.msra.mxu0 %v2825
        %2839 = vmatprep.subr.bf16.mxu0 0
        %2840 = vmatpush1.bf16.msra.mxu0 %v2824
        %2841 = vmatprep.subr.bf16.mxu0 0
        %2842 = vmatpush1.bf16.msra.mxu0 %v2823
        %2843 = vmatprep.subr.bf16.mxu0 0
        %2844 = vmatpush1.bf16.msra.mxu0 %v2822
        %2845 = vmatprep.subr.bf16.mxu0 0
        %2846 = vmatpush1.bf16.msra.mxu0 %v2821
        %2847 = vmatprep.subr.bf16.mxu0 0
        %2848 = vmatpush1.bf16.msra.mxu0 %v2820
        %2849 = vmatprep.subr.bf16.mxu0 0
        %2850 = vmatpush1.bf16.msra.mxu0 %v2819
        %2851 = vmatprep.subr.bf16.mxu0 0
        %2852 = vmatpush2.bf16.msra.mxu0 0
        %2853 = vmatprep.subr.bf16.mxu0 0
        %2854 = vmatpush2.bf16.msra.mxu0 0
        %2855 = vmatprep.subr.bf16.mxu0 0
        %2856 = vmatpush2.bf16.msra.mxu0 0
        %2857 = vmatprep.subr.bf16.mxu0 0
        %2858 = vmatpush2.bf16.msra.mxu0 0
        %2859 = vmatprep.subr.bf16.mxu0 0
        %2860 = vmatpush2.bf16.msra.mxu0 0
        %2861 = vmatprep.subr.bf16.mxu0 0
        %2862 = vmatpush2.bf16.msra.mxu0 0
        %2863 = vmatprep.subr.bf16.mxu0 0
        %2864 = vmatpush2.bf16.msra.mxu0 0
        %2865 = vmatprep.subr.bf16.mxu0 0
        %2866 = vmatpush2.bf16.msra.mxu0 0
        %2867 = vmatprep.mubr.bf16.mxu0 0
        %2868 = vmatmul.mubr.bf16.gmra.mxu0 %v2784
        %v2869 = vpop.f32.mrf.mxu0
        %v2870 = vadd.f32 0.0, %v2869
        %v2871 = vpop.f32.mrf.mxu0
        %v2872 = vpop.f32.mrf.mxu0
        %v2873 = vpop.f32.mrf.mxu0
        %2874 = vdwg.mxu0
        %v2875 = vadd.f32 %v2765, %v2870
        %s2876 = scalar_lea.vmem %s6, 1152
        %v2877 = vld [vmem:[%s2876] sm:$0xf]
        %v2878 = vld [vmem:[%s2876 + $0x4] sm:$0xf]
        %v2879 = vld [vmem:[%s2876 + $0x8] sm:$0xf]
        %v2880 = vld [vmem:[%s2876 + $0xc] sm:$0xf]
        %v2881 = vld [vmem:[%s2876 + $0x10] sm:$0xf]
        %v2882 = vld [vmem:[%s2876 + $0x14] sm:$0xf]
        %v2883 = vld [vmem:[%s2876 + $0x18] sm:$0xf]
        %v2884 = vld [vmem:[%s2876 + $0x1c] sm:$0xf]
        %v2885 = vld [vmem:[%s2876 + $0x20] sm:$0xf]
        %v2886 = vld [vmem:[%s2876 + $0x24] sm:$0xf]
        %v2887 = vld [vmem:[%s2876 + $0x28] sm:$0xf]
        %v2888 = vld [vmem:[%s2876 + $0x2c] sm:$0xf]
        %v2889 = vld [vmem:[%s2876 + $0x30] sm:$0xf]
        %v2890 = vld [vmem:[%s2876 + $0x34] sm:$0xf]
        %v2891 = vld [vmem:[%s2876 + $0x38] sm:$0xf]
        %v2892 = vld [vmem:[%s2876 + $0x3c] sm:$0xf]
        %v2894 = vrot.slane %v2659, 1
        %v2912 = vunpack.c.l.b16 %v2877
        %v2913 = vunpack.c.l.b16 %v2878
        %v2914 = vunpack.c.l.b16 %v2879
        %v2915 = vunpack.c.l.b16 %v2880
        %v2916 = vunpack.c.l.b16 %v2881
        %v2917 = vunpack.c.l.b16 %v2882
        %v2918 = vunpack.c.l.b16 %v2883
        %v2919 = vunpack.c.l.b16 %v2884
        %v2920 = vunpack.c.l.b16 %v2885
        %v2921 = vunpack.c.l.b16 %v2886
        %v2922 = vunpack.c.l.b16 %v2887
        %v2923 = vunpack.c.l.b16 %v2888
        %v2924 = vunpack.c.l.b16 %v2889
        %v2925 = vunpack.c.l.b16 %v2890
        %v2926 = vunpack.c.l.b16 %v2891
        %v2927 = vunpack.c.l.b16 %v2892
        %v2928 = vpack.c.b16 %v2913, %v2912
        %v2929 = vpack.c.b16 %v2915, %v2914
        %v2930 = vpack.c.b16 %v2917, %v2916
        %v2931 = vpack.c.b16 %v2919, %v2918
        %v2932 = vpack.c.b16 %v2921, %v2920
        %v2933 = vpack.c.b16 %v2923, %v2922
        %v2934 = vpack.c.b16 %v2925, %v2924
        %v2935 = vpack.c.b16 %v2927, %v2926
        %2944 = vmatprep.subr.bf16.mxu0 0
        %2945 = vmatpush1.bf16.msra.mxu0 %v2935
        %2946 = vmatprep.subr.bf16.mxu0 0
        %2947 = vmatpush1.bf16.msra.mxu0 %v2934
        %2948 = vmatprep.subr.bf16.mxu0 0
        %2949 = vmatpush1.bf16.msra.mxu0 %v2933
        %2950 = vmatprep.subr.bf16.mxu0 0
        %2951 = vmatpush1.bf16.msra.mxu0 %v2932
        %2952 = vmatprep.subr.bf16.mxu0 0
        %2953 = vmatpush1.bf16.msra.mxu0 %v2931
        %2954 = vmatprep.subr.bf16.mxu0 0
        %2955 = vmatpush1.bf16.msra.mxu0 %v2930
        %2956 = vmatprep.subr.bf16.mxu0 0
        %2957 = vmatpush1.bf16.msra.mxu0 %v2929
        %2958 = vmatprep.subr.bf16.mxu0 0
        %2959 = vmatpush1.bf16.msra.mxu0 %v2928
        %2960 = vmatprep.subr.bf16.mxu0 0
        %2961 = vmatpush2.bf16.msra.mxu0 0
        %2962 = vmatprep.subr.bf16.mxu0 0
        %2963 = vmatpush2.bf16.msra.mxu0 0
        %2964 = vmatprep.subr.bf16.mxu0 0
        %2965 = vmatpush2.bf16.msra.mxu0 0
        %2966 = vmatprep.subr.bf16.mxu0 0
        %2967 = vmatpush2.bf16.msra.mxu0 0
        %2968 = vmatprep.subr.bf16.mxu0 0
        %2969 = vmatpush2.bf16.msra.mxu0 0
        %2970 = vmatprep.subr.bf16.mxu0 0
        %2971 = vmatpush2.bf16.msra.mxu0 0
        %2972 = vmatprep.subr.bf16.mxu0 0
        %2973 = vmatpush2.bf16.msra.mxu0 0
        %2974 = vmatprep.subr.bf16.mxu0 0
        %2975 = vmatpush2.bf16.msra.mxu0 0
        %2976 = vmatprep.mubr.bf16.mxu0 0
        %2977 = vmatmul.mubr.bf16.gmra.mxu0 %v2894
        %v2978 = vpop.f32.mrf.mxu0
        %v2979 = vadd.f32 0.0, %v2978
        %v2980 = vpop.f32.mrf.mxu0
        %v2981 = vpop.f32.mrf.mxu0
        %v2982 = vpop.f32.mrf.mxu0
        %2983 = vdwg.mxu0
        %v2984 = vadd.f32 %v2875, %v2979
        %s2985 = scalar_lea.vmem %s6, 1216
        %v2986 = vld [vmem:[%s2985] sm:$0xf]
        %v2987 = vld [vmem:[%s2985 + $0x4] sm:$0xf]
        %v2988 = vld [vmem:[%s2985 + $0x8] sm:$0xf]
        %v2989 = vld [vmem:[%s2985 + $0xc] sm:$0xf]
        %v2990 = vld [vmem:[%s2985 + $0x10] sm:$0xf]
        %v2991 = vld [vmem:[%s2985 + $0x14] sm:$0xf]
        %v2992 = vld [vmem:[%s2985 + $0x18] sm:$0xf]
        %v2993 = vld [vmem:[%s2985 + $0x1c] sm:$0xf]
        %v2994 = vld [vmem:[%s2985 + $0x20] sm:$0xf]
        %v2995 = vld [vmem:[%s2985 + $0x24] sm:$0xf]
        %v2996 = vld [vmem:[%s2985 + $0x28] sm:$0xf]
        %v2997 = vld [vmem:[%s2985 + $0x2c] sm:$0xf]
        %v2998 = vld [vmem:[%s2985 + $0x30] sm:$0xf]
        %v2999 = vld [vmem:[%s2985 + $0x34] sm:$0xf]
        %v3000 = vld [vmem:[%s2985 + $0x38] sm:$0xf]
        %v3001 = vld [vmem:[%s2985 + $0x3c] sm:$0xf]
        %v3002 = vrot.slane %v2784, 1
        %v3020 = vunpack.c.l.b16 %v2986
        %v3021 = vunpack.c.l.b16 %v2987
        %v3022 = vunpack.c.l.b16 %v2988
        %v3023 = vunpack.c.l.b16 %v2989
        %v3024 = vunpack.c.l.b16 %v2990
        %v3025 = vunpack.c.l.b16 %v2991
        %v3026 = vunpack.c.l.b16 %v2992
        %v3027 = vunpack.c.l.b16 %v2993
        %v3028 = vunpack.c.l.b16 %v2994
        %v3029 = vunpack.c.l.b16 %v2995
        %v3030 = vunpack.c.l.b16 %v2996
        %v3031 = vunpack.c.l.b16 %v2997
        %v3032 = vunpack.c.l.b16 %v2998
        %v3033 = vunpack.c.l.b16 %v2999
        %v3034 = vunpack.c.l.b16 %v3000
        %v3035 = vunpack.c.l.b16 %v3001
        %v3036 = vpack.c.b16 %v3021, %v3020
        %v3037 = vpack.c.b16 %v3023, %v3022
        %v3038 = vpack.c.b16 %v3025, %v3024
        %v3039 = vpack.c.b16 %v3027, %v3026
        %v3040 = vpack.c.b16 %v3029, %v3028
        %v3041 = vpack.c.b16 %v3031, %v3030
        %v3042 = vpack.c.b16 %v3033, %v3032
        %v3043 = vpack.c.b16 %v3035, %v3034
        %3052 = vmatprep.subr.bf16.mxu0 0
        %3053 = vmatpush1.bf16.msra.mxu0 %v3043
        %3054 = vmatprep.subr.bf16.mxu0 0
        %3055 = vmatpush1.bf16.msra.mxu0 %v3042
        %3056 = vmatprep.subr.bf16.mxu0 0
        %3057 = vmatpush1.bf16.msra.mxu0 %v3041
        %3058 = vmatprep.subr.bf16.mxu0 0
        %3059 = vmatpush1.bf16.msra.mxu0 %v3040
        %3060 = vmatprep.subr.bf16.mxu0 0
        %3061 = vmatpush1.bf16.msra.mxu0 %v3039
        %3062 = vmatprep.subr.bf16.mxu0 0
        %3063 = vmatpush1.bf16.msra.mxu0 %v3038
        %3064 = vmatprep.subr.bf16.mxu0 0
        %3065 = vmatpush1.bf16.msra.mxu0 %v3037
        %3066 = vmatprep.subr.bf16.mxu0 0
        %3067 = vmatpush1.bf16.msra.mxu0 %v3036
        %3068 = vmatprep.subr.bf16.mxu0 0
        %3069 = vmatpush2.bf16.msra.mxu0 0
        %3070 = vmatprep.subr.bf16.mxu0 0
        %3071 = vmatpush2.bf16.msra.mxu0 0
        %3072 = vmatprep.subr.bf16.mxu0 0
        %3073 = vmatpush2.bf16.msra.mxu0 0
        %3074 = vmatprep.subr.bf16.mxu0 0
        %3075 = vmatpush2.bf16.msra.mxu0 0
        %3076 = vmatprep.subr.bf16.mxu0 0
        %3077 = vmatpush2.bf16.msra.mxu0 0
        %3078 = vmatprep.subr.bf16.mxu0 0
        %3079 = vmatpush2.bf16.msra.mxu0 0
        %3080 = vmatprep.subr.bf16.mxu0 0
        %3081 = vmatpush2.bf16.msra.mxu0 0
        %3082 = vmatprep.subr.bf16.mxu0 0
        %3083 = vmatpush2.bf16.msra.mxu0 0
        %3084 = vmatprep.mubr.bf16.mxu0 0
        %3085 = vmatmul.mubr.bf16.gmra.mxu0 %v3002
        %v3086 = vpop.f32.mrf.mxu0
        %v3087 = vadd.f32 0.0, %v3086
        %v3088 = vpop.f32.mrf.mxu0
        %v3089 = vpop.f32.mrf.mxu0
        %v3090 = vpop.f32.mrf.mxu0
        %3091 = vdwg.mxu0
        %v3092 = vadd.f32 %v2984, %v3087
        %s3093 = scalar_lea.vmem %s6, 1280
        %v3094 = vld [vmem:[%s3093] sm:$0xf]
        %v3095 = vld [vmem:[%s3093 + $0x4] sm:$0xf]
        %v3096 = vld [vmem:[%s3093 + $0x8] sm:$0xf]
        %v3097 = vld [vmem:[%s3093 + $0xc] sm:$0xf]
        %v3098 = vld [vmem:[%s3093 + $0x10] sm:$0xf]
        %v3099 = vld [vmem:[%s3093 + $0x14] sm:$0xf]
        %v3100 = vld [vmem:[%s3093 + $0x18] sm:$0xf]
        %v3101 = vld [vmem:[%s3093 + $0x1c] sm:$0xf]
        %v3102 = vld [vmem:[%s3093 + $0x20] sm:$0xf]
        %v3103 = vld [vmem:[%s3093 + $0x24] sm:$0xf]
        %v3104 = vld [vmem:[%s3093 + $0x28] sm:$0xf]
        %v3105 = vld [vmem:[%s3093 + $0x2c] sm:$0xf]
        %v3106 = vld [vmem:[%s3093 + $0x30] sm:$0xf]
        %v3107 = vld [vmem:[%s3093 + $0x34] sm:$0xf]
        %v3108 = vld [vmem:[%s3093 + $0x38] sm:$0xf]
        %v3109 = vld [vmem:[%s3093 + $0x3c] sm:$0xf]
        %v3110 = vrot.slane %v2659, 2
        %v3128 = vunpack.c.l.b16 %v3094
        %v3129 = vunpack.c.l.b16 %v3095
        %v3130 = vunpack.c.l.b16 %v3096
        %v3131 = vunpack.c.l.b16 %v3097
        %v3132 = vunpack.c.l.b16 %v3098
        %v3133 = vunpack.c.l.b16 %v3099
        %v3134 = vunpack.c.l.b16 %v3100
        %v3135 = vunpack.c.l.b16 %v3101
        %v3136 = vunpack.c.l.b16 %v3102
        %v3137 = vunpack.c.l.b16 %v3103
        %v3138 = vunpack.c.l.b16 %v3104
        %v3139 = vunpack.c.l.b16 %v3105
        %v3140 = vunpack.c.l.b16 %v3106
        %v3141 = vunpack.c.l.b16 %v3107
        %v3142 = vunpack.c.l.b16 %v3108
        %v3143 = vunpack.c.l.b16 %v3109
        %v3144 = vpack.c.b16 %v3129, %v3128
        %v3145 = vpack.c.b16 %v3131, %v3130
        %v3146 = vpack.c.b16 %v3133, %v3132
        %v3147 = vpack.c.b16 %v3135, %v3134
        %v3148 = vpack.c.b16 %v3137, %v3136
        %v3149 = vpack.c.b16 %v3139, %v3138
        %v3150 = vpack.c.b16 %v3141, %v3140
        %v3151 = vpack.c.b16 %v3143, %v3142
        %3160 = vmatprep.subr.bf16.mxu0 0
        %3161 = vmatpush1.bf16.msra.mxu0 %v3151
        %3162 = vmatprep.subr.bf16.mxu0 0
        %3163 = vmatpush1.bf16.msra.mxu0 %v3150
        %3164 = vmatprep.subr.bf16.mxu0 0
        %3165 = vmatpush1.bf16.msra.mxu0 %v3149
        %3166 = vmatprep.subr.bf16.mxu0 0
        %3167 = vmatpush1.bf16.msra.mxu0 %v3148
        %3168 = vmatprep.subr.bf16.mxu0 0
        %3169 = vmatpush1.bf16.msra.mxu0 %v3147
        %3170 = vmatprep.subr.bf16.mxu0 0
        %3171 = vmatpush1.bf16.msra.mxu0 %v3146
        %3172 = vmatprep.subr.bf16.mxu0 0
        %3173 = vmatpush1.bf16.msra.mxu0 %v3145
        %3174 = vmatprep.subr.bf16.mxu0 0
        %3175 = vmatpush1.bf16.msra.mxu0 %v3144
        %3176 = vmatprep.subr.bf16.mxu0 0
        %3177 = vmatpush2.bf16.msra.mxu0 0
        %3178 = vmatprep.subr.bf16.mxu0 0
        %3179 = vmatpush2.bf16.msra.mxu0 0
        %3180 = vmatprep.subr.bf16.mxu0 0
        %3181 = vmatpush2.bf16.msra.mxu0 0
        %3182 = vmatprep.subr.bf16.mxu0 0
        %3183 = vmatpush2.bf16.msra.mxu0 0
        %3184 = vmatprep.subr.bf16.mxu0 0
        %3185 = vmatpush2.bf16.msra.mxu0 0
        %3186 = vmatprep.subr.bf16.mxu0 0
        %3187 = vmatpush2.bf16.msra.mxu0 0
        %3188 = vmatprep.subr.bf16.mxu0 0
        %3189 = vmatpush2.bf16.msra.mxu0 0
        %3190 = vmatprep.subr.bf16.mxu0 0
        %3191 = vmatpush2.bf16.msra.mxu0 0
        %3192 = vmatprep.mubr.bf16.mxu0 0
        %3193 = vmatmul.mubr.bf16.gmra.mxu0 %v3110
        %v3194 = vpop.f32.mrf.mxu0
        %v3195 = vadd.f32 0.0, %v3194
        %v3196 = vpop.f32.mrf.mxu0
        %v3197 = vpop.f32.mrf.mxu0
        %v3198 = vpop.f32.mrf.mxu0
        %3199 = vdwg.mxu0
        %v3200 = vadd.f32 %v3092, %v3195
        %s3201 = scalar_lea.vmem %s6, 1344
        %v3202 = vld [vmem:[%s3201] sm:$0xf]
        %v3203 = vld [vmem:[%s3201 + $0x4] sm:$0xf]
        %v3204 = vld [vmem:[%s3201 + $0x8] sm:$0xf]
        %v3205 = vld [vmem:[%s3201 + $0xc] sm:$0xf]
        %v3206 = vld [vmem:[%s3201 + $0x10] sm:$0xf]
        %v3207 = vld [vmem:[%s3201 + $0x14] sm:$0xf]
        %v3208 = vld [vmem:[%s3201 + $0x18] sm:$0xf]
        %v3209 = vld [vmem:[%s3201 + $0x1c] sm:$0xf]
        %v3210 = vld [vmem:[%s3201 + $0x20] sm:$0xf]
        %v3211 = vld [vmem:[%s3201 + $0x24] sm:$0xf]
        %v3212 = vld [vmem:[%s3201 + $0x28] sm:$0xf]
        %v3213 = vld [vmem:[%s3201 + $0x2c] sm:$0xf]
        %v3214 = vld [vmem:[%s3201 + $0x30] sm:$0xf]
        %v3215 = vld [vmem:[%s3201 + $0x34] sm:$0xf]
        %v3216 = vld [vmem:[%s3201 + $0x38] sm:$0xf]
        %v3217 = vld [vmem:[%s3201 + $0x3c] sm:$0xf]
        %v3218 = vrot.slane %v2784, 2
        %v3236 = vunpack.c.l.b16 %v3202
        %v3237 = vunpack.c.l.b16 %v3203
        %v3238 = vunpack.c.l.b16 %v3204
        %v3239 = vunpack.c.l.b16 %v3205
        %v3240 = vunpack.c.l.b16 %v3206
        %v3241 = vunpack.c.l.b16 %v3207
        %v3242 = vunpack.c.l.b16 %v3208
        %v3243 = vunpack.c.l.b16 %v3209
        %v3244 = vunpack.c.l.b16 %v3210
        %v3245 = vunpack.c.l.b16 %v3211
        %v3246 = vunpack.c.l.b16 %v3212
        %v3247 = vunpack.c.l.b16 %v3213
        %v3248 = vunpack.c.l.b16 %v3214
        %v3249 = vunpack.c.l.b16 %v3215
        %v3250 = vunpack.c.l.b16 %v3216
        %v3251 = vunpack.c.l.b16 %v3217
        %v3252 = vpack.c.b16 %v3237, %v3236
        %v3253 = vpack.c.b16 %v3239, %v3238
        %v3254 = vpack.c.b16 %v3241, %v3240
        %v3255 = vpack.c.b16 %v3243, %v3242
        %v3256 = vpack.c.b16 %v3245, %v3244
        %v3257 = vpack.c.b16 %v3247, %v3246
        %v3258 = vpack.c.b16 %v3249, %v3248
        %v3259 = vpack.c.b16 %v3251, %v3250
        %3268 = vmatprep.subr.bf16.mxu0 0
        %3269 = vmatpush1.bf16.msra.mxu0 %v3259
        %3270 = vmatprep.subr.bf16.mxu0 0
        %3271 = vmatpush1.bf16.msra.mxu0 %v3258
        %3272 = vmatprep.subr.bf16.mxu0 0
        %3273 = vmatpush1.bf16.msra.mxu0 %v3257
        %3274 = vmatprep.subr.bf16.mxu0 0
        %3275 = vmatpush1.bf16.msra.mxu0 %v3256
        %3276 = vmatprep.subr.bf16.mxu0 0
        %3277 = vmatpush1.bf16.msra.mxu0 %v3255
        %3278 = vmatprep.subr.bf16.mxu0 0
        %3279 = vmatpush1.bf16.msra.mxu0 %v3254
        %3280 = vmatprep.subr.bf16.mxu0 0
        %3281 = vmatpush1.bf16.msra.mxu0 %v3253
        %3282 = vmatprep.subr.bf16.mxu0 0
        %3283 = vmatpush1.bf16.msra.mxu0 %v3252
        %3284 = vmatprep.subr.bf16.mxu0 0
        %3285 = vmatpush2.bf16.msra.mxu0 0
        %3286 = vmatprep.subr.bf16.mxu0 0
        %3287 = vmatpush2.bf16.msra.mxu0 0
        %3288 = vmatprep.subr.bf16.mxu0 0
        %3289 = vmatpush2.bf16.msra.mxu0 0
        %3290 = vmatprep.subr.bf16.mxu0 0
        %3291 = vmatpush2.bf16.msra.mxu0 0
        %3292 = vmatprep.subr.bf16.mxu0 0
        %3293 = vmatpush2.bf16.msra.mxu0 0
        %3294 = vmatprep.subr.bf16.mxu0 0
        %3295 = vmatpush2.bf16.msra.mxu0 0
        %3296 = vmatprep.subr.bf16.mxu0 0
        %3297 = vmatpush2.bf16.msra.mxu0 0
        %3298 = vmatprep.subr.bf16.mxu0 0
        %3299 = vmatpush2.bf16.msra.mxu0 0
        %3300 = vmatprep.mubr.bf16.mxu0 0
        %3301 = vmatmul.mubr.bf16.gmra.mxu0 %v3218
        %v3302 = vpop.f32.mrf.mxu0
        %v3303 = vadd.f32 0.0, %v3302
        %v3304 = vpop.f32.mrf.mxu0
        %v3305 = vpop.f32.mrf.mxu0
        %v3306 = vpop.f32.mrf.mxu0
        %3307 = vdwg.mxu0
        %v3308 = vadd.f32 %v3200, %v3303
        %s3309 = scalar_lea.vmem %s6, 1408
        %v3310 = vld [vmem:[%s3309] sm:$0xf]
        %v3311 = vld [vmem:[%s3309 + $0x4] sm:$0xf]
        %v3312 = vld [vmem:[%s3309 + $0x8] sm:$0xf]
        %v3313 = vld [vmem:[%s3309 + $0xc] sm:$0xf]
        %v3314 = vld [vmem:[%s3309 + $0x10] sm:$0xf]
        %v3315 = vld [vmem:[%s3309 + $0x14] sm:$0xf]
        %v3316 = vld [vmem:[%s3309 + $0x18] sm:$0xf]
        %v3317 = vld [vmem:[%s3309 + $0x1c] sm:$0xf]
        %v3318 = vld [vmem:[%s3309 + $0x20] sm:$0xf]
        %v3319 = vld [vmem:[%s3309 + $0x24] sm:$0xf]
        %v3320 = vld [vmem:[%s3309 + $0x28] sm:$0xf]
        %v3321 = vld [vmem:[%s3309 + $0x2c] sm:$0xf]
        %v3322 = vld [vmem:[%s3309 + $0x30] sm:$0xf]
        %v3323 = vld [vmem:[%s3309 + $0x34] sm:$0xf]
        %v3324 = vld [vmem:[%s3309 + $0x38] sm:$0xf]
        %v3325 = vld [vmem:[%s3309 + $0x3c] sm:$0xf]
        %v3326 = vrot.slane %v2659, 3
        %v3344 = vunpack.c.l.b16 %v3310
        %v3345 = vunpack.c.l.b16 %v3311
        %v3346 = vunpack.c.l.b16 %v3312
        %v3347 = vunpack.c.l.b16 %v3313
        %v3348 = vunpack.c.l.b16 %v3314
        %v3349 = vunpack.c.l.b16 %v3315
        %v3350 = vunpack.c.l.b16 %v3316
        %v3351 = vunpack.c.l.b16 %v3317
        %v3352 = vunpack.c.l.b16 %v3318
        %v3353 = vunpack.c.l.b16 %v3319
        %v3354 = vunpack.c.l.b16 %v3320
        %v3355 = vunpack.c.l.b16 %v3321
        %v3356 = vunpack.c.l.b16 %v3322
        %v3357 = vunpack.c.l.b16 %v3323
        %v3358 = vunpack.c.l.b16 %v3324
        %v3359 = vunpack.c.l.b16 %v3325
        %v3360 = vpack.c.b16 %v3345, %v3344
        %v3361 = vpack.c.b16 %v3347, %v3346
        %v3362 = vpack.c.b16 %v3349, %v3348
        %v3363 = vpack.c.b16 %v3351, %v3350
        %v3364 = vpack.c.b16 %v3353, %v3352
        %v3365 = vpack.c.b16 %v3355, %v3354
        %v3366 = vpack.c.b16 %v3357, %v3356
        %v3367 = vpack.c.b16 %v3359, %v3358
        %3376 = vmatprep.subr.bf16.mxu0 0
        %3377 = vmatpush1.bf16.msra.mxu0 %v3367
        %3378 = vmatprep.subr.bf16.mxu0 0
        %3379 = vmatpush1.bf16.msra.mxu0 %v3366
        %3380 = vmatprep.subr.bf16.mxu0 0
        %3381 = vmatpush1.bf16.msra.mxu0 %v3365
        %3382 = vmatprep.subr.bf16.mxu0 0
        %3383 = vmatpush1.bf16.msra.mxu0 %v3364
        %3384 = vmatprep.subr.bf16.mxu0 0
        %3385 = vmatpush1.bf16.msra.mxu0 %v3363
        %3386 = vmatprep.subr.bf16.mxu0 0
        %3387 = vmatpush1.bf16.msra.mxu0 %v3362
        %3388 = vmatprep.subr.bf16.mxu0 0
        %3389 = vmatpush1.bf16.msra.mxu0 %v3361
        %3390 = vmatprep.subr.bf16.mxu0 0
        %3391 = vmatpush1.bf16.msra.mxu0 %v3360
        %3392 = vmatprep.subr.bf16.mxu0 0
        %3393 = vmatpush2.bf16.msra.mxu0 0
        %3394 = vmatprep.subr.bf16.mxu0 0
        %3395 = vmatpush2.bf16.msra.mxu0 0
        %3396 = vmatprep.subr.bf16.mxu0 0
        %3397 = vmatpush2.bf16.msra.mxu0 0
        %3398 = vmatprep.subr.bf16.mxu0 0
        %3399 = vmatpush2.bf16.msra.mxu0 0
        %3400 = vmatprep.subr.bf16.mxu0 0
        %3401 = vmatpush2.bf16.msra.mxu0 0
        %3402 = vmatprep.subr.bf16.mxu0 0
        %3403 = vmatpush2.bf16.msra.mxu0 0
        %3404 = vmatprep.subr.bf16.mxu0 0
        %3405 = vmatpush2.bf16.msra.mxu0 0
        %3406 = vmatprep.subr.bf16.mxu0 0
        %3407 = vmatpush2.bf16.msra.mxu0 0
        %3408 = vmatprep.mubr.bf16.mxu0 0
        %3409 = vmatmul.mubr.bf16.gmra.mxu0 %v3326
        %v3410 = vpop.f32.mrf.mxu0
        %v3411 = vadd.f32 0.0, %v3410
        %v3412 = vpop.f32.mrf.mxu0
        %v3413 = vpop.f32.mrf.mxu0
        %v3414 = vpop.f32.mrf.mxu0
        %3415 = vdwg.mxu0
        %v3416 = vadd.f32 %v3308, %v3411
        %s3417 = scalar_lea.vmem %s6, 1472
        %v3418 = vld [vmem:[%s3417] sm:$0xf]
        %v3419 = vld [vmem:[%s3417 + $0x4] sm:$0xf]
        %v3420 = vld [vmem:[%s3417 + $0x8] sm:$0xf]
        %v3421 = vld [vmem:[%s3417 + $0xc] sm:$0xf]
        %v3422 = vld [vmem:[%s3417 + $0x10] sm:$0xf]
        %v3423 = vld [vmem:[%s3417 + $0x14] sm:$0xf]
        %v3424 = vld [vmem:[%s3417 + $0x18] sm:$0xf]
        %v3425 = vld [vmem:[%s3417 + $0x1c] sm:$0xf]
        %v3426 = vld [vmem:[%s3417 + $0x20] sm:$0xf]
        %v3427 = vld [vmem:[%s3417 + $0x24] sm:$0xf]
        %v3428 = vld [vmem:[%s3417 + $0x28] sm:$0xf]
        %v3429 = vld [vmem:[%s3417 + $0x2c] sm:$0xf]
        %v3430 = vld [vmem:[%s3417 + $0x30] sm:$0xf]
        %v3431 = vld [vmem:[%s3417 + $0x34] sm:$0xf]
        %v3432 = vld [vmem:[%s3417 + $0x38] sm:$0xf]
        %v3433 = vld [vmem:[%s3417 + $0x3c] sm:$0xf]
        %v3434 = vrot.slane %v2784, 3
        %v3452 = vunpack.c.l.b16 %v3418
        %v3453 = vunpack.c.l.b16 %v3419
        %v3454 = vunpack.c.l.b16 %v3420
        %v3455 = vunpack.c.l.b16 %v3421
        %v3456 = vunpack.c.l.b16 %v3422
        %v3457 = vunpack.c.l.b16 %v3423
        %v3458 = vunpack.c.l.b16 %v3424
        %v3459 = vunpack.c.l.b16 %v3425
        %v3460 = vunpack.c.l.b16 %v3426
        %v3461 = vunpack.c.l.b16 %v3427
        %v3462 = vunpack.c.l.b16 %v3428
        %v3463 = vunpack.c.l.b16 %v3429
        %v3464 = vunpack.c.l.b16 %v3430
        %v3465 = vunpack.c.l.b16 %v3431
        %v3466 = vunpack.c.l.b16 %v3432
        %v3467 = vunpack.c.l.b16 %v3433
        %v3468 = vpack.c.b16 %v3453, %v3452
        %v3469 = vpack.c.b16 %v3455, %v3454
        %v3470 = vpack.c.b16 %v3457, %v3456
        %v3471 = vpack.c.b16 %v3459, %v3458
        %v3472 = vpack.c.b16 %v3461, %v3460
        %v3473 = vpack.c.b16 %v3463, %v3462
        %v3474 = vpack.c.b16 %v3465, %v3464
        %v3475 = vpack.c.b16 %v3467, %v3466
        %3484 = vmatprep.subr.bf16.mxu0 0
        %3485 = vmatpush1.bf16.msra.mxu0 %v3475
        %3486 = vmatprep.subr.bf16.mxu0 0
        %3487 = vmatpush1.bf16.msra.mxu0 %v3474
        %3488 = vmatprep.subr.bf16.mxu0 0
        %3489 = vmatpush1.bf16.msra.mxu0 %v3473
        %3490 = vmatprep.subr.bf16.mxu0 0
        %3491 = vmatpush1.bf16.msra.mxu0 %v3472
        %3492 = vmatprep.subr.bf16.mxu0 0
        %3493 = vmatpush1.bf16.msra.mxu0 %v3471
        %3494 = vmatprep.subr.bf16.mxu0 0
        %3495 = vmatpush1.bf16.msra.mxu0 %v3470
        %3496 = vmatprep.subr.bf16.mxu0 0
        %3497 = vmatpush1.bf16.msra.mxu0 %v3469
        %3498 = vmatprep.subr.bf16.mxu0 0
        %3499 = vmatpush1.bf16.msra.mxu0 %v3468
        %3500 = vmatprep.subr.bf16.mxu0 0
        %3501 = vmatpush2.bf16.msra.mxu0 0
        %3502 = vmatprep.subr.bf16.mxu0 0
        %3503 = vmatpush2.bf16.msra.mxu0 0
        %3504 = vmatprep.subr.bf16.mxu0 0
        %3505 = vmatpush2.bf16.msra.mxu0 0
        %3506 = vmatprep.subr.bf16.mxu0 0
        %3507 = vmatpush2.bf16.msra.mxu0 0
        %3508 = vmatprep.subr.bf16.mxu0 0
        %3509 = vmatpush2.bf16.msra.mxu0 0
        %3510 = vmatprep.subr.bf16.mxu0 0
        %3511 = vmatpush2.bf16.msra.mxu0 0
        %3512 = vmatprep.subr.bf16.mxu0 0
        %3513 = vmatpush2.bf16.msra.mxu0 0
        %3514 = vmatprep.subr.bf16.mxu0 0
        %3515 = vmatpush2.bf16.msra.mxu0 0
        %3516 = vmatprep.mubr.bf16.mxu0 0
        %3517 = vmatmul.mubr.bf16.gmra.mxu0 %v3434
        %v3518 = vpop.f32.mrf.mxu0
        %v3519 = vadd.f32 0.0, %v3518
        %v3520 = vpop.f32.mrf.mxu0
        %v3521 = vpop.f32.mrf.mxu0
        %v3522 = vpop.f32.mrf.mxu0
        %3523 = vdwg.mxu0
        %v3524 = vadd.f32 %v3416, %v3519
        %v3525 = vpack.c.bf16 %v926, %v926
        %s3526 = scalar_lea.vmem %s6, 1536
        %v3527 = vld [vmem:[%s3526] sm:$0xf]
        %v3528 = vld [vmem:[%s3526 + $0x4] sm:$0xf]
        %v3529 = vld [vmem:[%s3526 + $0x8] sm:$0xf]
        %v3530 = vld [vmem:[%s3526 + $0xc] sm:$0xf]
        %v3531 = vld [vmem:[%s3526 + $0x10] sm:$0xf]
        %v3532 = vld [vmem:[%s3526 + $0x14] sm:$0xf]
        %v3533 = vld [vmem:[%s3526 + $0x18] sm:$0xf]
        %v3534 = vld [vmem:[%s3526 + $0x1c] sm:$0xf]
        %v3535 = vld [vmem:[%s3526 + $0x20] sm:$0xf]
        %v3536 = vld [vmem:[%s3526 + $0x24] sm:$0xf]
        %v3537 = vld [vmem:[%s3526 + $0x28] sm:$0xf]
        %v3538 = vld [vmem:[%s3526 + $0x2c] sm:$0xf]
        %v3539 = vld [vmem:[%s3526 + $0x30] sm:$0xf]
        %v3540 = vld [vmem:[%s3526 + $0x34] sm:$0xf]
        %v3541 = vld [vmem:[%s3526 + $0x38] sm:$0xf]
        %v3542 = vld [vmem:[%s3526 + $0x3c] sm:$0xf]
        %v3559 = vunpack.c.l.b16 %v3527
        %v3560 = vunpack.c.l.b16 %v3528
        %v3561 = vunpack.c.l.b16 %v3529
        %v3562 = vunpack.c.l.b16 %v3530
        %v3563 = vunpack.c.l.b16 %v3531
        %v3564 = vunpack.c.l.b16 %v3532
        %v3565 = vunpack.c.l.b16 %v3533
        %v3566 = vunpack.c.l.b16 %v3534
        %v3567 = vunpack.c.l.b16 %v3535
        %v3568 = vunpack.c.l.b16 %v3536
        %v3569 = vunpack.c.l.b16 %v3537
        %v3570 = vunpack.c.l.b16 %v3538
        %v3571 = vunpack.c.l.b16 %v3539
        %v3572 = vunpack.c.l.b16 %v3540
        %v3573 = vunpack.c.l.b16 %v3541
        %v3574 = vunpack.c.l.b16 %v3542
        %v3575 = vpack.c.b16 %v3560, %v3559
        %v3576 = vpack.c.b16 %v3562, %v3561
        %v3577 = vpack.c.b16 %v3564, %v3563
        %v3578 = vpack.c.b16 %v3566, %v3565
        %v3579 = vpack.c.b16 %v3568, %v3567
        %v3580 = vpack.c.b16 %v3570, %v3569
        %v3581 = vpack.c.b16 %v3572, %v3571
        %v3582 = vpack.c.b16 %v3574, %v3573
        %3591 = vmatprep.subr.bf16.mxu0 0
        %3592 = vmatpush1.bf16.msra.mxu0 %v3582
        %3593 = vmatprep.subr.bf16.mxu0 0
        %3594 = vmatpush1.bf16.msra.mxu0 %v3581
        %3595 = vmatprep.subr.bf16.mxu0 0
        %3596 = vmatpush1.bf16.msra.mxu0 %v3580
        %3597 = vmatprep.subr.bf16.mxu0 0
        %3598 = vmatpush1.bf16.msra.mxu0 %v3579
        %3599 = vmatprep.subr.bf16.mxu0 0
        %3600 = vmatpush1.bf16.msra.mxu0 %v3578
        %3601 = vmatprep.subr.bf16.mxu0 0
        %3602 = vmatpush1.bf16.msra.mxu0 %v3577
        %3603 = vmatprep.subr.bf16.mxu0 0
        %3604 = vmatpush1.bf16.msra.mxu0 %v3576
        %3605 = vmatprep.subr.bf16.mxu0 0
        %3606 = vmatpush1.bf16.msra.mxu0 %v3575
        %3607 = vmatprep.subr.bf16.mxu0 0
        %3608 = vmatpush2.bf16.msra.mxu0 0
        %3609 = vmatprep.subr.bf16.mxu0 0
        %3610 = vmatpush2.bf16.msra.mxu0 0
        %3611 = vmatprep.subr.bf16.mxu0 0
        %3612 = vmatpush2.bf16.msra.mxu0 0
        %3613 = vmatprep.subr.bf16.mxu0 0
        %3614 = vmatpush2.bf16.msra.mxu0 0
        %3615 = vmatprep.subr.bf16.mxu0 0
        %3616 = vmatpush2.bf16.msra.mxu0 0
        %3617 = vmatprep.subr.bf16.mxu0 0
        %3618 = vmatpush2.bf16.msra.mxu0 0
        %3619 = vmatprep.subr.bf16.mxu0 0
        %3620 = vmatpush2.bf16.msra.mxu0 0
        %3621 = vmatprep.subr.bf16.mxu0 0
        %3622 = vmatpush2.bf16.msra.mxu0 0
        %3623 = vmatprep.mubr.bf16.mxu0 0
        %3624 = vmatmul.mubr.bf16.gmra.mxu0 %v3525
        %v3625 = vpop.f32.mrf.mxu0
        %v3626 = vadd.f32 0.0, %v3625
        %v3627 = vpop.f32.mrf.mxu0
        %v3628 = vpop.f32.mrf.mxu0
        %v3629 = vpop.f32.mrf.mxu0
        %3630 = vdwg.mxu0
        %v3631 = vadd.f32 %v3524, %v3626
        %v3632 = vmax.f32 %v3631, 0.0
        %v3633 = vpack.c.bf16 %v3632, %v3632
        %v3634 = vld [vmem:[%s8] sm:$0xf]
        %v3635 = vld [vmem:[%s8 + $0x4] sm:$0xf]
        %v3636 = vld [vmem:[%s8 + $0x8] sm:$0xf]
        %v3637 = vld [vmem:[%s8 + $0xc] sm:$0xf]
        %v3638 = vld [vmem:[%s8 + $0x10] sm:$0xf]
        %v3639 = vld [vmem:[%s8 + $0x14] sm:$0xf]
        %v3640 = vld [vmem:[%s8 + $0x18] sm:$0xf]
        %v3641 = vld [vmem:[%s8 + $0x1c] sm:$0xf]
        %v3642 = vld [vmem:[%s8 + $0x20] sm:$0xf]
        %v3643 = vld [vmem:[%s8 + $0x24] sm:$0xf]
        %v3644 = vld [vmem:[%s8 + $0x28] sm:$0xf]
        %v3645 = vld [vmem:[%s8 + $0x2c] sm:$0xf]
        %v3646 = vld [vmem:[%s8 + $0x30] sm:$0xf]
        %v3647 = vld [vmem:[%s8 + $0x34] sm:$0xf]
        %v3648 = vld [vmem:[%s8 + $0x38] sm:$0xf]
        %v3649 = vld [vmem:[%s8 + $0x3c] sm:$0xf]
        %v3650 = vld [vmem:[%s9] sm:$0x1]
        %v3667 = vunpack.c.l.b16 %v3634
        %v3668 = vunpack.c.l.b16 %v3635
        %v3669 = vunpack.c.l.b16 %v3636
        %v3670 = vunpack.c.l.b16 %v3637
        %v3671 = vunpack.c.l.b16 %v3638
        %v3672 = vunpack.c.l.b16 %v3639
        %v3673 = vunpack.c.l.b16 %v3640
        %v3674 = vunpack.c.l.b16 %v3641
        %v3675 = vunpack.c.l.b16 %v3642
        %v3676 = vunpack.c.l.b16 %v3643
        %v3677 = vunpack.c.l.b16 %v3644
        %v3678 = vunpack.c.l.b16 %v3645
        %v3679 = vunpack.c.l.b16 %v3646
        %v3680 = vunpack.c.l.b16 %v3647
        %v3681 = vunpack.c.l.b16 %v3648
        %v3682 = vunpack.c.l.b16 %v3649
        %v3683 = vpack.c.b16 %v3668, %v3667
        %v3684 = vpack.c.b16 %v3670, %v3669
        %v3685 = vpack.c.b16 %v3672, %v3671
        %v3686 = vpack.c.b16 %v3674, %v3673
        %v3687 = vpack.c.b16 %v3676, %v3675
        %v3688 = vpack.c.b16 %v3678, %v3677
        %v3689 = vpack.c.b16 %v3680, %v3679
        %v3690 = vpack.c.b16 %v3682, %v3681
        %3699 = vmatprep.subr.bf16.mxu0 0
        %3700 = vmatpush1.bf16.msra.mxu0 %v3690
        %3701 = vmatprep.subr.bf16.mxu0 0
        %3702 = vmatpush1.bf16.msra.mxu0 %v3689
        %3703 = vmatprep.subr.bf16.mxu0 0
        %3704 = vmatpush1.bf16.msra.mxu0 %v3688
        %3705 = vmatprep.subr.bf16.mxu0 0
        %3706 = vmatpush1.bf16.msra.mxu0 %v3687
        %3707 = vmatprep.subr.bf16.mxu0 0
        %3708 = vmatpush1.bf16.msra.mxu0 %v3686
        %3709 = vmatprep.subr.bf16.mxu0 0
        %3710 = vmatpush1.bf16.msra.mxu0 %v3685
        %3711 = vmatprep.subr.bf16.mxu0 0
        %3712 = vmatpush1.bf16.msra.mxu0 %v3684
        %3713 = vmatprep.subr.bf16.mxu0 0
        %3714 = vmatpush1.bf16.msra.mxu0 %v3683
        %3715 = vmatprep.subr.bf16.mxu0 0
        %3716 = vmatpush2.bf16.msra.mxu0 0
        %3717 = vmatprep.subr.bf16.mxu0 0
        %3718 = vmatpush2.bf16.msra.mxu0 0
        %3719 = vmatprep.subr.bf16.mxu0 0
        %3720 = vmatpush2.bf16.msra.mxu0 0
        %3721 = vmatprep.subr.bf16.mxu0 0
        %3722 = vmatpush2.bf16.msra.mxu0 0
        %3723 = vmatprep.subr.bf16.mxu0 0
        %3724 = vmatpush2.bf16.msra.mxu0 0
        %3725 = vmatprep.subr.bf16.mxu0 0
        %3726 = vmatpush2.bf16.msra.mxu0 0
        %3727 = vmatprep.subr.bf16.mxu0 0
        %3728 = vmatpush2.bf16.msra.mxu0 0
        %3729 = vmatprep.subr.bf16.mxu0 0
        %3730 = vmatpush2.bf16.msra.mxu0 0
        %3731 = vmatprep.mubr.bf16.mxu0 0
        %3732 = vmatmul.mubr.bf16.gmra.mxu0 %v3633
        %v3733 = vpop.f32.mrf.mxu0
        %v3734 = vadd.f32 %v3650, %v3733
        %v3735 = vpop.f32.mrf.mxu0
        %v3736 = vpop.f32.mrf.mxu0
        %v3737 = vpop.f32.mrf.mxu0
        %3738 = vdwg.mxu0
        %v3739 = vmax.f32 %v3734, 0.0
        %v3740 = vpack.c.bf16 %v3739, %v3739
        %v3741 = vld [vmem:[%s10] sm:$0xf]
        %v3742 = vld [vmem:[%s10 + $0x4] sm:$0xf]
        %v3743 = vld [vmem:[%s10 + $0x8] sm:$0xf]
        %v3744 = vld [vmem:[%s10 + $0xc] sm:$0xf]
        %v3745 = vld [vmem:[%s10 + $0x10] sm:$0xf]
        %v3746 = vld [vmem:[%s10 + $0x14] sm:$0xf]
        %v3747 = vld [vmem:[%s10 + $0x18] sm:$0xf]
        %v3748 = vld [vmem:[%s10 + $0x1c] sm:$0xf]
        %v3749 = vld [vmem:[%s10 + $0x20] sm:$0xf]
        %v3750 = vld [vmem:[%s10 + $0x24] sm:$0xf]
        %v3751 = vld [vmem:[%s10 + $0x28] sm:$0xf]
        %v3752 = vld [vmem:[%s10 + $0x2c] sm:$0xf]
        %v3753 = vld [vmem:[%s10 + $0x30] sm:$0xf]
        %v3754 = vld [vmem:[%s10 + $0x34] sm:$0xf]
        %v3755 = vld [vmem:[%s10 + $0x38] sm:$0xf]
        %v3756 = vld [vmem:[%s10 + $0x3c] sm:$0xf]
        %v3757 = vld [vmem:[%s11] sm:$0x1]
        %v3774 = vunpack.c.l.b16 %v3741
        %v3775 = vunpack.c.l.b16 %v3742
        %v3776 = vunpack.c.l.b16 %v3743
        %v3777 = vunpack.c.l.b16 %v3744
        %v3778 = vunpack.c.l.b16 %v3745
        %v3779 = vunpack.c.l.b16 %v3746
        %v3780 = vunpack.c.l.b16 %v3747
        %v3781 = vunpack.c.l.b16 %v3748
        %v3782 = vunpack.c.l.b16 %v3749
        %v3783 = vunpack.c.l.b16 %v3750
        %v3784 = vunpack.c.l.b16 %v3751
        %v3785 = vunpack.c.l.b16 %v3752
        %v3786 = vunpack.c.l.b16 %v3753
        %v3787 = vunpack.c.l.b16 %v3754
        %v3788 = vunpack.c.l.b16 %v3755
        %v3789 = vunpack.c.l.b16 %v3756
        %v3790 = vpack.c.b16 %v3775, %v3774
        %v3791 = vpack.c.b16 %v3777, %v3776
        %v3792 = vpack.c.b16 %v3779, %v3778
        %v3793 = vpack.c.b16 %v3781, %v3780
        %v3794 = vpack.c.b16 %v3783, %v3782
        %v3795 = vpack.c.b16 %v3785, %v3784
        %v3796 = vpack.c.b16 %v3787, %v3786
        %v3797 = vpack.c.b16 %v3789, %v3788
        %3806 = vmatprep.subr.bf16.mxu0 0
        %3807 = vmatpush1.bf16.msra.mxu0 %v3797
        %3808 = vmatprep.subr.bf16.mxu0 0
        %3809 = vmatpush1.bf16.msra.mxu0 %v3796
        %3810 = vmatprep.subr.bf16.mxu0 0
        %3811 = vmatpush1.bf16.msra.mxu0 %v3795
        %3812 = vmatprep.subr.bf16.mxu0 0
        %3813 = vmatpush1.bf16.msra.mxu0 %v3794
        %3814 = vmatprep.subr.bf16.mxu0 0
        %3815 = vmatpush1.bf16.msra.mxu0 %v3793
        %3816 = vmatprep.subr.bf16.mxu0 0
        %3817 = vmatpush1.bf16.msra.mxu0 %v3792
        %3818 = vmatprep.subr.bf16.mxu0 0
        %3819 = vmatpush1.bf16.msra.mxu0 %v3791
        %3820 = vmatprep.subr.bf16.mxu0 0
        %3821 = vmatpush1.bf16.msra.mxu0 %v3790
        %3822 = vmatprep.subr.bf16.mxu0 0
        %3823 = vmatpush2.bf16.msra.mxu0 0
        %3824 = vmatprep.subr.bf16.mxu0 0
        %3825 = vmatpush2.bf16.msra.mxu0 0
        %3826 = vmatprep.subr.bf16.mxu0 0
        %3827 = vmatpush2.bf16.msra.mxu0 0
        %3828 = vmatprep.subr.bf16.mxu0 0
        %3829 = vmatpush2.bf16.msra.mxu0 0
        %3830 = vmatprep.subr.bf16.mxu0 0
        %3831 = vmatpush2.bf16.msra.mxu0 0
        %3832 = vmatprep.subr.bf16.mxu0 0
        %3833 = vmatpush2.bf16.msra.mxu0 0
        %3834 = vmatprep.subr.bf16.mxu0 0
        %3835 = vmatpush2.bf16.msra.mxu0 0
        %3836 = vmatprep.subr.bf16.mxu0 0
        %3837 = vmatpush2.bf16.msra.mxu0 0
        %3838 = vmatprep.mubr.bf16.mxu0 0
        %3839 = vmatmul.mubr.bf16.gmra.mxu0 %v3740
        %v3840 = vpop.f32.mrf.mxu0
        %v3841 = vadd.f32 %v3757, %v3840
        %v3842 = vpop.f32.mrf.mxu0
        %v3843 = vpop.f32.mrf.mxu0
        %v3844 = vpop.f32.mrf.mxu0
        %3845 = vdwg.mxu0
        %v3846 = vlaneseq
        %v3847 = vand.u32 %v3846, 127
        %vm3848 = vcmp.lt.s32.totalorder %v3847, 10
        %v3849 = vsel %vm3848, %v3841, -1e+30
        %vm3850 = vcmask 1040384
        %v3851 = vsel %vm3850, %v3849, -inf
        %3852 = vmax.xlane.f32.xlu0 %v3851
        %v3853 = vpop.xlane.xlu0 %3852
        %v3854 = vsub.f32 %v3849, %v3853
        %v3855 = vmul.f32 %v3854, 1.442695
        %v3856 = vpow.pop %v3855
        %v3857 = vsel %vm3850, %v3856, 0.0
        %3858 = vadd.xlane.f32.xlu0 %v3857
        %v3859 = vpop.xlane.xlu0 %3858
        %v3860 = vrcp.pop %v3859
        %v3861 = vmul.f32 %v3856, %v3860
        %3862 = vst [vmem:[%s450] sm:$0x1] %v3861
        %s3863 = sand.u32 %s306, 1
        %s3864 = scalar_lea.sflag [#allocation3], %s3863
        %s3865 = sand.u32 %s306, 1
        %s3866 = scalar_lea.vmem [#allocation2], %s3865
        // Predicated region
        $region69: #{_lambda_.3} parent=67 // pred_check
          %p3867 = pneg %p316
        $region70: #{_lambda_.3} parent=67 // pred_check_branch
          %3869 = sbr.rel (%p3867) target = $region72
        $region71: #{_lambda_.3} parent=67 // pred_region
          %s3871 = ssub.s32 16, 16
          %3872 = vsyncadd %s3864, %s3871
          %s3873 = smul.addr %s26, 16
          %s3874 = scalar_lea.hbm %s12, %s3873
          %s3876 = sshll.u32 %s3866, 4
          %s3877 = int_to_ptr.vmem [resolvable:$true] %s3876
          %3879 = dma.vmem_to_hbm [thread:$0]  %s3877, 16, %s3874, %s3864
        $region72: #{_lambda_.3} parent=67 // pred_fallthru
          _
      $region68: #{_lambda_.3} parent=5 // pred_fallthru
        _
      %p3880 = scmp.le.s32.totalorder 2, %s21
      // Predicated region
      $region73: #{_lambda_.3} parent=5 // pred_check
        %p3881 = pneg %p3880
      $region74: #{_lambda_.3} parent=5 // pred_check_branch
        %3883 = sbr.rel (%p3881) target = $region76
      $region75: #{_lambda_.3} parent=5 // pred_region
        %s3884 = ssub.s32 %s21, 2
        // Predicated region
        $region77: #{_lambda_.3} parent=75 // pred_check
          %p3885 = pneg %p322
        $region78: #{_lambda_.3} parent=75 // pred_check_branch
          %3887 = sbr.rel (%p3885) target = $region80
        $region79: #{_lambda_.3} parent=75 // pred_region
          %s3888 = sand.u32 %s307, 1
          %s3889 = scalar_lea.sflag [#allocation3], %s3888
          %s3890 = sand.u32 %s307, 1
          %s3891 = scalar_lea.vmem [#allocation2], %s3890
          %3892 = dma.done %s3889, 16
        $region80: #{_lambda_.3} parent=75 // pred_fallthru
          _
      $region76: #{_lambda_.3} parent=5 // pred_fallthru
        _
    $region6: #{_lambda_.3} parent=1 // loop_footer
      %s25 = sadd.s32 1, %s21
    $region7: #{_lambda_.3} parent=1 // loop_footer_branch
      %20 = sbr.rel target = $region3
    $region8: #{_lambda_.3} parent=1 // loop_exit
      _
    %3893 = vsyncpa [#allocation3], 1
    %s3894 = scalar_lea.sflag [#allocation3], 1
    %3895 = vsyncpa %s3894, 1

</llo_original>
